<compile_context>
chip_gen: v7x
topology: tpu7x:2x2x1
jax: 0.10.0
libtpu: 0.0.40
codegen_flags: <defaults>
</compile_context>

<pallas_src>
import functools

import jax
import jax.numpy as jnp
from jax.experimental import pallas as pl
from jax.experimental.pallas import tpu as pltpu

LN_EPS = 1e-5  # torch.nn.LayerNorm default


def _round_up(x, n):
    return ((x + n - 1) // n) * n


def _vmem_limit_bytes():
    cap = 128 << 20
    try:
        info = pltpu.get_tpu_info()
        cap = int(getattr(info, "vmem_capacity_bytes", cap))
    except Exception:
        pass
    # Leave headroom for Mosaic internal scratch; matters on v7x (64 MiB/TC).
    return int(min(64 << 20, (cap * 3) // 4))


def _downsample_kernel(x_ref, w_ref, b_ref, o_ref):
    """Fused 2x2-merge + LayerNorm(4*dim) + Linear(4*dim -> 2*dim, affine folded).

    x_ref: (TM, 2, W2, 2*dim)  -- TM h2-rows; axis 1 is the H-pair (p); the
                                  trailing 2*dim holds the W-pair concat
                                  [q=0 channels | q=1 channels].
    w_ref: (4*dim, c_out_p)    -- gamma folded in, pre-cast to the dot dtype.
    b_ref: (1, c_out_p) f32    -- beta @ W (LN beta folded through the linear).
    o_ref: (TM, W2, c_out_p)
    """
    tm = x_ref.shape[0]
    two_d = x_ref.shape[-1]
    c_in = 2 * two_d
    dot_dtype = w_ref.dtype

    # Grid-invariant operands: loaded once per step, no per-step casts.
    w0 = w_ref[:two_d, :]          # weight rows for the p=0 half of the token
    w1 = w_ref[two_d:, :]          # weight rows for the p=1 half
    bias = b_ref[...].astype(jnp.float32)
    inv_cin = 1.0 / c_in

    for m in range(tm):  # static unroll over the h2-rows of this tile
        x0 = x_ref[m, 0].astype(jnp.float32)   # (W2, 2*dim)
        x1 = x_ref[m, 1].astype(jnp.float32)   # (W2, 2*dim)

        # Single-pass LayerNorm statistics over the virtual 4*dim concat.
        s = jnp.sum(x0, axis=-1, keepdims=True) + jnp.sum(x1, axis=-1, keepdims=True)
        ss = (jnp.sum(x0 * x0, axis=-1, keepdims=True)
              + jnp.sum(x1 * x1, axis=-1, keepdims=True))
        mean = s * inv_cin
        var = ss * inv_cin - mean * mean
        inv = jax.lax.rsqrt(var + LN_EPS)

        xn0 = ((x0 - mean) * inv).astype(dot_dtype)
        xn1 = ((x1 - mean) * inv).astype(dot_dtype)

        out = (jnp.dot(xn0, w0, preferred_element_type=jnp.float32)
               + jnp.dot(xn1, w1, preferred_element_type=jnp.float32)
               + bias)
        o_ref[m] = out.astype(o_ref.dtype)


def _merge_ln_linear(xr, w_fold, bias, *, c_out, tm, dot_dtype):
    """xr: (N, 2, W2, 2*dim).  Returns (N, W2, c_out)."""
    n, _, w2, two_d = xr.shape
    c_in = 2 * two_d

    # Lane-dense output: pad output columns up to a multiple of 128 (avoids
    # masked partial stores for tiny dims); no-op for Pangu (2*dim = 384).
    c_out_p = _round_up(max(c_out, 1), 128)
    if c_out_p != c_out:
        w_fold = jnp.pad(w_fold, ((0, 0), (0, c_out_p - c_out)))
        bias = jnp.pad(bias, ((0, c_out_p - c_out),))
    w_pass = w_fold.astype(dot_dtype)
    bias = bias.reshape(1, c_out_p).astype(jnp.float32)

    # VMEM-budgeted row tile (double-buffered input + output per h2-row).
    vmem_limit = _vmem_limit_bytes()
    in_b = jnp.dtype(xr.dtype).itemsize
    w_bytes = 2 * w_pass.size * jnp.dtype(dot_dtype).itemsize
    row_bytes = 2 * (2 * w2 * two_d * in_b) + 2 * (w2 * c_out_p * in_b)
    budget = max(row_bytes, vmem_limit - w_bytes - (6 << 20))
    tm_eff = int(max(1, min(tm, budget // row_bytes, n)))
    grid = (pl.cdiv(n, tm_eff),)

    out = pl.pallas_call(
        _downsample_kernel,
        out_shape=jax.ShapeDtypeStruct((n, w2, c_out_p), xr.dtype),
        grid_spec=pltpu.PrefetchScalarGridSpec(
            num_scalar_prefetch=0,
            grid=grid,
            in_specs=[
                pl.BlockSpec((tm_eff, 2, w2, two_d), lambda i: (i, 0, 0, 0)),
                pl.BlockSpec((c_in, c_out_p), lambda i: (0, 0)),   # weight (resident)
                pl.BlockSpec((1, c_out_p), lambda i: (0, 0)),      # folded bias
            ],
            out_specs=pl.BlockSpec((tm_eff, w2, c_out_p), lambda i: (i, 0, 0)),
        ),
        compiler_params=pltpu.CompilerParams(
            # TODO(synk): on v7x use pltpu.CORE_PARALLEL on this axis so both
            # TensorCores take half the grid; kept "parallel" for portability.
            dimension_semantics=("parallel",),
            vmem_limit_bytes=vmem_limit,
        ),
    )(xr, w_pass, bias)

    if c_out_p != c_out:
        out = out[:, :, :c_out]
    return out


def downsample_forward(x, embedding_shape, params, *, tm=16, use_bf16_dot=False):
    """JAX/Pallas port of DownSample.forward.

    x:               (B, Z*H*W, dim)
    embedding_shape: (B, Z, H, W, dim)
    params: 'ln_gamma' (4*dim,), 'ln_beta' (4*dim,),
            'w_t' (4*dim, 2*dim) = transpose of torch Linear.weight
    Returns (out, out_shape), out: (B, Z*(H'//2)*(W'//2), 2*dim).
    """
    b, z, h, w, dim = embedding_shape
    x = x.reshape(embedding_shape)

    # CustomPad3d with patch (1,2,2): H/W pad amounts are 0 or 1, so the
    # centered pad is bottom/right only.  One pad pass, skipped when even.
    pad_lat = (2 - h % 2) % 2
    pad_lon = (2 - w % 2) % 2
    if pad_lat or pad_lon:
        x = jnp.pad(x, ((0, 0), (0, 0), (0, pad_lat), (0, pad_lon), (0, 0)))
    h2, w2 = (h + pad_lat) // 2, (w + pad_lon) // 2

    # Free reshapes only: (B,Z,Hp,Wp,dim) -> (B*Z*H2, 2, W2, 2*dim).
    # Trailing 2*dim == [q=0 channels | q=1 channels]; axis 1 is the H-pair p,
    # so a merged token's 4*dim features = concat(x[.,0,w2,:], x[.,1,w2,:]),
    # matching the reference (p,q) = (0,0),(0,1),(1,0),(1,1) ordering.
    n = b * z * h2
    two_d = 2 * dim
    xr = x.reshape(n, 2, w2, two_d)

    # Fold the LayerNorm affine into the linear layer (in f32, before any
    # bf16 cast):  LN(x) @ W = xhat @ (diag(gamma) W) + beta @ W.
    w_f32 = params["w_t"].astype(jnp.float32)           # (4*dim, 2*dim)
    gamma = params["ln_gamma"].astype(jnp.float32)
    beta = params["ln_beta"].astype(jnp.float32)
    w_fold = w_f32 * gamma[:, None]
    bias = beta @ w_f32                                  # (2*dim,)

    c_out = w_f32.shape[1]
    dot_dtype = (jnp.bfloat16
                 if (use_bf16_dot or x.dtype == jnp.bfloat16) else jnp.float32)

    out3d = _merge_ln_linear(xr, w_fold, bias, c_out=c_out, tm=tm,
                             dot_dtype=dot_dtype)
    out = out3d.reshape(b, z * h2 * w2, c_out)
    return out, (b, z, h2, w2, c_out)


def _reference_forward(x, embedding_shape, params):
    """Pure-JAX reference mirroring the PyTorch forward (for validation)."""
    b, z, h, w, dim = embedding_shape
    x = x.reshape(embedding_shape)
    pad_lon = (2 - w % 2) % 2
    pad_lat = (2 - h % 2) % 2
    x = jnp.pad(
        x,
        ((0, 0), (0, 0),
         (pad_lat // 2, pad_lat - pad_lat // 2),
         (pad_lon // 2, pad_lon - pad_lon // 2),
         (0, 0)),
    )
    hp, wp = h + pad_lat, w + pad_lon
    h2, w2 = hp // 2, wp // 2
    x = x.reshape(b, z, h2, 2, w2, 2, dim)
    x = jnp.transpose(x, (0, 1, 2, 4, 3, 5, 6))
    x = x.reshape(b, z * h2 * w2, 4 * dim)
    mean = jnp.mean(x, axis=-1, keepdims=True)
    var = jnp.mean((x - mean) ** 2, axis=-1, keepdims=True)
    xn = (x - mean) / jnp.sqrt(var + LN_EPS) * params["ln_gamma"] + params["ln_beta"]
    return xn @ params["w_t"]


if __name__ == "__main__":
    # Small shapes: batch=2, Z=2, H=7, W=9 (exercises the centered padding),
    # token dim=16 -> merged tokens of 64 channels, output tokens of 32 channels.
    B, Z, H, W, DIM = 2, 2, 7, 9, 16
    key = jax.random.PRNGKey(0)
    kx, kg, kb, kw = jax.random.split(key, 4)

    x = jax.random.normal(kx, (B, Z * H * W, DIM), dtype=jnp.float32)
    params = {
        "ln_gamma": jax.random.normal(kg, (4 * DIM,), dtype=jnp.float32) * 0.1 + 1.0,
        "ln_beta": jax.random.normal(kb, (4 * DIM,), dtype=jnp.float32) * 0.1,
        # torch Linear.weight has shape (2*dim, 4*dim); we store its transpose.
        "w_t": jax.random.normal(kw, (4 * DIM, 2 * DIM), dtype=jnp.float32)
        * (1.0 / jnp.sqrt(4 * DIM)),
    }
    embedding_shape = (B, Z, H, W, DIM)

    fwd = jax.jit(functools.partial(downsample_forward,
                                    embedding_shape=embedding_shape,
                                    params=params))
    out, out_shape = fwd(x)
    out = jax.block_until_ready(out)
    out_shape = tuple(int(v) for v in out_shape)

    ref = _reference_forward(x, embedding_shape, params)
    H2, W2 = (H + 1) // 2, (W + 1) // 2
    assert out.shape == (B, Z * H2 * W2, 2 * DIM), out.shape
    assert out_shape == (B, Z, H2, W2, 2 * DIM), out_shape
    assert jnp.allclose(out, ref, atol=1e-4, rtol=1e-4), float(jnp.max(jnp.abs(out - ref)))

    print("KERNEL_OK")
</pallas_src>

<mosaic_0001>
module attributes {stable_mosaic.version = 11 : i64} {
  func.func @_downsample_kernel(%arg0: i32, %arg1: memref<16x2x5x32xf32, #tpu.memory_space<vmem>>, %arg2: memref<64x128xf32, #tpu.memory_space<vmem>>, %arg3: memref<1x128xf32, #tpu.memory_space<vmem>>, %arg4: memref<16x5x128xf32, #tpu.memory_space<vmem>>) attributes {dimension_semantics = [#tpu.dimension_semantics<parallel>], iteration_bounds = array<i64: 1>, scalar_prefetch = 0 : i64, scratch_operands = 0 : i64, tpu.core_type = #tpu.core_type<tc>, window_params = [{transform_indices = @transform_0, window_bounds = array<i64: 16, 2, 5, 32>}, {pipeline_mode = #tpu.pipeline_mode<synchronous>, transform_indices = @transform_1, window_bounds = array<i64: 64, 128>}, {pipeline_mode = #tpu.pipeline_mode<synchronous>, transform_indices = @transform_2, window_bounds = array<i64: 1, 128>}, {transform_indices = @transform_3, window_bounds = array<i64: 16, 5, 128>}]} {
    %c0 = arith.constant 0 : index
    %c0_0 = arith.constant 0 : index
    %0 = vector.load %arg2[%c0, %c0_0] : memref<64x128xf32, #tpu.memory_space<vmem>>, vector<32x128xf32>
    %c32 = arith.constant 32 : index
    %c0_1 = arith.constant 0 : index
    %1 = vector.load %arg2[%c32, %c0_1] : memref<64x128xf32, #tpu.memory_space<vmem>>, vector<32x128xf32>
    %c0_2 = arith.constant 0 : index
    %c0_3 = arith.constant 0 : index
    %2 = vector.load %arg3[%c0_2, %c0_3] : memref<1x128xf32, #tpu.memory_space<vmem>>, vector<1x128xf32>
    %c0_4 = arith.constant 0 : index
    %c0_5 = arith.constant 0 : index
    %c0_6 = arith.constant 0 : index
    %c0_7 = arith.constant 0 : index
    %3 = vector.load %arg1[%c0_4, %c0_5, %c0_6, %c0_7] : memref<16x2x5x32xf32, #tpu.memory_space<vmem>>, vector<1x1x5x32xf32>
    %4 = vector.shape_cast %3 : vector<1x1x5x32xf32> to vector<5x32xf32>
    %c0_8 = arith.constant 0 : index
    %c1 = arith.constant 1 : index
    %c0_9 = arith.constant 0 : index
    %c0_10 = arith.constant 0 : index
    %5 = vector.load %arg1[%c0_8, %c1, %c0_9, %c0_10] : memref<16x2x5x32xf32, #tpu.memory_space<vmem>>, vector<1x1x5x32xf32>
    %6 = vector.shape_cast %5 : vector<1x1x5x32xf32> to vector<5x32xf32>
    %cst = arith.constant dense<0.000000e+00> : vector<5xf32>
    %7 = vector.multi_reduction <add>, %4, %cst [1] : vector<5x32xf32> to vector<5xf32>
    %8 = vector.shape_cast %7 : vector<5xf32> to vector<5x1xf32>
    %cst_11 = arith.constant dense<0.000000e+00> : vector<5xf32>
    %9 = vector.multi_reduction <add>, %6, %cst_11 [1] : vector<5x32xf32> to vector<5xf32>
    %10 = vector.shape_cast %9 : vector<5xf32> to vector<5x1xf32>
    %11 = arith.addf %8, %10 : vector<5x1xf32>
    %12 = arith.mulf %4, %4 : vector<5x32xf32>
    %cst_12 = arith.constant dense<0.000000e+00> : vector<5xf32>
    %13 = vector.multi_reduction <add>, %12, %cst_12 [1] : vector<5x32xf32> to vector<5xf32>
    %14 = vector.shape_cast %13 : vector<5xf32> to vector<5x1xf32>
    %15 = arith.mulf %6, %6 : vector<5x32xf32>
    %cst_13 = arith.constant dense<0.000000e+00> : vector<5xf32>
    %16 = vector.multi_reduction <add>, %15, %cst_13 [1] : vector<5x32xf32> to vector<5xf32>
    %17 = vector.shape_cast %16 : vector<5xf32> to vector<5x1xf32>
    %18 = arith.addf %14, %17 : vector<5x1xf32>
    %cst_14 = arith.constant 1.562500e-02 : f32
    %19 = vector.broadcast %cst_14 : f32 to vector<5x1xf32>
    %20 = arith.mulf %11, %19 : vector<5x1xf32>
    %cst_15 = arith.constant 1.562500e-02 : f32
    %21 = vector.broadcast %cst_15 : f32 to vector<5x1xf32>
    %22 = arith.mulf %18, %21 : vector<5x1xf32>
    %23 = arith.mulf %20, %20 : vector<5x1xf32>
    %24 = arith.subf %22, %23 : vector<5x1xf32>
    %cst_16 = arith.constant 9.99999974E-6 : f32
    %25 = vector.broadcast %cst_16 : f32 to vector<5x1xf32>
    %26 = arith.addf %24, %25 : vector<5x1xf32>
    %27 = math.rsqrt %26 : vector<5x1xf32>
    %28 = vector.broadcast %20 : vector<5x1xf32> to vector<5x32xf32>
    %29 = arith.subf %4, %28 : vector<5x32xf32>
    %30 = vector.broadcast %27 : vector<5x1xf32> to vector<5x32xf32>
    %31 = arith.mulf %29, %30 : vector<5x32xf32>
    %32 = vector.broadcast %20 : vector<5x1xf32> to vector<5x32xf32>
    %33 = arith.subf %6, %32 : vector<5x32xf32>
    %34 = vector.broadcast %27 : vector<5x1xf32> to vector<5x32xf32>
    %35 = arith.mulf %33, %34 : vector<5x32xf32>
    %cst_17 = arith.constant dense<0.000000e+00> : vector<5x128xf32>
    %36 = tpu.matmul %31, %0, %cst_17 {dimension_numbers = #tpu.dot_dimension_numbers<[1], [0], [0], [1], [0, 0, 1, 1], [], []>} : vector<5x32xf32>, vector<32x128xf32>, vector<5x128xf32> -> vector<5x128xf32>
    %cst_18 = arith.constant dense<0.000000e+00> : vector<5x128xf32>
    %37 = tpu.matmul %35, %1, %cst_18 {dimension_numbers = #tpu.dot_dimension_numbers<[1], [0], [0], [1], [0, 0, 1, 1], [], []>} : vector<5x32xf32>, vector<32x128xf32>, vector<5x128xf32> -> vector<5x128xf32>
    %38 = arith.addf %36, %37 : vector<5x128xf32>
    %39 = vector.broadcast %2 : vector<1x128xf32> to vector<5x128xf32>
    %40 = arith.addf %38, %39 : vector<5x128xf32>
    %c0_19 = arith.constant 0 : index
    %c0_20 = arith.constant 0 : index
    %c0_21 = arith.constant 0 : index
    %41 = vector.load %arg4[%c0_19, %c0_20, %c0_21] : memref<16x5x128xf32, #tpu.memory_space<vmem>>, vector<1x5x128xf32>
    %42 = vector.shape_cast %41 : vector<1x5x128xf32> to vector<5x128xf32>
    %43 = vector.shape_cast %40 : vector<5x128xf32> to vector<1x5x128xf32>
    tpu.vector_store %arg4[%c0_19, %c0_20, %c0_21], %43 {strides = array<i32>} : memref<16x5x128xf32, #tpu.memory_space<vmem>>, vector<1x5x128xf32>,
    %c1_22 = arith.constant 1 : index
    %c0_23 = arith.constant 0 : index
    %c0_24 = arith.constant 0 : index
    %c0_25 = arith.constant 0 : index
    %44 = vector.load %arg1[%c1_22, %c0_23, %c0_24, %c0_25] : memref<16x2x5x32xf32, #tpu.memory_space<vmem>>, vector<1x1x5x32xf32>
    %45 = vector.shape_cast %44 : vector<1x1x5x32xf32> to vector<5x32xf32>
    %c1_26 = arith.constant 1 : index
    %c1_27 = arith.constant 1 : index
    %c0_28 = arith.constant 0 : index
    %c0_29 = arith.constant 0 : index
    %46 = vector.load %arg1[%c1_26, %c1_27, %c0_28, %c0_29] : memref<16x2x5x32xf32, #tpu.memory_space<vmem>>, vector<1x1x5x32xf32>
    %47 = vector.shape_cast %46 : vector<1x1x5x32xf32> to vector<5x32xf32>
    %cst_30 = arith.constant dense<0.000000e+00> : vector<5xf32>
    %48 = vector.multi_reduction <add>, %45, %cst_30 [1] : vector<5x32xf32> to vector<5xf32>
    %49 = vector.shape_cast %48 : vector<5xf32> to vector<5x1xf32>
    %cst_31 = arith.constant dense<0.000000e+00> : vector<5xf32>
    %50 = vector.multi_reduction <add>, %47, %cst_31 [1] : vector<5x32xf32> to vector<5xf32>
    %51 = vector.shape_cast %50 : vector<5xf32> to vector<5x1xf32>
    %52 = arith.addf %49, %51 : vector<5x1xf32>
    %53 = arith.mulf %45, %45 : vector<5x32xf32>
    %cst_32 = arith.constant dense<0.000000e+00> : vector<5xf32>
    %54 = vector.multi_reduction <add>, %53, %cst_32 [1] : vector<5x32xf32> to vector<5xf32>
    %55 = vector.shape_cast %54 : vector<5xf32> to vector<5x1xf32>
    %56 = arith.mulf %47, %47 : vector<5x32xf32>
    %cst_33 = arith.constant dense<0.000000e+00> : vector<5xf32>
    %57 = vector.multi_reduction <add>, %56, %cst_33 [1] : vector<5x32xf32> to vector<5xf32>
    %58 = vector.shape_cast %57 : vector<5xf32> to vector<5x1xf32>
    %59 = arith.addf %55, %58 : vector<5x1xf32>
    %cst_34 = arith.constant 1.562500e-02 : f32
    %60 = vector.broadcast %cst_34 : f32 to vector<5x1xf32>
    %61 = arith.mulf %52, %60 : vector<5x1xf32>
    %cst_35 = arith.constant 1.562500e-02 : f32
    %62 = vector.broadcast %cst_35 : f32 to vector<5x1xf32>
    %63 = arith.mulf %59, %62 : vector<5x1xf32>
    %64 = arith.mulf %61, %61 : vector<5x1xf32>
    %65 = arith.subf %63, %64 : vector<5x1xf32>
    %cst_36 = arith.constant 9.99999974E-6 : f32
    %66 = vector.broadcast %cst_36 : f32 to vector<5x1xf32>
    %67 = arith.addf %65, %66 : vector<5x1xf32>
    %68 = math.rsqrt %67 : vector<5x1xf32>
    %69 = vector.broadcast %61 : vector<5x1xf32> to vector<5x32xf32>
    %70 = arith.subf %45, %69 : vector<5x32xf32>
    %71 = vector.broadcast %68 : vector<5x1xf32> to vector<5x32xf32>
    %72 = arith.mulf %70, %71 : vector<5x32xf32>
    %73 = vector.broadcast %61 : vector<5x1xf32> to vector<5x32xf32>
    %74 = arith.subf %47, %73 : vector<5x32xf32>
    %75 = vector.broadcast %68 : vector<5x1xf32> to vector<5x32xf32>
    %76 = arith.mulf %74, %75 : vector<5x32xf32>
    %cst_37 = arith.constant dense<0.000000e+00> : vector<5x128xf32>
    %77 = tpu.matmul %72, %0, %cst_37 {dimension_numbers = #tpu.dot_dimension_numbers<[1], [0], [0], [1], [0, 0, 1, 1], [], []>} : vector<5x32xf32>, vector<32x128xf32>, vector<5x128xf32> -> vector<5x128xf32>
    %cst_38 = arith.constant dense<0.000000e+00> : vector<5x128xf32>
    %78 = tpu.matmul %76, %1, %cst_38 {dimension_numbers = #tpu.dot_dimension_numbers<[1], [0], [0], [1], [0, 0, 1, 1], [], []>} : vector<5x32xf32>, vector<32x128xf32>, vector<5x128xf32> -> vector<5x128xf32>
    %79 = arith.addf %77, %78 : vector<5x128xf32>
    %80 = vector.broadcast %2 : vector<1x128xf32> to vector<5x128xf32>
    %81 = arith.addf %79, %80 : vector<5x128xf32>
    %c1_39 = arith.constant 1 : index
    %c0_40 = arith.constant 0 : index
    %c0_41 = arith.constant 0 : index
    %82 = vector.load %arg4[%c1_39, %c0_40, %c0_41] : memref<16x5x128xf32, #tpu.memory_space<vmem>>, vector<1x5x128xf32>
    %83 = vector.shape_cast %82 : vector<1x5x128xf32> to vector<5x128xf32>
    %84 = vector.shape_cast %81 : vector<5x128xf32> to vector<1x5x128xf32>
    tpu.vector_store %arg4[%c1_39, %c0_40, %c0_41], %84 {strides = array<i32>} : memref<16x5x128xf32, #tpu.memory_space<vmem>>, vector<1x5x128xf32>,
    %c2 = arith.constant 2 : index
    %c0_42 = arith.constant 0 : index
    %c0_43 = arith.constant 0 : index
    %c0_44 = arith.constant 0 : index
    %85 = vector.load %arg1[%c2, %c0_42, %c0_43, %c0_44] : memref<16x2x5x32xf32, #tpu.memory_space<vmem>>, vector<1x1x5x32xf32>
    %86 = vector.shape_cast %85 : vector<1x1x5x32xf32> to vector<5x32xf32>
    %c2_45 = arith.constant 2 : index
    %c1_46 = arith.constant 1 : index
    %c0_47 = arith.constant 0 : index
    %c0_48 = arith.constant 0 : index
    %87 = vector.load %arg1[%c2_45, %c1_46, %c0_47, %c0_48] : memref<16x2x5x32xf32, #tpu.memory_space<vmem>>, vector<1x1x5x32xf32>
    %88 = vector.shape_cast %87 : vector<1x1x5x32xf32> to vector<5x32xf32>
    %cst_49 = arith.constant dense<0.000000e+00> : vector<5xf32>
    %89 = vector.multi_reduction <add>, %86, %cst_49 [1] : vector<5x32xf32> to vector<5xf32>
    %90 = vector.shape_cast %89 : vector<5xf32> to vector<5x1xf32>
    %cst_50 = arith.constant dense<0.000000e+00> : vector<5xf32>
    %91 = vector.multi_reduction <add>, %88, %cst_50 [1] : vector<5x32xf32> to vector<5xf32>
    %92 = vector.shape_cast %91 : vector<5xf32> to vector<5x1xf32>
    %93 = arith.addf %90, %92 : vector<5x1xf32>
    %94 = arith.mulf %86, %86 : vector<5x32xf32>
    %cst_51 = arith.constant dense<0.000000e+00> : vector<5xf32>
    %95 = vector.multi_reduction <add>, %94, %cst_51 [1] : vector<5x32xf32> to vector<5xf32>
    %96 = vector.shape_cast %95 : vector<5xf32> to vector<5x1xf32>
    %97 = arith.mulf %88, %88 : vector<5x32xf32>
    %cst_52 = arith.constant dense<0.000000e+00> : vector<5xf32>
    %98 = vector.multi_reduction <add>, %97, %cst_52 [1] : vector<5x32xf32> to vector<5xf32>
    %99 = vector.shape_cast %98 : vector<5xf32> to vector<5x1xf32>
    %100 = arith.addf %96, %99 : vector<5x1xf32>
    %cst_53 = arith.constant 1.562500e-02 : f32
    %101 = vector.broadcast %cst_53 : f32 to vector<5x1xf32>
    %102 = arith.mulf %93, %101 : vector<5x1xf32>
    %cst_54 = arith.constant 1.562500e-02 : f32
    %103 = vector.broadcast %cst_54 : f32 to vector<5x1xf32>
    %104 = arith.mulf %100, %103 : vector<5x1xf32>
    %105 = arith.mulf %102, %102 : vector<5x1xf32>
    %106 = arith.subf %104, %105 : vector<5x1xf32>
    %cst_55 = arith.constant 9.99999974E-6 : f32
    %107 = vector.broadcast %cst_55 : f32 to vector<5x1xf32>
    %108 = arith.addf %106, %107 : vector<5x1xf32>
    %109 = math.rsqrt %108 : vector<5x1xf32>
    %110 = vector.broadcast %102 : vector<5x1xf32> to vector<5x32xf32>
    %111 = arith.subf %86, %110 : vector<5x32xf32>
    %112 = vector.broadcast %109 : vector<5x1xf32> to vector<5x32xf32>
    %113 = arith.mulf %111, %112 : vector<5x32xf32>
    %114 = vector.broadcast %102 : vector<5x1xf32> to vector<5x32xf32>
    %115 = arith.subf %88, %114 : vector<5x32xf32>
    %116 = vector.broadcast %109 : vector<5x1xf32> to vector<5x32xf32>
    %117 = arith.mulf %115, %116 : vector<5x32xf32>
    %cst_56 = arith.constant dense<0.000000e+00> : vector<5x128xf32>
    %118 = tpu.matmul %113, %0, %cst_56 {dimension_numbers = #tpu.dot_dimension_numbers<[1], [0], [0], [1], [0, 0, 1, 1], [], []>} : vector<5x32xf32>, vector<32x128xf32>, vector<5x128xf32> -> vector<5x128xf32>
    %cst_57 = arith.constant dense<0.000000e+00> : vector<5x128xf32>
    %119 = tpu.matmul %117, %1, %cst_57 {dimension_numbers = #tpu.dot_dimension_numbers<[1], [0], [0], [1], [0, 0, 1, 1], [], []>} : vector<5x32xf32>, vector<32x128xf32>, vector<5x128xf32> -> vector<5x128xf32>
    %120 = arith.addf %118, %119 : vector<5x128xf32>
    %121 = vector.broadcast %2 : vector<1x128xf32> to vector<5x128xf32>
    %122 = arith.addf %120, %121 : vector<5x128xf32>
    %c2_58 = arith.constant 2 : index
    %c0_59 = arith.constant 0 : index
    %c0_60 = arith.constant 0 : index
    %123 = vector.load %arg4[%c2_58, %c0_59, %c0_60] : memref<16x5x128xf32, #tpu.memory_space<vmem>>, vector<1x5x128xf32>
    %124 = vector.shape_cast %123 : vector<1x5x128xf32> to vector<5x128xf32>
    %125 = vector.shape_cast %122 : vector<5x128xf32> to vector<1x5x128xf32>
    tpu.vector_store %arg4[%c2_58, %c0_59, %c0_60], %125 {strides = array<i32>} : memref<16x5x128xf32, #tpu.memory_space<vmem>>, vector<1x5x128xf32>,
    %c3 = arith.constant 3 : index
    %c0_61 = arith.constant 0 : index
    %c0_62 = arith.constant 0 : index
    %c0_63 = arith.constant 0 : index
    %126 = vector.load %arg1[%c3, %c0_61, %c0_62, %c0_63] : memref<16x2x5x32xf32, #tpu.memory_space<vmem>>, vector<1x1x5x32xf32>
    %127 = vector.shape_cast %126 : vector<1x1x5x32xf32> to vector<5x32xf32>
    %c3_64 = arith.constant 3 : index
    %c1_65 = arith.constant 1 : index
    %c0_66 = arith.constant 0 : index
    %c0_67 = arith.constant 0 : index
    %128 = vector.load %arg1[%c3_64, %c1_65, %c0_66, %c0_67] : memref<16x2x5x32xf32, #tpu.memory_space<vmem>>, vector<1x1x5x32xf32>
    %129 = vector.shape_cast %128 : vector<1x1x5x32xf32> to vector<5x32xf32>
    %cst_68 = arith.constant dense<0.000000e+00> : vector<5xf32>
    %130 = vector.multi_reduction <add>, %127, %cst_68 [1] : vector<5x32xf32> to vector<5xf32>
    %131 = vector.shape_cast %130 : vector<5xf32> to vector<5x1xf32>
    %cst_69 = arith.constant dense<0.000000e+00> : vector<5xf32>
    %132 = vector.multi_reduction <add>, %129, %cst_69 [1] : vector<5x32xf32> to vector<5xf32>
    %133 = vector.shape_cast %132 : vector<5xf32> to vector<5x1xf32>
    %134 = arith.addf %131, %133 : vector<5x1xf32>
    %135 = arith.mulf %127, %127 : vector<5x32xf32>
    %cst_70 = arith.constant dense<0.000000e+00> : vector<5xf32>
    %136 = vector.multi_reduction <add>, %135, %cst_70 [1] : vector<5x32xf32> to vector<5xf32>
    %137 = vector.shape_cast %136 : vector<5xf32> to vector<5x1xf32>
    %138 = arith.mulf %129, %129 : vector<5x32xf32>
    %cst_71 = arith.constant dense<0.000000e+00> : vector<5xf32>
    %139 = vector.multi_reduction <add>, %138, %cst_71 [1] : vector<5x32xf32> to vector<5xf32>
    %140 = vector.shape_cast %139 : vector<5xf32> to vector<5x1xf32>
    %141 = arith.addf %137, %140 : vector<5x1xf32>
    %cst_72 = arith.constant 1.562500e-02 : f32
    %142 = vector.broadcast %cst_72 : f32 to vector<5x1xf32>
    %143 = arith.mulf %134, %142 : vector<5x1xf32>
    %cst_73 = arith.constant 1.562500e-02 : f32
    %144 = vector.broadcast %cst_73 : f32 to vector<5x1xf32>
    %145 = arith.mulf %141, %144 : vector<5x1xf32>
    %146 = arith.mulf %143, %143 : vector<5x1xf32>
    %147 = arith.subf %145, %146 : vector<5x1xf32>
    %cst_74 = arith.constant 9.99999974E-6 : f32
    %148 = vector.broadcast %cst_74 : f32 to vector<5x1xf32>
    %149 = arith.addf %147, %148 : vector<5x1xf32>
    %150 = math.rsqrt %149 : vector<5x1xf32>
    %151 = vector.broadcast %143 : vector<5x1xf32> to vector<5x32xf32>
    %152 = arith.subf %127, %151 : vector<5x32xf32>
    %153 = vector.broadcast %150 : vector<5x1xf32> to vector<5x32xf32>
    %154 = arith.mulf %152, %153 : vector<5x32xf32>
    %155 = vector.broadcast %143 : vector<5x1xf32> to vector<5x32xf32>
    %156 = arith.subf %129, %155 : vector<5x32xf32>
    %157 = vector.broadcast %150 : vector<5x1xf32> to vector<5x32xf32>
    %158 = arith.mulf %156, %157 : vector<5x32xf32>
    %cst_75 = arith.constant dense<0.000000e+00> : vector<5x128xf32>
    %159 = tpu.matmul %154, %0, %cst_75 {dimension_numbers = #tpu.dot_dimension_numbers<[1], [0], [0], [1], [0, 0, 1, 1], [], []>} : vector<5x32xf32>, vector<32x128xf32>, vector<5x128xf32> -> vector<5x128xf32>
    %cst_76 = arith.constant dense<0.000000e+00> : vector<5x128xf32>
    %160 = tpu.matmul %158, %1, %cst_76 {dimension_numbers = #tpu.dot_dimension_numbers<[1], [0], [0], [1], [0, 0, 1, 1], [], []>} : vector<5x32xf32>, vector<32x128xf32>, vector<5x128xf32> -> vector<5x128xf32>
    %161 = arith.addf %159, %160 : vector<5x128xf32>
    %162 = vector.broadcast %2 : vector<1x128xf32> to vector<5x128xf32>
    %163 = arith.addf %161, %162 : vector<5x128xf32>
    %c3_77 = arith.constant 3 : index
    %c0_78 = arith.constant 0 : index
    %c0_79 = arith.constant 0 : index
    %164 = vector.load %arg4[%c3_77, %c0_78, %c0_79] : memref<16x5x128xf32, #tpu.memory_space<vmem>>, vector<1x5x128xf32>
    %165 = vector.shape_cast %164 : vector<1x5x128xf32> to vector<5x128xf32>
    %166 = vector.shape_cast %163 : vector<5x128xf32> to vector<1x5x128xf32>
    tpu.vector_store %arg4[%c3_77, %c0_78, %c0_79], %166 {strides = array<i32>} : memref<16x5x128xf32, #tpu.memory_space<vmem>>, vector<1x5x128xf32>,
    %c4 = arith.constant 4 : index
    %c0_80 = arith.constant 0 : index
    %c0_81 = arith.constant 0 : index
    %c0_82 = arith.constant 0 : index
    %167 = vector.load %arg1[%c4, %c0_80, %c0_81, %c0_82] : memref<16x2x5x32xf32, #tpu.memory_space<vmem>>, vector<1x1x5x32xf32>
    %168 = vector.shape_cast %167 : vector<1x1x5x32xf32> to vector<5x32xf32>
    %c4_83 = arith.constant 4 : index
    %c1_84 = arith.constant 1 : index
    %c0_85 = arith.constant 0 : index
    %c0_86 = arith.constant 0 : index
    %169 = vector.load %arg1[%c4_83, %c1_84, %c0_85, %c0_86] : memref<16x2x5x32xf32, #tpu.memory_space<vmem>>, vector<1x1x5x32xf32>
    %170 = vector.shape_cast %169 : vector<1x1x5x32xf32> to vector<5x32xf32>
    %cst_87 = arith.constant dense<0.000000e+00> : vector<5xf32>
    %171 = vector.multi_reduction <add>, %168, %cst_87 [1] : vector<5x32xf32> to vector<5xf32>
    %172 = vector.shape_cast %171 : vector<5xf32> to vector<5x1xf32>
    %cst_88 = arith.constant dense<0.000000e+00> : vector<5xf32>
    %173 = vector.multi_reduction <add>, %170, %cst_88 [1] : vector<5x32xf32> to vector<5xf32>
    %174 = vector.shape_cast %173 : vector<5xf32> to vector<5x1xf32>
    %175 = arith.addf %172, %174 : vector<5x1xf32>
    %176 = arith.mulf %168, %168 : vector<5x32xf32>
    %cst_89 = arith.constant dense<0.000000e+00> : vector<5xf32>
    %177 = vector.multi_reduction <add>, %176, %cst_89 [1] : vector<5x32xf32> to vector<5xf32>
    %178 = vector.shape_cast %177 : vector<5xf32> to vector<5x1xf32>
    %179 = arith.mulf %170, %170 : vector<5x32xf32>
    %cst_90 = arith.constant dense<0.000000e+00> : vector<5xf32>
    %180 = vector.multi_reduction <add>, %179, %cst_90 [1] : vector<5x32xf32> to vector<5xf32>
    %181 = vector.shape_cast %180 : vector<5xf32> to vector<5x1xf32>
    %182 = arith.addf %178, %181 : vector<5x1xf32>
    %cst_91 = arith.constant 1.562500e-02 : f32
    %183 = vector.broadcast %cst_91 : f32 to vector<5x1xf32>
    %184 = arith.mulf %175, %183 : vector<5x1xf32>
    %cst_92 = arith.constant 1.562500e-02 : f32
    %185 = vector.broadcast %cst_92 : f32 to vector<5x1xf32>
    %186 = arith.mulf %182, %185 : vector<5x1xf32>
    %187 = arith.mulf %184, %184 : vector<5x1xf32>
    %188 = arith.subf %186, %187 : vector<5x1xf32>
    %cst_93 = arith.constant 9.99999974E-6 : f32
    %189 = vector.broadcast %cst_93 : f32 to vector<5x1xf32>
    %190 = arith.addf %188, %189 : vector<5x1xf32>
    %191 = math.rsqrt %190 : vector<5x1xf32>
    %192 = vector.broadcast %184 : vector<5x1xf32> to vector<5x32xf32>
    %193 = arith.subf %168, %192 : vector<5x32xf32>
    %194 = vector.broadcast %191 : vector<5x1xf32> to vector<5x32xf32>
    %195 = arith.mulf %193, %194 : vector<5x32xf32>
    %196 = vector.broadcast %184 : vector<5x1xf32> to vector<5x32xf32>
    %197 = arith.subf %170, %196 : vector<5x32xf32>
    %198 = vector.broadcast %191 : vector<5x1xf32> to vector<5x32xf32>
    %199 = arith.mulf %197, %198 : vector<5x32xf32>
    %cst_94 = arith.constant dense<0.000000e+00> : vector<5x128xf32>
    %200 = tpu.matmul %195, %0, %cst_94 {dimension_numbers = #tpu.dot_dimension_numbers<[1], [0], [0], [1], [0, 0, 1, 1], [], []>} : vector<5x32xf32>, vector<32x128xf32>, vector<5x128xf32> -> vector<5x128xf32>
    %cst_95 = arith.constant dense<0.000000e+00> : vector<5x128xf32>
    %201 = tpu.matmul %199, %1, %cst_95 {dimension_numbers = #tpu.dot_dimension_numbers<[1], [0], [0], [1], [0, 0, 1, 1], [], []>} : vector<5x32xf32>, vector<32x128xf32>, vector<5x128xf32> -> vector<5x128xf32>
    %202 = arith.addf %200, %201 : vector<5x128xf32>
    %203 = vector.broadcast %2 : vector<1x128xf32> to vector<5x128xf32>
    %204 = arith.addf %202, %203 : vector<5x128xf32>
    %c4_96 = arith.constant 4 : index
    %c0_97 = arith.constant 0 : index
    %c0_98 = arith.constant 0 : index
    %205 = vector.load %arg4[%c4_96, %c0_97, %c0_98] : memref<16x5x128xf32, #tpu.memory_space<vmem>>, vector<1x5x128xf32>
    %206 = vector.shape_cast %205 : vector<1x5x128xf32> to vector<5x128xf32>
    %207 = vector.shape_cast %204 : vector<5x128xf32> to vector<1x5x128xf32>
    tpu.vector_store %arg4[%c4_96, %c0_97, %c0_98], %207 {strides = array<i32>} : memref<16x5x128xf32, #tpu.memory_space<vmem>>, vector<1x5x128xf32>,
    %c5 = arith.constant 5 : index
    %c0_99 = arith.constant 0 : index
    %c0_100 = arith.constant 0 : index
    %c0_101 = arith.constant 0 : index
    %208 = vector.load %arg1[%c5, %c0_99, %c0_100, %c0_101] : memref<16x2x5x32xf32, #tpu.memory_space<vmem>>, vector<1x1x5x32xf32>
    %209 = vector.shape_cast %208 : vector<1x1x5x32xf32> to vector<5x32xf32>
    %c5_102 = arith.constant 5 : index
    %c1_103 = arith.constant 1 : index
    %c0_104 = arith.constant 0 : index
    %c0_105 = arith.constant 0 : index
    %210 = vector.load %arg1[%c5_102, %c1_103, %c0_104, %c0_105] : memref<16x2x5x32xf32, #tpu.memory_space<vmem>>, vector<1x1x5x32xf32>
    %211 = vector.shape_cast %210 : vector<1x1x5x32xf32> to vector<5x32xf32>
    %cst_106 = arith.constant dense<0.000000e+00> : vector<5xf32>
    %212 = vector.multi_reduction <add>, %209, %cst_106 [1] : vector<5x32xf32> to vector<5xf32>
    %213 = vector.shape_cast %212 : vector<5xf32> to vector<5x1xf32>
    %cst_107 = arith.constant dense<0.000000e+00> : vector<5xf32>
    %214 = vector.multi_reduction <add>, %211, %cst_107 [1] : vector<5x32xf32> to vector<5xf32>
    %215 = vector.shape_cast %214 : vector<5xf32> to vector<5x1xf32>
    %216 = arith.addf %213, %215 : vector<5x1xf32>
    %217 = arith.mulf %209, %209 : vector<5x32xf32>
    %cst_108 = arith.constant dense<0.000000e+00> : vector<5xf32>
    %218 = vector.multi_reduction <add>, %217, %cst_108 [1] : vector<5x32xf32> to vector<5xf32>
    %219 = vector.shape_cast %218 : vector<5xf32> to vector<5x1xf32>
    %220 = arith.mulf %211, %211 : vector<5x32xf32>
    %cst_109 = arith.constant dense<0.000000e+00> : vector<5xf32>
    %221 = vector.multi_reduction <add>, %220, %cst_109 [1] : vector<5x32xf32> to vector<5xf32>
    %222 = vector.shape_cast %221 : vector<5xf32> to vector<5x1xf32>
    %223 = arith.addf %219, %222 : vector<5x1xf32>
    %cst_110 = arith.constant 1.562500e-02 : f32
    %224 = vector.broadcast %cst_110 : f32 to vector<5x1xf32>
    %225 = arith.mulf %216, %224 : vector<5x1xf32>
    %cst_111 = arith.constant 1.562500e-02 : f32
    %226 = vector.broadcast %cst_111 : f32 to vector<5x1xf32>
    %227 = arith.mulf %223, %226 : vector<5x1xf32>
    %228 = arith.mulf %225, %225 : vector<5x1xf32>
    %229 = arith.subf %227, %228 : vector<5x1xf32>
    %cst_112 = arith.constant 9.99999974E-6 : f32
    %230 = vector.broadcast %cst_112 : f32 to vector<5x1xf32>
    %231 = arith.addf %229, %230 : vector<5x1xf32>
    %232 = math.rsqrt %231 : vector<5x1xf32>
    %233 = vector.broadcast %225 : vector<5x1xf32> to vector<5x32xf32>
    %234 = arith.subf %209, %233 : vector<5x32xf32>
    %235 = vector.broadcast %232 : vector<5x1xf32> to vector<5x32xf32>
    %236 = arith.mulf %234, %235 : vector<5x32xf32>
    %237 = vector.broadcast %225 : vector<5x1xf32> to vector<5x32xf32>
    %238 = arith.subf %211, %237 : vector<5x32xf32>
    %239 = vector.broadcast %232 : vector<5x1xf32> to vector<5x32xf32>
    %240 = arith.mulf %238, %239 : vector<5x32xf32>
    %cst_113 = arith.constant dense<0.000000e+00> : vector<5x128xf32>
    %241 = tpu.matmul %236, %0, %cst_113 {dimension_numbers = #tpu.dot_dimension_numbers<[1], [0], [0], [1], [0, 0, 1, 1], [], []>} : vector<5x32xf32>, vector<32x128xf32>, vector<5x128xf32> -> vector<5x128xf32>
    %cst_114 = arith.constant dense<0.000000e+00> : vector<5x128xf32>
    %242 = tpu.matmul %240, %1, %cst_114 {dimension_numbers = #tpu.dot_dimension_numbers<[1], [0], [0], [1], [0, 0, 1, 1], [], []>} : vector<5x32xf32>, vector<32x128xf32>, vector<5x128xf32> -> vector<5x128xf32>
    %243 = arith.addf %241, %242 : vector<5x128xf32>
    %244 = vector.broadcast %2 : vector<1x128xf32> to vector<5x128xf32>
    %245 = arith.addf %243, %244 : vector<5x128xf32>
    %c5_115 = arith.constant 5 : index
    %c0_116 = arith.constant 0 : index
    %c0_117 = arith.constant 0 : index
    %246 = vector.load %arg4[%c5_115, %c0_116, %c0_117] : memref<16x5x128xf32, #tpu.memory_space<vmem>>, vector<1x5x128xf32>
    %247 = vector.shape_cast %246 : vector<1x5x128xf32> to vector<5x128xf32>
    %248 = vector.shape_cast %245 : vector<5x128xf32> to vector<1x5x128xf32>
    tpu.vector_store %arg4[%c5_115, %c0_116, %c0_117], %248 {strides = array<i32>} : memref<16x5x128xf32, #tpu.memory_space<vmem>>, vector<1x5x128xf32>,
    %c6 = arith.constant 6 : index
    %c0_118 = arith.constant 0 : index
    %c0_119 = arith.constant 0 : index
    %c0_120 = arith.constant 0 : index
    %249 = vector.load %arg1[%c6, %c0_118, %c0_119, %c0_120] : memref<16x2x5x32xf32, #tpu.memory_space<vmem>>, vector<1x1x5x32xf32>
    %250 = vector.shape_cast %249 : vector<1x1x5x32xf32> to vector<5x32xf32>
    %c6_121 = arith.constant 6 : index
    %c1_122 = arith.constant 1 : index
    %c0_123 = arith.constant 0 : index
    %c0_124 = arith.constant 0 : index
    %251 = vector.load %arg1[%c6_121, %c1_122, %c0_123, %c0_124] : memref<16x2x5x32xf32, #tpu.memory_space<vmem>>, vector<1x1x5x32xf32>
    %252 = vector.shape_cast %251 : vector<1x1x5x32xf32> to vector<5x32xf32>
    %cst_125 = arith.constant dense<0.000000e+00> : vector<5xf32>
    %253 = vector.multi_reduction <add>, %250, %cst_125 [1] : vector<5x32xf32> to vector<5xf32>
    %254 = vector.shape_cast %253 : vector<5xf32> to vector<5x1xf32>
    %cst_126 = arith.constant dense<0.000000e+00> : vector<5xf32>
    %255 = vector.multi_reduction <add>, %252, %cst_126 [1] : vector<5x32xf32> to vector<5xf32>
    %256 = vector.shape_cast %255 : vector<5xf32> to vector<5x1xf32>
    %257 = arith.addf %254, %256 : vector<5x1xf32>
    %258 = arith.mulf %250, %250 : vector<5x32xf32>
    %cst_127 = arith.constant dense<0.000000e+00> : vector<5xf32>
    %259 = vector.multi_reduction <add>, %258, %cst_127 [1] : vector<5x32xf32> to vector<5xf32>
    %260 = vector.shape_cast %259 : vector<5xf32> to vector<5x1xf32>
    %261 = arith.mulf %252, %252 : vector<5x32xf32>
    %cst_128 = arith.constant dense<0.000000e+00> : vector<5xf32>
    %262 = vector.multi_reduction <add>, %261, %cst_128 [1] : vector<5x32xf32> to vector<5xf32>
    %263 = vector.shape_cast %262 : vector<5xf32> to vector<5x1xf32>
    %264 = arith.addf %260, %263 : vector<5x1xf32>
    %cst_129 = arith.constant 1.562500e-02 : f32
    %265 = vector.broadcast %cst_129 : f32 to vector<5x1xf32>
    %266 = arith.mulf %257, %265 : vector<5x1xf32>
    %cst_130 = arith.constant 1.562500e-02 : f32
    %267 = vector.broadcast %cst_130 : f32 to vector<5x1xf32>
    %268 = arith.mulf %264, %267 : vector<5x1xf32>
    %269 = arith.mulf %266, %266 : vector<5x1xf32>
    %270 = arith.subf %268, %269 : vector<5x1xf32>
    %cst_131 = arith.constant 9.99999974E-6 : f32
    %271 = vector.broadcast %cst_131 : f32 to vector<5x1xf32>
    %272 = arith.addf %270, %271 : vector<5x1xf32>
    %273 = math.rsqrt %272 : vector<5x1xf32>
    %274 = vector.broadcast %266 : vector<5x1xf32> to vector<5x32xf32>
    %275 = arith.subf %250, %274 : vector<5x32xf32>
    %276 = vector.broadcast %273 : vector<5x1xf32> to vector<5x32xf32>
    %277 = arith.mulf %275, %276 : vector<5x32xf32>
    %278 = vector.broadcast %266 : vector<5x1xf32> to vector<5x32xf32>
    %279 = arith.subf %252, %278 : vector<5x32xf32>
    %280 = vector.broadcast %273 : vector<5x1xf32> to vector<5x32xf32>
    %281 = arith.mulf %279, %280 : vector<5x32xf32>
    %cst_132 = arith.constant dense<0.000000e+00> : vector<5x128xf32>
    %282 = tpu.matmul %277, %0, %cst_132 {dimension_numbers = #tpu.dot_dimension_numbers<[1], [0], [0], [1], [0, 0, 1, 1], [], []>} : vector<5x32xf32>, vector<32x128xf32>, vector<5x128xf32> -> vector<5x128xf32>
    %cst_133 = arith.constant dense<0.000000e+00> : vector<5x128xf32>
    %283 = tpu.matmul %281, %1, %cst_133 {dimension_numbers = #tpu.dot_dimension_numbers<[1], [0], [0], [1], [0, 0, 1, 1], [], []>} : vector<5x32xf32>, vector<32x128xf32>, vector<5x128xf32> -> vector<5x128xf32>
    %284 = arith.addf %282, %283 : vector<5x128xf32>
    %285 = vector.broadcast %2 : vector<1x128xf32> to vector<5x128xf32>
    %286 = arith.addf %284, %285 : vector<5x128xf32>
    %c6_134 = arith.constant 6 : index
    %c0_135 = arith.constant 0 : index
    %c0_136 = arith.constant 0 : index
    %287 = vector.load %arg4[%c6_134, %c0_135, %c0_136] : memref<16x5x128xf32, #tpu.memory_space<vmem>>, vector<1x5x128xf32>
    %288 = vector.shape_cast %287 : vector<1x5x128xf32> to vector<5x128xf32>
    %289 = vector.shape_cast %286 : vector<5x128xf32> to vector<1x5x128xf32>
    tpu.vector_store %arg4[%c6_134, %c0_135, %c0_136], %289 {strides = array<i32>} : memref<16x5x128xf32, #tpu.memory_space<vmem>>, vector<1x5x128xf32>,
    %c7 = arith.constant 7 : index
    %c0_137 = arith.constant 0 : index
    %c0_138 = arith.constant 0 : index
    %c0_139 = arith.constant 0 : index
    %290 = vector.load %arg1[%c7, %c0_137, %c0_138, %c0_139] : memref<16x2x5x32xf32, #tpu.memory_space<vmem>>, vector<1x1x5x32xf32>
    %291 = vector.shape_cast %290 : vector<1x1x5x32xf32> to vector<5x32xf32>
    %c7_140 = arith.constant 7 : index
    %c1_141 = arith.constant 1 : index
    %c0_142 = arith.constant 0 : index
    %c0_143 = arith.constant 0 : index
    %292 = vector.load %arg1[%c7_140, %c1_141, %c0_142, %c0_143] : memref<16x2x5x32xf32, #tpu.memory_space<vmem>>, vector<1x1x5x32xf32>
    %293 = vector.shape_cast %292 : vector<1x1x5x32xf32> to vector<5x32xf32>
    %cst_144 = arith.constant dense<0.000000e+00> : vector<5xf32>
    %294 = vector.multi_reduction <add>, %291, %cst_144 [1] : vector<5x32xf32> to vector<5xf32>
    %295 = vector.shape_cast %294 : vector<5xf32> to vector<5x1xf32>
    %cst_145 = arith.constant dense<0.000000e+00> : vector<5xf32>
    %296 = vector.multi_reduction <add>, %293, %cst_145 [1] : vector<5x32xf32> to vector<5xf32>
    %297 = vector.shape_cast %296 : vector<5xf32> to vector<5x1xf32>
    %298 = arith.addf %295, %297 : vector<5x1xf32>
    %299 = arith.mulf %291, %291 : vector<5x32xf32>
    %cst_146 = arith.constant dense<0.000000e+00> : vector<5xf32>
    %300 = vector.multi_reduction <add>, %299, %cst_146 [1] : vector<5x32xf32> to vector<5xf32>
    %301 = vector.shape_cast %300 : vector<5xf32> to vector<5x1xf32>
    %302 = arith.mulf %293, %293 : vector<5x32xf32>
    %cst_147 = arith.constant dense<0.000000e+00> : vector<5xf32>
    %303 = vector.multi_reduction <add>, %302, %cst_147 [1] : vector<5x32xf32> to vector<5xf32>
    %304 = vector.shape_cast %303 : vector<5xf32> to vector<5x1xf32>
    %305 = arith.addf %301, %304 : vector<5x1xf32>
    %cst_148 = arith.constant 1.562500e-02 : f32
    %306 = vector.broadcast %cst_148 : f32 to vector<5x1xf32>
    %307 = arith.mulf %298, %306 : vector<5x1xf32>
    %cst_149 = arith.constant 1.562500e-02 : f32
    %308 = vector.broadcast %cst_149 : f32 to vector<5x1xf32>
    %309 = arith.mulf %305, %308 : vector<5x1xf32>
    %310 = arith.mulf %307, %307 : vector<5x1xf32>
    %311 = arith.subf %309, %310 : vector<5x1xf32>
    %cst_150 = arith.constant 9.99999974E-6 : f32
    %312 = vector.broadcast %cst_150 : f32 to vector<5x1xf32>
    %313 = arith.addf %311, %312 : vector<5x1xf32>
    %314 = math.rsqrt %313 : vector<5x1xf32>
    %315 = vector.broadcast %307 : vector<5x1xf32> to vector<5x32xf32>
    %316 = arith.subf %291, %315 : vector<5x32xf32>
    %317 = vector.broadcast %314 : vector<5x1xf32> to vector<5x32xf32>
    %318 = arith.mulf %316, %317 : vector<5x32xf32>
    %319 = vector.broadcast %307 : vector<5x1xf32> to vector<5x32xf32>
    %320 = arith.subf %293, %319 : vector<5x32xf32>
    %321 = vector.broadcast %314 : vector<5x1xf32> to vector<5x32xf32>
    %322 = arith.mulf %320, %321 : vector<5x32xf32>
    %cst_151 = arith.constant dense<0.000000e+00> : vector<5x128xf32>
    %323 = tpu.matmul %318, %0, %cst_151 {dimension_numbers = #tpu.dot_dimension_numbers<[1], [0], [0], [1], [0, 0, 1, 1], [], []>} : vector<5x32xf32>, vector<32x128xf32>, vector<5x128xf32> -> vector<5x128xf32>
    %cst_152 = arith.constant dense<0.000000e+00> : vector<5x128xf32>
    %324 = tpu.matmul %322, %1, %cst_152 {dimension_numbers = #tpu.dot_dimension_numbers<[1], [0], [0], [1], [0, 0, 1, 1], [], []>} : vector<5x32xf32>, vector<32x128xf32>, vector<5x128xf32> -> vector<5x128xf32>
    %325 = arith.addf %323, %324 : vector<5x128xf32>
    %326 = vector.broadcast %2 : vector<1x128xf32> to vector<5x128xf32>
    %327 = arith.addf %325, %326 : vector<5x128xf32>
    %c7_153 = arith.constant 7 : index
    %c0_154 = arith.constant 0 : index
    %c0_155 = arith.constant 0 : index
    %328 = vector.load %arg4[%c7_153, %c0_154, %c0_155] : memref<16x5x128xf32, #tpu.memory_space<vmem>>, vector<1x5x128xf32>
    %329 = vector.shape_cast %328 : vector<1x5x128xf32> to vector<5x128xf32>
    %330 = vector.shape_cast %327 : vector<5x128xf32> to vector<1x5x128xf32>
    tpu.vector_store %arg4[%c7_153, %c0_154, %c0_155], %330 {strides = array<i32>} : memref<16x5x128xf32, #tpu.memory_space<vmem>>, vector<1x5x128xf32>,
    %c8 = arith.constant 8 : index
    %c0_156 = arith.constant 0 : index
    %c0_157 = arith.constant 0 : index
    %c0_158 = arith.constant 0 : index
    %331 = vector.load %arg1[%c8, %c0_156, %c0_157, %c0_158] : memref<16x2x5x32xf32, #tpu.memory_space<vmem>>, vector<1x1x5x32xf32>
    %332 = vector.shape_cast %331 : vector<1x1x5x32xf32> to vector<5x32xf32>
    %c8_159 = arith.constant 8 : index
    %c1_160 = arith.constant 1 : index
    %c0_161 = arith.constant 0 : index
    %c0_162 = arith.constant 0 : index
    %333 = vector.load %arg1[%c8_159, %c1_160, %c0_161, %c0_162] : memref<16x2x5x32xf32, #tpu.memory_space<vmem>>, vector<1x1x5x32xf32>
    %334 = vector.shape_cast %333 : vector<1x1x5x32xf32> to vector<5x32xf32>
    %cst_163 = arith.constant dense<0.000000e+00> : vector<5xf32>
    %335 = vector.multi_reduction <add>, %332, %cst_163 [1] : vector<5x32xf32> to vector<5xf32>
    %336 = vector.shape_cast %335 : vector<5xf32> to vector<5x1xf32>
    %cst_164 = arith.constant dense<0.000000e+00> : vector<5xf32>
    %337 = vector.multi_reduction <add>, %334, %cst_164 [1] : vector<5x32xf32> to vector<5xf32>
    %338 = vector.shape_cast %337 : vector<5xf32> to vector<5x1xf32>
    %339 = arith.addf %336, %338 : vector<5x1xf32>
    %340 = arith.mulf %332, %332 : vector<5x32xf32>
    %cst_165 = arith.constant dense<0.000000e+00> : vector<5xf32>
    %341 = vector.multi_reduction <add>, %340, %cst_165 [1] : vector<5x32xf32> to vector<5xf32>
    %342 = vector.shape_cast %341 : vector<5xf32> to vector<5x1xf32>
    %343 = arith.mulf %334, %334 : vector<5x32xf32>
    %cst_166 = arith.constant dense<0.000000e+00> : vector<5xf32>
    %344 = vector.multi_reduction <add>, %343, %cst_166 [1] : vector<5x32xf32> to vector<5xf32>
    %345 = vector.shape_cast %344 : vector<5xf32> to vector<5x1xf32>
    %346 = arith.addf %342, %345 : vector<5x1xf32>
    %cst_167 = arith.constant 1.562500e-02 : f32
    %347 = vector.broadcast %cst_167 : f32 to vector<5x1xf32>
    %348 = arith.mulf %339, %347 : vector<5x1xf32>
    %cst_168 = arith.constant 1.562500e-02 : f32
    %349 = vector.broadcast %cst_168 : f32 to vector<5x1xf32>
    %350 = arith.mulf %346, %349 : vector<5x1xf32>
    %351 = arith.mulf %348, %348 : vector<5x1xf32>
    %352 = arith.subf %350, %351 : vector<5x1xf32>
    %cst_169 = arith.constant 9.99999974E-6 : f32
    %353 = vector.broadcast %cst_169 : f32 to vector<5x1xf32>
    %354 = arith.addf %352, %353 : vector<5x1xf32>
    %355 = math.rsqrt %354 : vector<5x1xf32>
    %356 = vector.broadcast %348 : vector<5x1xf32> to vector<5x32xf32>
    %357 = arith.subf %332, %356 : vector<5x32xf32>
    %358 = vector.broadcast %355 : vector<5x1xf32> to vector<5x32xf32>
    %359 = arith.mulf %357, %358 : vector<5x32xf32>
    %360 = vector.broadcast %348 : vector<5x1xf32> to vector<5x32xf32>
    %361 = arith.subf %334, %360 : vector<5x32xf32>
    %362 = vector.broadcast %355 : vector<5x1xf32> to vector<5x32xf32>
    %363 = arith.mulf %361, %362 : vector<5x32xf32>
    %cst_170 = arith.constant dense<0.000000e+00> : vector<5x128xf32>
    %364 = tpu.matmul %359, %0, %cst_170 {dimension_numbers = #tpu.dot_dimension_numbers<[1], [0], [0], [1], [0, 0, 1, 1], [], []>} : vector<5x32xf32>, vector<32x128xf32>, vector<5x128xf32> -> vector<5x128xf32>
    %cst_171 = arith.constant dense<0.000000e+00> : vector<5x128xf32>
    %365 = tpu.matmul %363, %1, %cst_171 {dimension_numbers = #tpu.dot_dimension_numbers<[1], [0], [0], [1], [0, 0, 1, 1], [], []>} : vector<5x32xf32>, vector<32x128xf32>, vector<5x128xf32> -> vector<5x128xf32>
    %366 = arith.addf %364, %365 : vector<5x128xf32>
    %367 = vector.broadcast %2 : vector<1x128xf32> to vector<5x128xf32>
    %368 = arith.addf %366, %367 : vector<5x128xf32>
    %c8_172 = arith.constant 8 : index
    %c0_173 = arith.constant 0 : index
    %c0_174 = arith.constant 0 : index
    %369 = vector.load %arg4[%c8_172, %c0_173, %c0_174] : memref<16x5x128xf32, #tpu.memory_space<vmem>>, vector<1x5x128xf32>
    %370 = vector.shape_cast %369 : vector<1x5x128xf32> to vector<5x128xf32>
    %371 = vector.shape_cast %368 : vector<5x128xf32> to vector<1x5x128xf32>
    tpu.vector_store %arg4[%c8_172, %c0_173, %c0_174], %371 {strides = array<i32>} : memref<16x5x128xf32, #tpu.memory_space<vmem>>, vector<1x5x128xf32>,
    %c9 = arith.constant 9 : index
    %c0_175 = arith.constant 0 : index
    %c0_176 = arith.constant 0 : index
    %c0_177 = arith.constant 0 : index
    %372 = vector.load %arg1[%c9, %c0_175, %c0_176, %c0_177] : memref<16x2x5x32xf32, #tpu.memory_space<vmem>>, vector<1x1x5x32xf32>
    %373 = vector.shape_cast %372 : vector<1x1x5x32xf32> to vector<5x32xf32>
    %c9_178 = arith.constant 9 : index
    %c1_179 = arith.constant 1 : index
    %c0_180 = arith.constant 0 : index
    %c0_181 = arith.constant 0 : index
    %374 = vector.load %arg1[%c9_178, %c1_179, %c0_180, %c0_181] : memref<16x2x5x32xf32, #tpu.memory_space<vmem>>, vector<1x1x5x32xf32>
    %375 = vector.shape_cast %374 : vector<1x1x5x32xf32> to vector<5x32xf32>
    %cst_182 = arith.constant dense<0.000000e+00> : vector<5xf32>
    %376 = vector.multi_reduction <add>, %373, %cst_182 [1] : vector<5x32xf32> to vector<5xf32>
    %377 = vector.shape_cast %376 : vector<5xf32> to vector<5x1xf32>
    %cst_183 = arith.constant dense<0.000000e+00> : vector<5xf32>
    %378 = vector.multi_reduction <add>, %375, %cst_183 [1] : vector<5x32xf32> to vector<5xf32>
    %379 = vector.shape_cast %378 : vector<5xf32> to vector<5x1xf32>
    %380 = arith.addf %377, %379 : vector<5x1xf32>
    %381 = arith.mulf %373, %373 : vector<5x32xf32>
    %cst_184 = arith.constant dense<0.000000e+00> : vector<5xf32>
    %382 = vector.multi_reduction <add>, %381, %cst_184 [1] : vector<5x32xf32> to vector<5xf32>
    %383 = vector.shape_cast %382 : vector<5xf32> to vector<5x1xf32>
    %384 = arith.mulf %375, %375 : vector<5x32xf32>
    %cst_185 = arith.constant dense<0.000000e+00> : vector<5xf32>
    %385 = vector.multi_reduction <add>, %384, %cst_185 [1] : vector<5x32xf32> to vector<5xf32>
    %386 = vector.shape_cast %385 : vector<5xf32> to vector<5x1xf32>
    %387 = arith.addf %383, %386 : vector<5x1xf32>
    %cst_186 = arith.constant 1.562500e-02 : f32
    %388 = vector.broadcast %cst_186 : f32 to vector<5x1xf32>
    %389 = arith.mulf %380, %388 : vector<5x1xf32>
    %cst_187 = arith.constant 1.562500e-02 : f32
    %390 = vector.broadcast %cst_187 : f32 to vector<5x1xf32>
    %391 = arith.mulf %387, %390 : vector<5x1xf32>
    %392 = arith.mulf %389, %389 : vector<5x1xf32>
    %393 = arith.subf %391, %392 : vector<5x1xf32>
    %cst_188 = arith.constant 9.99999974E-6 : f32
    %394 = vector.broadcast %cst_188 : f32 to vector<5x1xf32>
    %395 = arith.addf %393, %394 : vector<5x1xf32>
    %396 = math.rsqrt %395 : vector<5x1xf32>
    %397 = vector.broadcast %389 : vector<5x1xf32> to vector<5x32xf32>
    %398 = arith.subf %373, %397 : vector<5x32xf32>
    %399 = vector.broadcast %396 : vector<5x1xf32> to vector<5x32xf32>
    %400 = arith.mulf %398, %399 : vector<5x32xf32>
    %401 = vector.broadcast %389 : vector<5x1xf32> to vector<5x32xf32>
    %402 = arith.subf %375, %401 : vector<5x32xf32>
    %403 = vector.broadcast %396 : vector<5x1xf32> to vector<5x32xf32>
    %404 = arith.mulf %402, %403 : vector<5x32xf32>
    %cst_189 = arith.constant dense<0.000000e+00> : vector<5x128xf32>
    %405 = tpu.matmul %400, %0, %cst_189 {dimension_numbers = #tpu.dot_dimension_numbers<[1], [0], [0], [1], [0, 0, 1, 1], [], []>} : vector<5x32xf32>, vector<32x128xf32>, vector<5x128xf32> -> vector<5x128xf32>
    %cst_190 = arith.constant dense<0.000000e+00> : vector<5x128xf32>
    %406 = tpu.matmul %404, %1, %cst_190 {dimension_numbers = #tpu.dot_dimension_numbers<[1], [0], [0], [1], [0, 0, 1, 1], [], []>} : vector<5x32xf32>, vector<32x128xf32>, vector<5x128xf32> -> vector<5x128xf32>
    %407 = arith.addf %405, %406 : vector<5x128xf32>
    %408 = vector.broadcast %2 : vector<1x128xf32> to vector<5x128xf32>
    %409 = arith.addf %407, %408 : vector<5x128xf32>
    %c9_191 = arith.constant 9 : index
    %c0_192 = arith.constant 0 : index
    %c0_193 = arith.constant 0 : index
    %410 = vector.load %arg4[%c9_191, %c0_192, %c0_193] : memref<16x5x128xf32, #tpu.memory_space<vmem>>, vector<1x5x128xf32>
    %411 = vector.shape_cast %410 : vector<1x5x128xf32> to vector<5x128xf32>
    %412 = vector.shape_cast %409 : vector<5x128xf32> to vector<1x5x128xf32>
    tpu.vector_store %arg4[%c9_191, %c0_192, %c0_193], %412 {strides = array<i32>} : memref<16x5x128xf32, #tpu.memory_space<vmem>>, vector<1x5x128xf32>,
    %c10 = arith.constant 10 : index
    %c0_194 = arith.constant 0 : index
    %c0_195 = arith.constant 0 : index
    %c0_196 = arith.constant 0 : index
    %413 = vector.load %arg1[%c10, %c0_194, %c0_195, %c0_196] : memref<16x2x5x32xf32, #tpu.memory_space<vmem>>, vector<1x1x5x32xf32>
    %414 = vector.shape_cast %413 : vector<1x1x5x32xf32> to vector<5x32xf32>
    %c10_197 = arith.constant 10 : index
    %c1_198 = arith.constant 1 : index
    %c0_199 = arith.constant 0 : index
    %c0_200 = arith.constant 0 : index
    %415 = vector.load %arg1[%c10_197, %c1_198, %c0_199, %c0_200] : memref<16x2x5x32xf32, #tpu.memory_space<vmem>>, vector<1x1x5x32xf32>
    %416 = vector.shape_cast %415 : vector<1x1x5x32xf32> to vector<5x32xf32>
    %cst_201 = arith.constant dense<0.000000e+00> : vector<5xf32>
    %417 = vector.multi_reduction <add>, %414, %cst_201 [1] : vector<5x32xf32> to vector<5xf32>
    %418 = vector.shape_cast %417 : vector<5xf32> to vector<5x1xf32>
    %cst_202 = arith.constant dense<0.000000e+00> : vector<5xf32>
    %419 = vector.multi_reduction <add>, %416, %cst_202 [1] : vector<5x32xf32> to vector<5xf32>
    %420 = vector.shape_cast %419 : vector<5xf32> to vector<5x1xf32>
    %421 = arith.addf %418, %420 : vector<5x1xf32>
    %422 = arith.mulf %414, %414 : vector<5x32xf32>
    %cst_203 = arith.constant dense<0.000000e+00> : vector<5xf32>
    %423 = vector.multi_reduction <add>, %422, %cst_203 [1] : vector<5x32xf32> to vector<5xf32>
    %424 = vector.shape_cast %423 : vector<5xf32> to vector<5x1xf32>
    %425 = arith.mulf %416, %416 : vector<5x32xf32>
    %cst_204 = arith.constant dense<0.000000e+00> : vector<5xf32>
    %426 = vector.multi_reduction <add>, %425, %cst_204 [1] : vector<5x32xf32> to vector<5xf32>
    %427 = vector.shape_cast %426 : vector<5xf32> to vector<5x1xf32>
    %428 = arith.addf %424, %427 : vector<5x1xf32>
    %cst_205 = arith.constant 1.562500e-02 : f32
    %429 = vector.broadcast %cst_205 : f32 to vector<5x1xf32>
    %430 = arith.mulf %421, %429 : vector<5x1xf32>
    %cst_206 = arith.constant 1.562500e-02 : f32
    %431 = vector.broadcast %cst_206 : f32 to vector<5x1xf32>
    %432 = arith.mulf %428, %431 : vector<5x1xf32>
    %433 = arith.mulf %430, %430 : vector<5x1xf32>
    %434 = arith.subf %432, %433 : vector<5x1xf32>
    %cst_207 = arith.constant 9.99999974E-6 : f32
    %435 = vector.broadcast %cst_207 : f32 to vector<5x1xf32>
    %436 = arith.addf %434, %435 : vector<5x1xf32>
    %437 = math.rsqrt %436 : vector<5x1xf32>
    %438 = vector.broadcast %430 : vector<5x1xf32> to vector<5x32xf32>
    %439 = arith.subf %414, %438 : vector<5x32xf32>
    %440 = vector.broadcast %437 : vector<5x1xf32> to vector<5x32xf32>
    %441 = arith.mulf %439, %440 : vector<5x32xf32>
    %442 = vector.broadcast %430 : vector<5x1xf32> to vector<5x32xf32>
    %443 = arith.subf %416, %442 : vector<5x32xf32>
    %444 = vector.broadcast %437 : vector<5x1xf32> to vector<5x32xf32>
    %445 = arith.mulf %443, %444 : vector<5x32xf32>
    %cst_208 = arith.constant dense<0.000000e+00> : vector<5x128xf32>
    %446 = tpu.matmul %441, %0, %cst_208 {dimension_numbers = #tpu.dot_dimension_numbers<[1], [0], [0], [1], [0, 0, 1, 1], [], []>} : vector<5x32xf32>, vector<32x128xf32>, vector<5x128xf32> -> vector<5x128xf32>
    %cst_209 = arith.constant dense<0.000000e+00> : vector<5x128xf32>
    %447 = tpu.matmul %445, %1, %cst_209 {dimension_numbers = #tpu.dot_dimension_numbers<[1], [0], [0], [1], [0, 0, 1, 1], [], []>} : vector<5x32xf32>, vector<32x128xf32>, vector<5x128xf32> -> vector<5x128xf32>
    %448 = arith.addf %446, %447 : vector<5x128xf32>
    %449 = vector.broadcast %2 : vector<1x128xf32> to vector<5x128xf32>
    %450 = arith.addf %448, %449 : vector<5x128xf32>
    %c10_210 = arith.constant 10 : index
    %c0_211 = arith.constant 0 : index
    %c0_212 = arith.constant 0 : index
    %451 = vector.load %arg4[%c10_210, %c0_211, %c0_212] : memref<16x5x128xf32, #tpu.memory_space<vmem>>, vector<1x5x128xf32>
    %452 = vector.shape_cast %451 : vector<1x5x128xf32> to vector<5x128xf32>
    %453 = vector.shape_cast %450 : vector<5x128xf32> to vector<1x5x128xf32>
    tpu.vector_store %arg4[%c10_210, %c0_211, %c0_212], %453 {strides = array<i32>} : memref<16x5x128xf32, #tpu.memory_space<vmem>>, vector<1x5x128xf32>,
    %c11 = arith.constant 11 : index
    %c0_213 = arith.constant 0 : index
    %c0_214 = arith.constant 0 : index
    %c0_215 = arith.constant 0 : index
    %454 = vector.load %arg1[%c11, %c0_213, %c0_214, %c0_215] : memref<16x2x5x32xf32, #tpu.memory_space<vmem>>, vector<1x1x5x32xf32>
    %455 = vector.shape_cast %454 : vector<1x1x5x32xf32> to vector<5x32xf32>
    %c11_216 = arith.constant 11 : index
    %c1_217 = arith.constant 1 : index
    %c0_218 = arith.constant 0 : index
    %c0_219 = arith.constant 0 : index
    %456 = vector.load %arg1[%c11_216, %c1_217, %c0_218, %c0_219] : memref<16x2x5x32xf32, #tpu.memory_space<vmem>>, vector<1x1x5x32xf32>
    %457 = vector.shape_cast %456 : vector<1x1x5x32xf32> to vector<5x32xf32>
    %cst_220 = arith.constant dense<0.000000e+00> : vector<5xf32>
    %458 = vector.multi_reduction <add>, %455, %cst_220 [1] : vector<5x32xf32> to vector<5xf32>
    %459 = vector.shape_cast %458 : vector<5xf32> to vector<5x1xf32>
    %cst_221 = arith.constant dense<0.000000e+00> : vector<5xf32>
    %460 = vector.multi_reduction <add>, %457, %cst_221 [1] : vector<5x32xf32> to vector<5xf32>
    %461 = vector.shape_cast %460 : vector<5xf32> to vector<5x1xf32>
    %462 = arith.addf %459, %461 : vector<5x1xf32>
    %463 = arith.mulf %455, %455 : vector<5x32xf32>
    %cst_222 = arith.constant dense<0.000000e+00> : vector<5xf32>
    %464 = vector.multi_reduction <add>, %463, %cst_222 [1] : vector<5x32xf32> to vector<5xf32>
    %465 = vector.shape_cast %464 : vector<5xf32> to vector<5x1xf32>
    %466 = arith.mulf %457, %457 : vector<5x32xf32>
    %cst_223 = arith.constant dense<0.000000e+00> : vector<5xf32>
    %467 = vector.multi_reduction <add>, %466, %cst_223 [1] : vector<5x32xf32> to vector<5xf32>
    %468 = vector.shape_cast %467 : vector<5xf32> to vector<5x1xf32>
    %469 = arith.addf %465, %468 : vector<5x1xf32>
    %cst_224 = arith.constant 1.562500e-02 : f32
    %470 = vector.broadcast %cst_224 : f32 to vector<5x1xf32>
    %471 = arith.mulf %462, %470 : vector<5x1xf32>
    %cst_225 = arith.constant 1.562500e-02 : f32
    %472 = vector.broadcast %cst_225 : f32 to vector<5x1xf32>
    %473 = arith.mulf %469, %472 : vector<5x1xf32>
    %474 = arith.mulf %471, %471 : vector<5x1xf32>
    %475 = arith.subf %473, %474 : vector<5x1xf32>
    %cst_226 = arith.constant 9.99999974E-6 : f32
    %476 = vector.broadcast %cst_226 : f32 to vector<5x1xf32>
    %477 = arith.addf %475, %476 : vector<5x1xf32>
    %478 = math.rsqrt %477 : vector<5x1xf32>
    %479 = vector.broadcast %471 : vector<5x1xf32> to vector<5x32xf32>
    %480 = arith.subf %455, %479 : vector<5x32xf32>
    %481 = vector.broadcast %478 : vector<5x1xf32> to vector<5x32xf32>
    %482 = arith.mulf %480, %481 : vector<5x32xf32>
    %483 = vector.broadcast %471 : vector<5x1xf32> to vector<5x32xf32>
    %484 = arith.subf %457, %483 : vector<5x32xf32>
    %485 = vector.broadcast %478 : vector<5x1xf32> to vector<5x32xf32>
    %486 = arith.mulf %484, %485 : vector<5x32xf32>
    %cst_227 = arith.constant dense<0.000000e+00> : vector<5x128xf32>
    %487 = tpu.matmul %482, %0, %cst_227 {dimension_numbers = #tpu.dot_dimension_numbers<[1], [0], [0], [1], [0, 0, 1, 1], [], []>} : vector<5x32xf32>, vector<32x128xf32>, vector<5x128xf32> -> vector<5x128xf32>
    %cst_228 = arith.constant dense<0.000000e+00> : vector<5x128xf32>
    %488 = tpu.matmul %486, %1, %cst_228 {dimension_numbers = #tpu.dot_dimension_numbers<[1], [0], [0], [1], [0, 0, 1, 1], [], []>} : vector<5x32xf32>, vector<32x128xf32>, vector<5x128xf32> -> vector<5x128xf32>
    %489 = arith.addf %487, %488 : vector<5x128xf32>
    %490 = vector.broadcast %2 : vector<1x128xf32> to vector<5x128xf32>
    %491 = arith.addf %489, %490 : vector<5x128xf32>
    %c11_229 = arith.constant 11 : index
    %c0_230 = arith.constant 0 : index
    %c0_231 = arith.constant 0 : index
    %492 = vector.load %arg4[%c11_229, %c0_230, %c0_231] : memref<16x5x128xf32, #tpu.memory_space<vmem>>, vector<1x5x128xf32>
    %493 = vector.shape_cast %492 : vector<1x5x128xf32> to vector<5x128xf32>
    %494 = vector.shape_cast %491 : vector<5x128xf32> to vector<1x5x128xf32>
    tpu.vector_store %arg4[%c11_229, %c0_230, %c0_231], %494 {strides = array<i32>} : memref<16x5x128xf32, #tpu.memory_space<vmem>>, vector<1x5x128xf32>,
    %c12 = arith.constant 12 : index
    %c0_232 = arith.constant 0 : index
    %c0_233 = arith.constant 0 : index
    %c0_234 = arith.constant 0 : index
    %495 = vector.load %arg1[%c12, %c0_232, %c0_233, %c0_234] : memref<16x2x5x32xf32, #tpu.memory_space<vmem>>, vector<1x1x5x32xf32>
    %496 = vector.shape_cast %495 : vector<1x1x5x32xf32> to vector<5x32xf32>
    %c12_235 = arith.constant 12 : index
    %c1_236 = arith.constant 1 : index
    %c0_237 = arith.constant 0 : index
    %c0_238 = arith.constant 0 : index
    %497 = vector.load %arg1[%c12_235, %c1_236, %c0_237, %c0_238] : memref<16x2x5x32xf32, #tpu.memory_space<vmem>>, vector<1x1x5x32xf32>
    %498 = vector.shape_cast %497 : vector<1x1x5x32xf32> to vector<5x32xf32>
    %cst_239 = arith.constant dense<0.000000e+00> : vector<5xf32>
    %499 = vector.multi_reduction <add>, %496, %cst_239 [1] : vector<5x32xf32> to vector<5xf32>
    %500 = vector.shape_cast %499 : vector<5xf32> to vector<5x1xf32>
    %cst_240 = arith.constant dense<0.000000e+00> : vector<5xf32>
    %501 = vector.multi_reduction <add>, %498, %cst_240 [1] : vector<5x32xf32> to vector<5xf32>
    %502 = vector.shape_cast %501 : vector<5xf32> to vector<5x1xf32>
    %503 = arith.addf %500, %502 : vector<5x1xf32>
    %504 = arith.mulf %496, %496 : vector<5x32xf32>
    %cst_241 = arith.constant dense<0.000000e+00> : vector<5xf32>
    %505 = vector.multi_reduction <add>, %504, %cst_241 [1] : vector<5x32xf32> to vector<5xf32>
    %506 = vector.shape_cast %505 : vector<5xf32> to vector<5x1xf32>
    %507 = arith.mulf %498, %498 : vector<5x32xf32>
    %cst_242 = arith.constant dense<0.000000e+00> : vector<5xf32>
    %508 = vector.multi_reduction <add>, %507, %cst_242 [1] : vector<5x32xf32> to vector<5xf32>
    %509 = vector.shape_cast %508 : vector<5xf32> to vector<5x1xf32>
    %510 = arith.addf %506, %509 : vector<5x1xf32>
    %cst_243 = arith.constant 1.562500e-02 : f32
    %511 = vector.broadcast %cst_243 : f32 to vector<5x1xf32>
    %512 = arith.mulf %503, %511 : vector<5x1xf32>
    %cst_244 = arith.constant 1.562500e-02 : f32
    %513 = vector.broadcast %cst_244 : f32 to vector<5x1xf32>
    %514 = arith.mulf %510, %513 : vector<5x1xf32>
    %515 = arith.mulf %512, %512 : vector<5x1xf32>
    %516 = arith.subf %514, %515 : vector<5x1xf32>
    %cst_245 = arith.constant 9.99999974E-6 : f32
    %517 = vector.broadcast %cst_245 : f32 to vector<5x1xf32>
    %518 = arith.addf %516, %517 : vector<5x1xf32>
    %519 = math.rsqrt %518 : vector<5x1xf32>
    %520 = vector.broadcast %512 : vector<5x1xf32> to vector<5x32xf32>
    %521 = arith.subf %496, %520 : vector<5x32xf32>
    %522 = vector.broadcast %519 : vector<5x1xf32> to vector<5x32xf32>
    %523 = arith.mulf %521, %522 : vector<5x32xf32>
    %524 = vector.broadcast %512 : vector<5x1xf32> to vector<5x32xf32>
    %525 = arith.subf %498, %524 : vector<5x32xf32>
    %526 = vector.broadcast %519 : vector<5x1xf32> to vector<5x32xf32>
    %527 = arith.mulf %525, %526 : vector<5x32xf32>
    %cst_246 = arith.constant dense<0.000000e+00> : vector<5x128xf32>
    %528 = tpu.matmul %523, %0, %cst_246 {dimension_numbers = #tpu.dot_dimension_numbers<[1], [0], [0], [1], [0, 0, 1, 1], [], []>} : vector<5x32xf32>, vector<32x128xf32>, vector<5x128xf32> -> vector<5x128xf32>
    %cst_247 = arith.constant dense<0.000000e+00> : vector<5x128xf32>
    %529 = tpu.matmul %527, %1, %cst_247 {dimension_numbers = #tpu.dot_dimension_numbers<[1], [0], [0], [1], [0, 0, 1, 1], [], []>} : vector<5x32xf32>, vector<32x128xf32>, vector<5x128xf32> -> vector<5x128xf32>
    %530 = arith.addf %528, %529 : vector<5x128xf32>
    %531 = vector.broadcast %2 : vector<1x128xf32> to vector<5x128xf32>
    %532 = arith.addf %530, %531 : vector<5x128xf32>
    %c12_248 = arith.constant 12 : index
    %c0_249 = arith.constant 0 : index
    %c0_250 = arith.constant 0 : index
    %533 = vector.load %arg4[%c12_248, %c0_249, %c0_250] : memref<16x5x128xf32, #tpu.memory_space<vmem>>, vector<1x5x128xf32>
    %534 = vector.shape_cast %533 : vector<1x5x128xf32> to vector<5x128xf32>
    %535 = vector.shape_cast %532 : vector<5x128xf32> to vector<1x5x128xf32>
    tpu.vector_store %arg4[%c12_248, %c0_249, %c0_250], %535 {strides = array<i32>} : memref<16x5x128xf32, #tpu.memory_space<vmem>>, vector<1x5x128xf32>,
    %c13 = arith.constant 13 : index
    %c0_251 = arith.constant 0 : index
    %c0_252 = arith.constant 0 : index
    %c0_253 = arith.constant 0 : index
    %536 = vector.load %arg1[%c13, %c0_251, %c0_252, %c0_253] : memref<16x2x5x32xf32, #tpu.memory_space<vmem>>, vector<1x1x5x32xf32>
    %537 = vector.shape_cast %536 : vector<1x1x5x32xf32> to vector<5x32xf32>
    %c13_254 = arith.constant 13 : index
    %c1_255 = arith.constant 1 : index
    %c0_256 = arith.constant 0 : index
    %c0_257 = arith.constant 0 : index
    %538 = vector.load %arg1[%c13_254, %c1_255, %c0_256, %c0_257] : memref<16x2x5x32xf32, #tpu.memory_space<vmem>>, vector<1x1x5x32xf32>
    %539 = vector.shape_cast %538 : vector<1x1x5x32xf32> to vector<5x32xf32>
    %cst_258 = arith.constant dense<0.000000e+00> : vector<5xf32>
    %540 = vector.multi_reduction <add>, %537, %cst_258 [1] : vector<5x32xf32> to vector<5xf32>
    %541 = vector.shape_cast %540 : vector<5xf32> to vector<5x1xf32>
    %cst_259 = arith.constant dense<0.000000e+00> : vector<5xf32>
    %542 = vector.multi_reduction <add>, %539, %cst_259 [1] : vector<5x32xf32> to vector<5xf32>
    %543 = vector.shape_cast %542 : vector<5xf32> to vector<5x1xf32>
    %544 = arith.addf %541, %543 : vector<5x1xf32>
    %545 = arith.mulf %537, %537 : vector<5x32xf32>
    %cst_260 = arith.constant dense<0.000000e+00> : vector<5xf32>
    %546 = vector.multi_reduction <add>, %545, %cst_260 [1] : vector<5x32xf32> to vector<5xf32>
    %547 = vector.shape_cast %546 : vector<5xf32> to vector<5x1xf32>
    %548 = arith.mulf %539, %539 : vector<5x32xf32>
    %cst_261 = arith.constant dense<0.000000e+00> : vector<5xf32>
    %549 = vector.multi_reduction <add>, %548, %cst_261 [1] : vector<5x32xf32> to vector<5xf32>
    %550 = vector.shape_cast %549 : vector<5xf32> to vector<5x1xf32>
    %551 = arith.addf %547, %550 : vector<5x1xf32>
    %cst_262 = arith.constant 1.562500e-02 : f32
    %552 = vector.broadcast %cst_262 : f32 to vector<5x1xf32>
    %553 = arith.mulf %544, %552 : vector<5x1xf32>
    %cst_263 = arith.constant 1.562500e-02 : f32
    %554 = vector.broadcast %cst_263 : f32 to vector<5x1xf32>
    %555 = arith.mulf %551, %554 : vector<5x1xf32>
    %556 = arith.mulf %553, %553 : vector<5x1xf32>
    %557 = arith.subf %555, %556 : vector<5x1xf32>
    %cst_264 = arith.constant 9.99999974E-6 : f32
    %558 = vector.broadcast %cst_264 : f32 to vector<5x1xf32>
    %559 = arith.addf %557, %558 : vector<5x1xf32>
    %560 = math.rsqrt %559 : vector<5x1xf32>
    %561 = vector.broadcast %553 : vector<5x1xf32> to vector<5x32xf32>
    %562 = arith.subf %537, %561 : vector<5x32xf32>
    %563 = vector.broadcast %560 : vector<5x1xf32> to vector<5x32xf32>
    %564 = arith.mulf %562, %563 : vector<5x32xf32>
    %565 = vector.broadcast %553 : vector<5x1xf32> to vector<5x32xf32>
    %566 = arith.subf %539, %565 : vector<5x32xf32>
    %567 = vector.broadcast %560 : vector<5x1xf32> to vector<5x32xf32>
    %568 = arith.mulf %566, %567 : vector<5x32xf32>
    %cst_265 = arith.constant dense<0.000000e+00> : vector<5x128xf32>
    %569 = tpu.matmul %564, %0, %cst_265 {dimension_numbers = #tpu.dot_dimension_numbers<[1], [0], [0], [1], [0, 0, 1, 1], [], []>} : vector<5x32xf32>, vector<32x128xf32>, vector<5x128xf32> -> vector<5x128xf32>
    %cst_266 = arith.constant dense<0.000000e+00> : vector<5x128xf32>
    %570 = tpu.matmul %568, %1, %cst_266 {dimension_numbers = #tpu.dot_dimension_numbers<[1], [0], [0], [1], [0, 0, 1, 1], [], []>} : vector<5x32xf32>, vector<32x128xf32>, vector<5x128xf32> -> vector<5x128xf32>
    %571 = arith.addf %569, %570 : vector<5x128xf32>
    %572 = vector.broadcast %2 : vector<1x128xf32> to vector<5x128xf32>
    %573 = arith.addf %571, %572 : vector<5x128xf32>
    %c13_267 = arith.constant 13 : index
    %c0_268 = arith.constant 0 : index
    %c0_269 = arith.constant 0 : index
    %574 = vector.load %arg4[%c13_267, %c0_268, %c0_269] : memref<16x5x128xf32, #tpu.memory_space<vmem>>, vector<1x5x128xf32>
    %575 = vector.shape_cast %574 : vector<1x5x128xf32> to vector<5x128xf32>
    %576 = vector.shape_cast %573 : vector<5x128xf32> to vector<1x5x128xf32>
    tpu.vector_store %arg4[%c13_267, %c0_268, %c0_269], %576 {strides = array<i32>} : memref<16x5x128xf32, #tpu.memory_space<vmem>>, vector<1x5x128xf32>,
    %c14 = arith.constant 14 : index
    %c0_270 = arith.constant 0 : index
    %c0_271 = arith.constant 0 : index
    %c0_272 = arith.constant 0 : index
    %577 = vector.load %arg1[%c14, %c0_270, %c0_271, %c0_272] : memref<16x2x5x32xf32, #tpu.memory_space<vmem>>, vector<1x1x5x32xf32>
    %578 = vector.shape_cast %577 : vector<1x1x5x32xf32> to vector<5x32xf32>
    %c14_273 = arith.constant 14 : index
    %c1_274 = arith.constant 1 : index
    %c0_275 = arith.constant 0 : index
    %c0_276 = arith.constant 0 : index
    %579 = vector.load %arg1[%c14_273, %c1_274, %c0_275, %c0_276] : memref<16x2x5x32xf32, #tpu.memory_space<vmem>>, vector<1x1x5x32xf32>
    %580 = vector.shape_cast %579 : vector<1x1x5x32xf32> to vector<5x32xf32>
    %cst_277 = arith.constant dense<0.000000e+00> : vector<5xf32>
    %581 = vector.multi_reduction <add>, %578, %cst_277 [1] : vector<5x32xf32> to vector<5xf32>
    %582 = vector.shape_cast %581 : vector<5xf32> to vector<5x1xf32>
    %cst_278 = arith.constant dense<0.000000e+00> : vector<5xf32>
    %583 = vector.multi_reduction <add>, %580, %cst_278 [1] : vector<5x32xf32> to vector<5xf32>
    %584 = vector.shape_cast %583 : vector<5xf32> to vector<5x1xf32>
    %585 = arith.addf %582, %584 : vector<5x1xf32>
    %586 = arith.mulf %578, %578 : vector<5x32xf32>
    %cst_279 = arith.constant dense<0.000000e+00> : vector<5xf32>
    %587 = vector.multi_reduction <add>, %586, %cst_279 [1] : vector<5x32xf32> to vector<5xf32>
    %588 = vector.shape_cast %587 : vector<5xf32> to vector<5x1xf32>
    %589 = arith.mulf %580, %580 : vector<5x32xf32>
    %cst_280 = arith.constant dense<0.000000e+00> : vector<5xf32>
    %590 = vector.multi_reduction <add>, %589, %cst_280 [1] : vector<5x32xf32> to vector<5xf32>
    %591 = vector.shape_cast %590 : vector<5xf32> to vector<5x1xf32>
    %592 = arith.addf %588, %591 : vector<5x1xf32>
    %cst_281 = arith.constant 1.562500e-02 : f32
    %593 = vector.broadcast %cst_281 : f32 to vector<5x1xf32>
    %594 = arith.mulf %585, %593 : vector<5x1xf32>
    %cst_282 = arith.constant 1.562500e-02 : f32
    %595 = vector.broadcast %cst_282 : f32 to vector<5x1xf32>
    %596 = arith.mulf %592, %595 : vector<5x1xf32>
    %597 = arith.mulf %594, %594 : vector<5x1xf32>
    %598 = arith.subf %596, %597 : vector<5x1xf32>
    %cst_283 = arith.constant 9.99999974E-6 : f32
    %599 = vector.broadcast %cst_283 : f32 to vector<5x1xf32>
    %600 = arith.addf %598, %599 : vector<5x1xf32>
    %601 = math.rsqrt %600 : vector<5x1xf32>
    %602 = vector.broadcast %594 : vector<5x1xf32> to vector<5x32xf32>
    %603 = arith.subf %578, %602 : vector<5x32xf32>
    %604 = vector.broadcast %601 : vector<5x1xf32> to vector<5x32xf32>
    %605 = arith.mulf %603, %604 : vector<5x32xf32>
    %606 = vector.broadcast %594 : vector<5x1xf32> to vector<5x32xf32>
    %607 = arith.subf %580, %606 : vector<5x32xf32>
    %608 = vector.broadcast %601 : vector<5x1xf32> to vector<5x32xf32>
    %609 = arith.mulf %607, %608 : vector<5x32xf32>
    %cst_284 = arith.constant dense<0.000000e+00> : vector<5x128xf32>
    %610 = tpu.matmul %605, %0, %cst_284 {dimension_numbers = #tpu.dot_dimension_numbers<[1], [0], [0], [1], [0, 0, 1, 1], [], []>} : vector<5x32xf32>, vector<32x128xf32>, vector<5x128xf32> -> vector<5x128xf32>
    %cst_285 = arith.constant dense<0.000000e+00> : vector<5x128xf32>
    %611 = tpu.matmul %609, %1, %cst_285 {dimension_numbers = #tpu.dot_dimension_numbers<[1], [0], [0], [1], [0, 0, 1, 1], [], []>} : vector<5x32xf32>, vector<32x128xf32>, vector<5x128xf32> -> vector<5x128xf32>
    %612 = arith.addf %610, %611 : vector<5x128xf32>
    %613 = vector.broadcast %2 : vector<1x128xf32> to vector<5x128xf32>
    %614 = arith.addf %612, %613 : vector<5x128xf32>
    %c14_286 = arith.constant 14 : index
    %c0_287 = arith.constant 0 : index
    %c0_288 = arith.constant 0 : index
    %615 = vector.load %arg4[%c14_286, %c0_287, %c0_288] : memref<16x5x128xf32, #tpu.memory_space<vmem>>, vector<1x5x128xf32>
    %616 = vector.shape_cast %615 : vector<1x5x128xf32> to vector<5x128xf32>
    %617 = vector.shape_cast %614 : vector<5x128xf32> to vector<1x5x128xf32>
    tpu.vector_store %arg4[%c14_286, %c0_287, %c0_288], %617 {strides = array<i32>} : memref<16x5x128xf32, #tpu.memory_space<vmem>>, vector<1x5x128xf32>,
    %c15 = arith.constant 15 : index
    %c0_289 = arith.constant 0 : index
    %c0_290 = arith.constant 0 : index
    %c0_291 = arith.constant 0 : index
    %618 = vector.load %arg1[%c15, %c0_289, %c0_290, %c0_291] : memref<16x2x5x32xf32, #tpu.memory_space<vmem>>, vector<1x1x5x32xf32>
    %619 = vector.shape_cast %618 : vector<1x1x5x32xf32> to vector<5x32xf32>
    %c15_292 = arith.constant 15 : index
    %c1_293 = arith.constant 1 : index
    %c0_294 = arith.constant 0 : index
    %c0_295 = arith.constant 0 : index
    %620 = vector.load %arg1[%c15_292, %c1_293, %c0_294, %c0_295] : memref<16x2x5x32xf32, #tpu.memory_space<vmem>>, vector<1x1x5x32xf32>
    %621 = vector.shape_cast %620 : vector<1x1x5x32xf32> to vector<5x32xf32>
    %cst_296 = arith.constant dense<0.000000e+00> : vector<5xf32>
    %622 = vector.multi_reduction <add>, %619, %cst_296 [1] : vector<5x32xf32> to vector<5xf32>
    %623 = vector.shape_cast %622 : vector<5xf32> to vector<5x1xf32>
    %cst_297 = arith.constant dense<0.000000e+00> : vector<5xf32>
    %624 = vector.multi_reduction <add>, %621, %cst_297 [1] : vector<5x32xf32> to vector<5xf32>
    %625 = vector.shape_cast %624 : vector<5xf32> to vector<5x1xf32>
    %626 = arith.addf %623, %625 : vector<5x1xf32>
    %627 = arith.mulf %619, %619 : vector<5x32xf32>
    %cst_298 = arith.constant dense<0.000000e+00> : vector<5xf32>
    %628 = vector.multi_reduction <add>, %627, %cst_298 [1] : vector<5x32xf32> to vector<5xf32>
    %629 = vector.shape_cast %628 : vector<5xf32> to vector<5x1xf32>
    %630 = arith.mulf %621, %621 : vector<5x32xf32>
    %cst_299 = arith.constant dense<0.000000e+00> : vector<5xf32>
    %631 = vector.multi_reduction <add>, %630, %cst_299 [1] : vector<5x32xf32> to vector<5xf32>
    %632 = vector.shape_cast %631 : vector<5xf32> to vector<5x1xf32>
    %633 = arith.addf %629, %632 : vector<5x1xf32>
    %cst_300 = arith.constant 1.562500e-02 : f32
    %634 = vector.broadcast %cst_300 : f32 to vector<5x1xf32>
    %635 = arith.mulf %626, %634 : vector<5x1xf32>
    %cst_301 = arith.constant 1.562500e-02 : f32
    %636 = vector.broadcast %cst_301 : f32 to vector<5x1xf32>
    %637 = arith.mulf %633, %636 : vector<5x1xf32>
    %638 = arith.mulf %635, %635 : vector<5x1xf32>
    %639 = arith.subf %637, %638 : vector<5x1xf32>
    %cst_302 = arith.constant 9.99999974E-6 : f32
    %640 = vector.broadcast %cst_302 : f32 to vector<5x1xf32>
    %641 = arith.addf %639, %640 : vector<5x1xf32>
    %642 = math.rsqrt %641 : vector<5x1xf32>
    %643 = vector.broadcast %635 : vector<5x1xf32> to vector<5x32xf32>
    %644 = arith.subf %619, %643 : vector<5x32xf32>
    %645 = vector.broadcast %642 : vector<5x1xf32> to vector<5x32xf32>
    %646 = arith.mulf %644, %645 : vector<5x32xf32>
    %647 = vector.broadcast %635 : vector<5x1xf32> to vector<5x32xf32>
    %648 = arith.subf %621, %647 : vector<5x32xf32>
    %649 = vector.broadcast %642 : vector<5x1xf32> to vector<5x32xf32>
    %650 = arith.mulf %648, %649 : vector<5x32xf32>
    %cst_303 = arith.constant dense<0.000000e+00> : vector<5x128xf32>
    %651 = tpu.matmul %646, %0, %cst_303 {dimension_numbers = #tpu.dot_dimension_numbers<[1], [0], [0], [1], [0, 0, 1, 1], [], []>} : vector<5x32xf32>, vector<32x128xf32>, vector<5x128xf32> -> vector<5x128xf32>
    %cst_304 = arith.constant dense<0.000000e+00> : vector<5x128xf32>
    %652 = tpu.matmul %650, %1, %cst_304 {dimension_numbers = #tpu.dot_dimension_numbers<[1], [0], [0], [1], [0, 0, 1, 1], [], []>} : vector<5x32xf32>, vector<32x128xf32>, vector<5x128xf32> -> vector<5x128xf32>
    %653 = arith.addf %651, %652 : vector<5x128xf32>
    %654 = vector.broadcast %2 : vector<1x128xf32> to vector<5x128xf32>
    %655 = arith.addf %653, %654 : vector<5x128xf32>
    %c15_305 = arith.constant 15 : index
    %c0_306 = arith.constant 0 : index
    %c0_307 = arith.constant 0 : index
    %656 = vector.load %arg4[%c15_305, %c0_306, %c0_307] : memref<16x5x128xf32, #tpu.memory_space<vmem>>, vector<1x5x128xf32>
    %657 = vector.shape_cast %656 : vector<1x5x128xf32> to vector<5x128xf32>
    %658 = vector.shape_cast %655 : vector<5x128xf32> to vector<1x5x128xf32>
    tpu.vector_store %arg4[%c15_305, %c0_306, %c0_307], %658 {strides = array<i32>} : memref<16x5x128xf32, #tpu.memory_space<vmem>>, vector<1x5x128xf32>,
    return
  }
  func.func @transform_0(%arg0: i32) -> (i32, i32, i32, i32) {
    %c0_i32 = arith.constant 0 : i32
    %c0_i32_0 = arith.constant 0 : i32
    %c0_i32_1 = arith.constant 0 : i32
    %c0_i32_2 = arith.constant 0 : i32
    return %arg0, %c0_i32, %c0_i32_0, %c0_i32_1 : i32, i32, i32, i32
  }
  func.func @transform_1(%arg0: i32) -> (i32, i32) {
    %c0_i32 = arith.constant 0 : i32
    %c0_i32_0 = arith.constant 0 : i32
    %c0_i32_1 = arith.constant 0 : i32
    return %c0_i32, %c0_i32_0 : i32, i32
  }
  func.func @transform_2(%arg0: i32) -> (i32, i32) {
    %c0_i32 = arith.constant 0 : i32
    %c0_i32_0 = arith.constant 0 : i32
    %c0_i32_1 = arith.constant 0 : i32
    return %c0_i32, %c0_i32_0 : i32, i32
  }
  func.func @transform_3(%arg0: i32) -> (i32, i32, i32) {
    %c0_i32 = arith.constant 0 : i32
    %c0_i32_0 = arith.constant 0 : i32
    %c0_i32_1 = arith.constant 0 : i32
    return %arg0, %c0_i32, %c0_i32_0 : i32, i32, i32
  }
}

</mosaic_0001>

<llo_original>
// kernel: downsample_forward.1
$region0: #{downsample_forward.1}
  #allocation0 [shape = 'u32[]', space=smem, size = 0x4, offset = 0x4, fixed_abs, tag = 'smem constant byte address 0x4 - core index']
  #allocation1 [shape = 'u32[144,128]{1,0:T(1,128)}', space=vmem, size = 0x12000, scoped, tag = 'internal scratch']
  %s0 = inlined_call_operand.hbm [shape: f32[16,2,5,32], index: 0, kind: input, shape index: {}]
  %s1 = inlined_call_operand.hbm [shape: f32[64,128], index: 1, kind: input, shape index: {}]
  %s2 = inlined_call_operand.hbm [shape: f32[1,128], index: 2, kind: input, shape index: {}]
  %s3 = inlined_call_operand.hbm [shape: f32[16,5,128], index: 3, kind: output, shape index: {}]
  %s4 = sld [smem:[#allocation0]]
  $region34: #{downsample_forward.1} parent=0
    _
  %s6 = ssub.s32 1, %s4
  %s7 = scalar_select 0, %s6, %s4
  $region1: #{downsample_forward.1} parent=0
    #allocation2 [shape = 'u8[131072]{0}', space=vmem, size = 0x20000, scoped, tag = 'input window, operand 0, single buffered']
    #allocation3 [shape = 's32[1]{0}', space=sflag, size = 0x4, scoped, tag = 'scoped memory for downsample_forward.1']
    #allocation4 [shape = 's32[1]{0}', space=sflag, size = 0x4, scoped, tag = 'scoped memory for downsample_forward.1']
    #allocation5 [shape = 'u8[32768]{0}', space=vmem, size = 0x8000, scoped, tag = 'input window, operand 1, single buffered']
    #allocation6 [shape = 's32[1]{0}', space=sflag, size = 0x4, scoped, tag = 'scoped memory for downsample_forward.1']
    #allocation7 [shape = 'u8[512]{0}', space=vmem, size = 0x400, scoped, tag = 'input window, operand 2, single buffered']
    #allocation8 [shape = 'u8[65536]{0}', space=vmem, size = 0x10000, scoped, tag = 'output window, operand 0, single buffered']
    %8 = vsyncpa [#allocation3], 0
    %9 = vsyncpa [#allocation6], 0
    %10 = vsyncpa [#allocation4], 0
    // Predicated region
    $region2: #{downsample_forward.1} parent=1 // pred_check
      _
    $region3: #{downsample_forward.1} parent=1 // pred_check_branch
      %12 = sbr.rel (0) target = $region5
    $region4: #{downsample_forward.1} parent=1 // pred_region
      %s14 = ssub.s32 4096, 4096
      %15 = vsyncadd [#allocation3], %s14
      %s16 = sshll.u32 [#allocation2], 4
      %s17 = int_to_ptr.vmem [resolvable:$true] %s16
      %22 = dma.hbm_to_vmem [thread:$0]  %s0, 4096, %s17, [#allocation3], 128, 128, 8
    $region5: #{downsample_forward.1} parent=1 // pred_fallthru
      _
    // Predicated region
    $region6: #{downsample_forward.1} parent=1 // pred_check
      _
    $region7: #{downsample_forward.1} parent=1 // pred_check_branch
      %24 = sbr.rel (0) target = $region9
    $region8: #{downsample_forward.1} parent=1 // pred_region
      %s26 = ssub.s32 1024, 1024
      %27 = vsyncadd [#allocation6], %s26
      %s28 = sshll.u32 [#allocation5], 4
      %s29 = int_to_ptr.vmem [resolvable:$true] %s28
      %34 = dma.hbm_to_vmem [thread:$0]  %s1, 1024, %s29, [#allocation6], 128, 128, 8
    $region9: #{downsample_forward.1} parent=1 // pred_fallthru
      _
    // Predicated region
    $region10: #{downsample_forward.1} parent=1 // pred_check
      _
    $region11: #{downsample_forward.1} parent=1 // pred_check_branch
      %36 = sbr.rel (0) target = $region13
    $region12: #{downsample_forward.1} parent=1 // pred_region
      %s38 = ssub.s32 16, 16
      %39 = vsyncadd [#allocation6], %s38
      %s41 = sshll.u32 [#allocation7], 4
      %s42 = int_to_ptr.vmem [resolvable:$true] %s41
      %44 = dma.hbm_to_vmem [thread:$0]  %s2, 16, %s42, [#allocation6]
    $region13: #{downsample_forward.1} parent=1 // pred_fallthru
      _
    // Predicated region
    $region14: #{downsample_forward.1} parent=1 // pred_check
      _
    $region15: #{downsample_forward.1} parent=1 // pred_check_branch
      %46 = sbr.rel (0) target = $region17
    $region16: #{downsample_forward.1} parent=1 // pred_region
      %47 = dma.done [#allocation3], 4096
    $region17: #{downsample_forward.1} parent=1 // pred_fallthru
      _
    // Predicated region
    $region18: #{downsample_forward.1} parent=1 // pred_check
      _
    $region19: #{downsample_forward.1} parent=1 // pred_check_branch
      %49 = sbr.rel (0) target = $region21
    $region20: #{downsample_forward.1} parent=1 // pred_region
      %50 = dma.done [#allocation6], 1024
    $region21: #{downsample_forward.1} parent=1 // pred_fallthru
      _
    // Predicated region
    $region22: #{downsample_forward.1} parent=1 // pred_check
      _
    $region23: #{downsample_forward.1} parent=1 // pred_check_branch
      %52 = sbr.rel (0) target = $region25
    $region24: #{downsample_forward.1} parent=1 // pred_region
      %53 = dma.done [#allocation6], 16
    $region25: #{downsample_forward.1} parent=1 // pred_fallthru
      _
    %v54 = vld [vmem:[#allocation5] sm:$0xff]
    %v55 = vld [vmem:[#allocation5 + $0x8] sm:$0xff]
    %v56 = vld [vmem:[#allocation5 + $0x10] sm:$0xff]
    %v57 = vld [vmem:[#allocation5 + $0x18] sm:$0xff]
    %v58 = vld [vmem:[#allocation5 + $0x20] sm:$0xff]
    %v59 = vld [vmem:[#allocation5 + $0x28] sm:$0xff]
    %v60 = vld [vmem:[#allocation5 + $0x30] sm:$0xff]
    %v61 = vld [vmem:[#allocation5 + $0x38] sm:$0xff]
    %v62 = vld [vmem:[#allocation7] sm:$0x1]
    %v63 = vld [vmem:[#allocation2] sm:$0x1f]
    %s64 = scalar_lea.vmem [#allocation2], 8
    %v65 = vld [vmem:[%s64] sm:$0x1f]
    %vm66 = vcmask 258048
    %v67 = vsel %vm66, %v63, 0.0
    %68 = vadd.xlane.f32.xlu0 %v67
    %v69 = vpop.xlane.xlu0 %68
    %v70 = vsel %vm66, %v65, 0.0
    %71 = vadd.xlane.f32.xlu0 %v70
    %v72 = vpop.xlane.xlu0 %71
    %v73 = vadd.f32 %v69, %v72
    %v74 = vmul.f32 %v63, %v63
    %v75 = vsel %vm66, %v74, 0.0
    %76 = vadd.xlane.f32.xlu0 %v75
    %v77 = vpop.xlane.xlu0 %76
    %v78 = vmul.f32 %v65, %v65
    %v79 = vsel %vm66, %v78, 0.0
    %80 = vadd.xlane.f32.xlu0 %v79
    %v81 = vpop.xlane.xlu0 %80
    %v82 = vadd.f32 %v77, %v81
    %v83 = vmul.f32 %v73, 0.015625
    %v84 = vmul.f32 %v82, 0.015625
    %v85 = vmul.f32 %v83, %v83
    %v86 = vsub.f32 %v84, %v85
    %v87 = vadd.f32 %v86, 1e-05
    %v88 = vrsqrt.pop %v87
    %v89 = vsub.f32 %v63, %v83
    %v90 = vmul.f32 %v89, %v88
    %v91 = vsub.f32 %v65, %v83
    %v92 = vmul.f32 %v91, %v88
    %vm93 = vcmask 261120
    %v95 = vsel %vm93, %v92, 0
    %97 = vmatprep.subr.mxu0 0.0
    %98 = vmatpush1.msra.mxu0 %v58
    %99 = vmatprep.subr.mxu0 0.0
    %100 = vmatpush1.msra.mxu0 %v59
    %101 = vmatprep.subr.mxu0 0.0
    %102 = vmatpush1.msra.mxu0 %v60
    %103 = vmatprep.subr.mxu0 0.0
    %104 = vmatpush1.msra.mxu0 %v61
    %105 = vmatprep.subr.mxu0 0.0
    %106 = vmatpush1.msra.mxu0 0.0
    %107 = vmatprep.subr.mxu0 0.0
    %108 = vmatpush1.msra.mxu0 0.0
    %109 = vmatprep.subr.mxu0 0.0
    %110 = vmatpush1.msra.mxu0 0.0
    %111 = vmatprep.subr.mxu0 0.0
    %112 = vmatpush1.msra.mxu0 0.0
    %113 = vmatprep.subr.mxu0 0.0
    %114 = vmatpush1.msra.mxu0 0.0
    %115 = vmatprep.subr.mxu0 0.0
    %116 = vmatpush1.msra.mxu0 0.0
    %117 = vmatprep.subr.mxu0 0.0
    %118 = vmatpush1.msra.mxu0 0.0
    %119 = vmatprep.subr.mxu0 0.0
    %120 = vmatpush1.msra.mxu0 0.0
    %121 = vmatprep.subr.mxu0 0.0
    %122 = vmatpush1.msra.mxu0 0.0
    %123 = vmatprep.subr.mxu0 0.0
    %124 = vmatpush1.msra.mxu0 0.0
    %125 = vmatprep.subr.mxu0 0.0
    %126 = vmatpush1.msra.mxu0 0.0
    %127 = vmatprep.subr.mxu0 0.0
    %128 = vmatpush1.msra.mxu0 0.0
    %129 = vmatprep.subr.mxu0 0.0
    %130 = vmatpush1.msra.mxu0 0.0
    %131 = vmatprep.subr.mxu0 0.0
    %132 = vmatpush1.msra.mxu0 0.0
    %133 = vmatprep.subr.mxu0 0.0
    %134 = vmatpush1.msra.mxu0 0.0
    %135 = vmatprep.subr.mxu0 0.0
    %136 = vmatpush1.msra.mxu0 0.0
    %137 = vmatprep.subr.mxu0 0.0
    %138 = vmatpush1.msra.mxu0 0.0
    %139 = vmatprep.subr.mxu0 0.0
    %140 = vmatpush1.msra.mxu0 0.0
    %141 = vmatprep.subr.mxu0 0.0
    %142 = vmatpush1.msra.mxu0 0.0
    %143 = vmatprep.subr.mxu0 0.0
    %144 = vmatpush1.msra.mxu0 0.0
    %145 = vmatprep.subr.mxu0 0.0
    %146 = vmatpush1.msra.mxu0 0.0
    %147 = vmatprep.subr.mxu0 0.0
    %148 = vmatpush1.msra.mxu0 0.0
    %149 = vmatprep.subr.mxu0 0.0
    %150 = vmatpush1.msra.mxu0 0.0
    %151 = vmatprep.subr.mxu0 0.0
    %152 = vmatpush1.msra.mxu0 0.0
    %153 = vmatprep.subr.mxu0 0.0
    %154 = vmatpush1.msra.mxu0 0.0
    %155 = vmatprep.subr.mxu0 0.0
    %156 = vmatpush1.msra.mxu0 0.0
    %157 = vmatprep.subr.mxu0 0.0
    %158 = vmatpush1.msra.mxu0 0.0
    %159 = vmatprep.subr.mxu0 0.0
    %160 = vmatpush1.msra.mxu0 0.0
    %161 = vmatprep.mubr.f32.mxu0 0.0
    %162 = vmatmul.mubr.f32.gmra.mrb[0].mxu0 %v95
    %v163 = vpop.f32.mrb[0].mxu0
    %v164 = vadd.f32 0.0, %v163
    %v165 = vpop.f32.mrb[0].mxu0
    %166 = vdwg.mxu0
    %v168 = vsel %vm93, %v90, 0
    %170 = vmatprep.subr.mxu0 0.0
    %171 = vmatpush1.msra.mxu0 %v54
    %172 = vmatprep.subr.mxu0 0.0
    %173 = vmatpush1.msra.mxu0 %v55
    %174 = vmatprep.subr.mxu0 0.0
    %175 = vmatpush1.msra.mxu0 %v56
    %176 = vmatprep.subr.mxu0 0.0
    %177 = vmatpush1.msra.mxu0 %v57
    %178 = vmatprep.subr.mxu0 0.0
    %179 = vmatpush1.msra.mxu0 0.0
    %180 = vmatprep.subr.mxu0 0.0
    %181 = vmatpush1.msra.mxu0 0.0
    %182 = vmatprep.subr.mxu0 0.0
    %183 = vmatpush1.msra.mxu0 0.0
    %184 = vmatprep.subr.mxu0 0.0
    %185 = vmatpush1.msra.mxu0 0.0
    %186 = vmatprep.subr.mxu0 0.0
    %187 = vmatpush1.msra.mxu0 0.0
    %188 = vmatprep.subr.mxu0 0.0
    %189 = vmatpush1.msra.mxu0 0.0
    %190 = vmatprep.subr.mxu0 0.0
    %191 = vmatpush1.msra.mxu0 0.0
    %192 = vmatprep.subr.mxu0 0.0
    %193 = vmatpush1.msra.mxu0 0.0
    %194 = vmatprep.subr.mxu0 0.0
    %195 = vmatpush1.msra.mxu0 0.0
    %196 = vmatprep.subr.mxu0 0.0
    %197 = vmatpush1.msra.mxu0 0.0
    %198 = vmatprep.subr.mxu0 0.0
    %199 = vmatpush1.msra.mxu0 0.0
    %200 = vmatprep.subr.mxu0 0.0
    %201 = vmatpush1.msra.mxu0 0.0
    %202 = vmatprep.subr.mxu0 0.0
    %203 = vmatpush1.msra.mxu0 0.0
    %204 = vmatprep.subr.mxu0 0.0
    %205 = vmatpush1.msra.mxu0 0.0
    %206 = vmatprep.subr.mxu0 0.0
    %207 = vmatpush1.msra.mxu0 0.0
    %208 = vmatprep.subr.mxu0 0.0
    %209 = vmatpush1.msra.mxu0 0.0
    %210 = vmatprep.subr.mxu0 0.0
    %211 = vmatpush1.msra.mxu0 0.0
    %212 = vmatprep.subr.mxu0 0.0
    %213 = vmatpush1.msra.mxu0 0.0
    %214 = vmatprep.subr.mxu0 0.0
    %215 = vmatpush1.msra.mxu0 0.0
    %216 = vmatprep.subr.mxu0 0.0
    %217 = vmatpush1.msra.mxu0 0.0
    %218 = vmatprep.subr.mxu0 0.0
    %219 = vmatpush1.msra.mxu0 0.0
    %220 = vmatprep.subr.mxu0 0.0
    %221 = vmatpush1.msra.mxu0 0.0
    %222 = vmatprep.subr.mxu0 0.0
    %223 = vmatpush1.msra.mxu0 0.0
    %224 = vmatprep.subr.mxu0 0.0
    %225 = vmatpush1.msra.mxu0 0.0
    %226 = vmatprep.subr.mxu0 0.0
    %227 = vmatpush1.msra.mxu0 0.0
    %228 = vmatprep.subr.mxu0 0.0
    %229 = vmatpush1.msra.mxu0 0.0
    %230 = vmatprep.subr.mxu0 0.0
    %231 = vmatpush1.msra.mxu0 0.0
    %232 = vmatprep.subr.mxu0 0.0
    %233 = vmatpush1.msra.mxu0 0.0
    %234 = vmatprep.mubr.f32.mxu0 0.0
    %235 = vmatmul.mubr.f32.gmra.mrb[0].mxu0 %v168
    %v236 = vpop.f32.mrb[0].mxu0
    %v237 = vadd.f32 %v164, %v236
    %v238 = vpop.f32.mrb[0].mxu0
    %239 = vdwg.mxu0
    %v241 = vlaneseq
    %v242 = vshrl.u32 %v241, 7
    %v243 = vsub.s32 0, %v242
    %v244 = vrot.slane %v62, %v243
    %v246 = vadd.f32 %v237, %v244
    %247 = vst [vmem:[#allocation8] sm:$0x1f] %v246
    %s248 = scalar_lea.vmem [#allocation2], 16
    %v249 = vld [vmem:[%s248] sm:$0x1f]
    %s250 = scalar_lea.vmem [#allocation2], 24
    %v251 = vld [vmem:[%s250] sm:$0x1f]
    %v252 = vsel %vm66, %v249, 0.0
    %253 = vadd.xlane.f32.xlu0 %v252
    %v254 = vpop.xlane.xlu0 %253
    %v255 = vsel %vm66, %v251, 0.0
    %256 = vadd.xlane.f32.xlu0 %v255
    %v257 = vpop.xlane.xlu0 %256
    %v258 = vadd.f32 %v254, %v257
    %v259 = vmul.f32 %v249, %v249
    %v260 = vsel %vm66, %v259, 0.0
    %261 = vadd.xlane.f32.xlu0 %v260
    %v262 = vpop.xlane.xlu0 %261
    %v263 = vmul.f32 %v251, %v251
    %v264 = vsel %vm66, %v263, 0.0
    %265 = vadd.xlane.f32.xlu0 %v264
    %v266 = vpop.xlane.xlu0 %265
    %v267 = vadd.f32 %v262, %v266
    %v268 = vmul.f32 %v258, 0.015625
    %v269 = vmul.f32 %v267, 0.015625
    %v270 = vmul.f32 %v268, %v268
    %v271 = vsub.f32 %v269, %v270
    %v272 = vadd.f32 %v271, 1e-05
    %v273 = vrsqrt.pop %v272
    %v274 = vsub.f32 %v249, %v268
    %v275 = vmul.f32 %v274, %v273
    %v276 = vsub.f32 %v251, %v268
    %v277 = vmul.f32 %v276, %v273
    %v279 = vsel %vm93, %v277, 0
    %281 = vmatprep.subr.mxu0 0.0
    %282 = vmatpush1.msra.mxu0 %v58
    %283 = vmatprep.subr.mxu0 0.0
    %284 = vmatpush1.msra.mxu0 %v59
    %285 = vmatprep.subr.mxu0 0.0
    %286 = vmatpush1.msra.mxu0 %v60
    %287 = vmatprep.subr.mxu0 0.0
    %288 = vmatpush1.msra.mxu0 %v61
    %289 = vmatprep.subr.mxu0 0.0
    %290 = vmatpush1.msra.mxu0 0.0
    %291 = vmatprep.subr.mxu0 0.0
    %292 = vmatpush1.msra.mxu0 0.0
    %293 = vmatprep.subr.mxu0 0.0
    %294 = vmatpush1.msra.mxu0 0.0
    %295 = vmatprep.subr.mxu0 0.0
    %296 = vmatpush1.msra.mxu0 0.0
    %297 = vmatprep.subr.mxu0 0.0
    %298 = vmatpush1.msra.mxu0 0.0
    %299 = vmatprep.subr.mxu0 0.0
    %300 = vmatpush1.msra.mxu0 0.0
    %301 = vmatprep.subr.mxu0 0.0
    %302 = vmatpush1.msra.mxu0 0.0
    %303 = vmatprep.subr.mxu0 0.0
    %304 = vmatpush1.msra.mxu0 0.0
    %305 = vmatprep.subr.mxu0 0.0
    %306 = vmatpush1.msra.mxu0 0.0
    %307 = vmatprep.subr.mxu0 0.0
    %308 = vmatpush1.msra.mxu0 0.0
    %309 = vmatprep.subr.mxu0 0.0
    %310 = vmatpush1.msra.mxu0 0.0
    %311 = vmatprep.subr.mxu0 0.0
    %312 = vmatpush1.msra.mxu0 0.0
    %313 = vmatprep.subr.mxu0 0.0
    %314 = vmatpush1.msra.mxu0 0.0
    %315 = vmatprep.subr.mxu0 0.0
    %316 = vmatpush1.msra.mxu0 0.0
    %317 = vmatprep.subr.mxu0 0.0
    %318 = vmatpush1.msra.mxu0 0.0
    %319 = vmatprep.subr.mxu0 0.0
    %320 = vmatpush1.msra.mxu0 0.0
    %321 = vmatprep.subr.mxu0 0.0
    %322 = vmatpush1.msra.mxu0 0.0
    %323 = vmatprep.subr.mxu0 0.0
    %324 = vmatpush1.msra.mxu0 0.0
    %325 = vmatprep.subr.mxu0 0.0
    %326 = vmatpush1.msra.mxu0 0.0
    %327 = vmatprep.subr.mxu0 0.0
    %328 = vmatpush1.msra.mxu0 0.0
    %329 = vmatprep.subr.mxu0 0.0
    %330 = vmatpush1.msra.mxu0 0.0
    %331 = vmatprep.subr.mxu0 0.0
    %332 = vmatpush1.msra.mxu0 0.0
    %333 = vmatprep.subr.mxu0 0.0
    %334 = vmatpush1.msra.mxu0 0.0
    %335 = vmatprep.subr.mxu0 0.0
    %336 = vmatpush1.msra.mxu0 0.0
    %337 = vmatprep.subr.mxu0 0.0
    %338 = vmatpush1.msra.mxu0 0.0
    %339 = vmatprep.subr.mxu0 0.0
    %340 = vmatpush1.msra.mxu0 0.0
    %341 = vmatprep.subr.mxu0 0.0
    %342 = vmatpush1.msra.mxu0 0.0
    %343 = vmatprep.subr.mxu0 0.0
    %344 = vmatpush1.msra.mxu0 0.0
    %345 = vmatprep.mubr.f32.mxu0 0.0
    %346 = vmatmul.mubr.f32.gmra.mrb[0].mxu0 %v279
    %v347 = vpop.f32.mrb[0].mxu0
    %v348 = vadd.f32 0.0, %v347
    %v349 = vpop.f32.mrb[0].mxu0
    %350 = vdwg.mxu0
    %v352 = vsel %vm93, %v275, 0
    %354 = vmatprep.subr.mxu0 0.0
    %355 = vmatpush1.msra.mxu0 %v54
    %356 = vmatprep.subr.mxu0 0.0
    %357 = vmatpush1.msra.mxu0 %v55
    %358 = vmatprep.subr.mxu0 0.0
    %359 = vmatpush1.msra.mxu0 %v56
    %360 = vmatprep.subr.mxu0 0.0
    %361 = vmatpush1.msra.mxu0 %v57
    %362 = vmatprep.subr.mxu0 0.0
    %363 = vmatpush1.msra.mxu0 0.0
    %364 = vmatprep.subr.mxu0 0.0
    %365 = vmatpush1.msra.mxu0 0.0
    %366 = vmatprep.subr.mxu0 0.0
    %367 = vmatpush1.msra.mxu0 0.0
    %368 = vmatprep.subr.mxu0 0.0
    %369 = vmatpush1.msra.mxu0 0.0
    %370 = vmatprep.subr.mxu0 0.0
    %371 = vmatpush1.msra.mxu0 0.0
    %372 = vmatprep.subr.mxu0 0.0
    %373 = vmatpush1.msra.mxu0 0.0
    %374 = vmatprep.subr.mxu0 0.0
    %375 = vmatpush1.msra.mxu0 0.0
    %376 = vmatprep.subr.mxu0 0.0
    %377 = vmatpush1.msra.mxu0 0.0
    %378 = vmatprep.subr.mxu0 0.0
    %379 = vmatpush1.msra.mxu0 0.0
    %380 = vmatprep.subr.mxu0 0.0
    %381 = vmatpush1.msra.mxu0 0.0
    %382 = vmatprep.subr.mxu0 0.0
    %383 = vmatpush1.msra.mxu0 0.0
    %384 = vmatprep.subr.mxu0 0.0
    %385 = vmatpush1.msra.mxu0 0.0
    %386 = vmatprep.subr.mxu0 0.0
    %387 = vmatpush1.msra.mxu0 0.0
    %388 = vmatprep.subr.mxu0 0.0
    %389 = vmatpush1.msra.mxu0 0.0
    %390 = vmatprep.subr.mxu0 0.0
    %391 = vmatpush1.msra.mxu0 0.0
    %392 = vmatprep.subr.mxu0 0.0
    %393 = vmatpush1.msra.mxu0 0.0
    %394 = vmatprep.subr.mxu0 0.0
    %395 = vmatpush1.msra.mxu0 0.0
    %396 = vmatprep.subr.mxu0 0.0
    %397 = vmatpush1.msra.mxu0 0.0
    %398 = vmatprep.subr.mxu0 0.0
    %399 = vmatpush1.msra.mxu0 0.0
    %400 = vmatprep.subr.mxu0 0.0
    %401 = vmatpush1.msra.mxu0 0.0
    %402 = vmatprep.subr.mxu0 0.0
    %403 = vmatpush1.msra.mxu0 0.0
    %404 = vmatprep.subr.mxu0 0.0
    %405 = vmatpush1.msra.mxu0 0.0
    %406 = vmatprep.subr.mxu0 0.0
    %407 = vmatpush1.msra.mxu0 0.0
    %408 = vmatprep.subr.mxu0 0.0
    %409 = vmatpush1.msra.mxu0 0.0
    %410 = vmatprep.subr.mxu0 0.0
    %411 = vmatpush1.msra.mxu0 0.0
    %412 = vmatprep.subr.mxu0 0.0
    %413 = vmatpush1.msra.mxu0 0.0
    %414 = vmatprep.subr.mxu0 0.0
    %415 = vmatpush1.msra.mxu0 0.0
    %416 = vmatprep.subr.mxu0 0.0
    %417 = vmatpush1.msra.mxu0 0.0
    %418 = vmatprep.mubr.f32.mxu0 0.0
    %419 = vmatmul.mubr.f32.gmra.mrb[0].mxu0 %v352
    %v420 = vpop.f32.mrb[0].mxu0
    %v421 = vadd.f32 %v348, %v420
    %v422 = vpop.f32.mrb[0].mxu0
    %423 = vdwg.mxu0
    %v424 = vadd.f32 %v421, %v244
    %s425 = scalar_lea.vmem [#allocation8], 8
    %426 = vst [vmem:[%s425] sm:$0x1f] %v424
    %s427 = scalar_lea.vmem [#allocation2], 32
    %v428 = vld [vmem:[%s427] sm:$0x1f]
    %s429 = scalar_lea.vmem [#allocation2], 40
    %v430 = vld [vmem:[%s429] sm:$0x1f]
    %v431 = vsel %vm66, %v428, 0.0
    %432 = vadd.xlane.f32.xlu0 %v431
    %v433 = vpop.xlane.xlu0 %432
    %v434 = vsel %vm66, %v430, 0.0
    %435 = vadd.xlane.f32.xlu0 %v434
    %v436 = vpop.xlane.xlu0 %435
    %v437 = vadd.f32 %v433, %v436
    %v438 = vmul.f32 %v428, %v428
    %v439 = vsel %vm66, %v438, 0.0
    %440 = vadd.xlane.f32.xlu0 %v439
    %v441 = vpop.xlane.xlu0 %440
    %v442 = vmul.f32 %v430, %v430
    %v443 = vsel %vm66, %v442, 0.0
    %444 = vadd.xlane.f32.xlu0 %v443
    %v445 = vpop.xlane.xlu0 %444
    %v446 = vadd.f32 %v441, %v445
    %v447 = vmul.f32 %v437, 0.015625
    %v448 = vmul.f32 %v446, 0.015625
    %v449 = vmul.f32 %v447, %v447
    %v450 = vsub.f32 %v448, %v449
    %v451 = vadd.f32 %v450, 1e-05
    %v452 = vrsqrt.pop %v451
    %v453 = vsub.f32 %v428, %v447
    %v454 = vmul.f32 %v453, %v452
    %v455 = vsub.f32 %v430, %v447
    %v456 = vmul.f32 %v455, %v452
    %v458 = vsel %vm93, %v456, 0
    %460 = vmatprep.subr.mxu0 0.0
    %461 = vmatpush1.msra.mxu0 %v58
    %462 = vmatprep.subr.mxu0 0.0
    %463 = vmatpush1.msra.mxu0 %v59
    %464 = vmatprep.subr.mxu0 0.0
    %465 = vmatpush1.msra.mxu0 %v60
    %466 = vmatprep.subr.mxu0 0.0
    %467 = vmatpush1.msra.mxu0 %v61
    %468 = vmatprep.subr.mxu0 0.0
    %469 = vmatpush1.msra.mxu0 0.0
    %470 = vmatprep.subr.mxu0 0.0
    %471 = vmatpush1.msra.mxu0 0.0
    %472 = vmatprep.subr.mxu0 0.0
    %473 = vmatpush1.msra.mxu0 0.0
    %474 = vmatprep.subr.mxu0 0.0
    %475 = vmatpush1.msra.mxu0 0.0
    %476 = vmatprep.subr.mxu0 0.0
    %477 = vmatpush1.msra.mxu0 0.0
    %478 = vmatprep.subr.mxu0 0.0
    %479 = vmatpush1.msra.mxu0 0.0
    %480 = vmatprep.subr.mxu0 0.0
    %481 = vmatpush1.msra.mxu0 0.0
    %482 = vmatprep.subr.mxu0 0.0
    %483 = vmatpush1.msra.mxu0 0.0
    %484 = vmatprep.subr.mxu0 0.0
    %485 = vmatpush1.msra.mxu0 0.0
    %486 = vmatprep.subr.mxu0 0.0
    %487 = vmatpush1.msra.mxu0 0.0
    %488 = vmatprep.subr.mxu0 0.0
    %489 = vmatpush1.msra.mxu0 0.0
    %490 = vmatprep.subr.mxu0 0.0
    %491 = vmatpush1.msra.mxu0 0.0
    %492 = vmatprep.subr.mxu0 0.0
    %493 = vmatpush1.msra.mxu0 0.0
    %494 = vmatprep.subr.mxu0 0.0
    %495 = vmatpush1.msra.mxu0 0.0
    %496 = vmatprep.subr.mxu0 0.0
    %497 = vmatpush1.msra.mxu0 0.0
    %498 = vmatprep.subr.mxu0 0.0
    %499 = vmatpush1.msra.mxu0 0.0
    %500 = vmatprep.subr.mxu0 0.0
    %501 = vmatpush1.msra.mxu0 0.0
    %502 = vmatprep.subr.mxu0 0.0
    %503 = vmatpush1.msra.mxu0 0.0
    %504 = vmatprep.subr.mxu0 0.0
    %505 = vmatpush1.msra.mxu0 0.0
    %506 = vmatprep.subr.mxu0 0.0
    %507 = vmatpush1.msra.mxu0 0.0
    %508 = vmatprep.subr.mxu0 0.0
    %509 = vmatpush1.msra.mxu0 0.0
    %510 = vmatprep.subr.mxu0 0.0
    %511 = vmatpush1.msra.mxu0 0.0
    %512 = vmatprep.subr.mxu0 0.0
    %513 = vmatpush1.msra.mxu0 0.0
    %514 = vmatprep.subr.mxu0 0.0
    %515 = vmatpush1.msra.mxu0 0.0
    %516 = vmatprep.subr.mxu0 0.0
    %517 = vmatpush1.msra.mxu0 0.0
    %518 = vmatprep.subr.mxu0 0.0
    %519 = vmatpush1.msra.mxu0 0.0
    %520 = vmatprep.subr.mxu0 0.0
    %521 = vmatpush1.msra.mxu0 0.0
    %522 = vmatprep.subr.mxu0 0.0
    %523 = vmatpush1.msra.mxu0 0.0
    %524 = vmatprep.mubr.f32.mxu0 0.0
    %525 = vmatmul.mubr.f32.gmra.mrb[0].mxu0 %v458
    %v526 = vpop.f32.mrb[0].mxu0
    %v527 = vadd.f32 0.0, %v526
    %v528 = vpop.f32.mrb[0].mxu0
    %529 = vdwg.mxu0
    %v531 = vsel %vm93, %v454, 0
    %533 = vmatprep.subr.mxu0 0.0
    %534 = vmatpush1.msra.mxu0 %v54
    %535 = vmatprep.subr.mxu0 0.0
    %536 = vmatpush1.msra.mxu0 %v55
    %537 = vmatprep.subr.mxu0 0.0
    %538 = vmatpush1.msra.mxu0 %v56
    %539 = vmatprep.subr.mxu0 0.0
    %540 = vmatpush1.msra.mxu0 %v57
    %541 = vmatprep.subr.mxu0 0.0
    %542 = vmatpush1.msra.mxu0 0.0
    %543 = vmatprep.subr.mxu0 0.0
    %544 = vmatpush1.msra.mxu0 0.0
    %545 = vmatprep.subr.mxu0 0.0
    %546 = vmatpush1.msra.mxu0 0.0
    %547 = vmatprep.subr.mxu0 0.0
    %548 = vmatpush1.msra.mxu0 0.0
    %549 = vmatprep.subr.mxu0 0.0
    %550 = vmatpush1.msra.mxu0 0.0
    %551 = vmatprep.subr.mxu0 0.0
    %552 = vmatpush1.msra.mxu0 0.0
    %553 = vmatprep.subr.mxu0 0.0
    %554 = vmatpush1.msra.mxu0 0.0
    %555 = vmatprep.subr.mxu0 0.0
    %556 = vmatpush1.msra.mxu0 0.0
    %557 = vmatprep.subr.mxu0 0.0
    %558 = vmatpush1.msra.mxu0 0.0
    %559 = vmatprep.subr.mxu0 0.0
    %560 = vmatpush1.msra.mxu0 0.0
    %561 = vmatprep.subr.mxu0 0.0
    %562 = vmatpush1.msra.mxu0 0.0
    %563 = vmatprep.subr.mxu0 0.0
    %564 = vmatpush1.msra.mxu0 0.0
    %565 = vmatprep.subr.mxu0 0.0
    %566 = vmatpush1.msra.mxu0 0.0
    %567 = vmatprep.subr.mxu0 0.0
    %568 = vmatpush1.msra.mxu0 0.0
    %569 = vmatprep.subr.mxu0 0.0
    %570 = vmatpush1.msra.mxu0 0.0
    %571 = vmatprep.subr.mxu0 0.0
    %572 = vmatpush1.msra.mxu0 0.0
    %573 = vmatprep.subr.mxu0 0.0
    %574 = vmatpush1.msra.mxu0 0.0
    %575 = vmatprep.subr.mxu0 0.0
    %576 = vmatpush1.msra.mxu0 0.0
    %577 = vmatprep.subr.mxu0 0.0
    %578 = vmatpush1.msra.mxu0 0.0
    %579 = vmatprep.subr.mxu0 0.0
    %580 = vmatpush1.msra.mxu0 0.0
    %581 = vmatprep.subr.mxu0 0.0
    %582 = vmatpush1.msra.mxu0 0.0
    %583 = vmatprep.subr.mxu0 0.0
    %584 = vmatpush1.msra.mxu0 0.0
    %585 = vmatprep.subr.mxu0 0.0
    %586 = vmatpush1.msra.mxu0 0.0
    %587 = vmatprep.subr.mxu0 0.0
    %588 = vmatpush1.msra.mxu0 0.0
    %589 = vmatprep.subr.mxu0 0.0
    %590 = vmatpush1.msra.mxu0 0.0
    %591 = vmatprep.subr.mxu0 0.0
    %592 = vmatpush1.msra.mxu0 0.0
    %593 = vmatprep.subr.mxu0 0.0
    %594 = vmatpush1.msra.mxu0 0.0
    %595 = vmatprep.subr.mxu0 0.0
    %596 = vmatpush1.msra.mxu0 0.0
    %597 = vmatprep.mubr.f32.mxu0 0.0
    %598 = vmatmul.mubr.f32.gmra.mrb[0].mxu0 %v531
    %v599 = vpop.f32.mrb[0].mxu0
    %v600 = vadd.f32 %v527, %v599
    %v601 = vpop.f32.mrb[0].mxu0
    %602 = vdwg.mxu0
    %v603 = vadd.f32 %v600, %v244
    %s604 = scalar_lea.vmem [#allocation8], 16
    %605 = vst [vmem:[%s604] sm:$0x1f] %v603
    %s606 = scalar_lea.vmem [#allocation2], 48
    %v607 = vld [vmem:[%s606] sm:$0x1f]
    %s608 = scalar_lea.vmem [#allocation2], 56
    %v609 = vld [vmem:[%s608] sm:$0x1f]
    %v610 = vsel %vm66, %v607, 0.0
    %611 = vadd.xlane.f32.xlu0 %v610
    %v612 = vpop.xlane.xlu0 %611
    %v613 = vsel %vm66, %v609, 0.0
    %614 = vadd.xlane.f32.xlu0 %v613
    %v615 = vpop.xlane.xlu0 %614
    %v616 = vadd.f32 %v612, %v615
    %v617 = vmul.f32 %v607, %v607
    %v618 = vsel %vm66, %v617, 0.0
    %619 = vadd.xlane.f32.xlu0 %v618
    %v620 = vpop.xlane.xlu0 %619
    %v621 = vmul.f32 %v609, %v609
    %v622 = vsel %vm66, %v621, 0.0
    %623 = vadd.xlane.f32.xlu0 %v622
    %v624 = vpop.xlane.xlu0 %623
    %v625 = vadd.f32 %v620, %v624
    %v626 = vmul.f32 %v616, 0.015625
    %v627 = vmul.f32 %v625, 0.015625
    %v628 = vmul.f32 %v626, %v626
    %v629 = vsub.f32 %v627, %v628
    %v630 = vadd.f32 %v629, 1e-05
    %v631 = vrsqrt.pop %v630
    %v632 = vsub.f32 %v607, %v626
    %v633 = vmul.f32 %v632, %v631
    %v634 = vsub.f32 %v609, %v626
    %v635 = vmul.f32 %v634, %v631
    %v637 = vsel %vm93, %v635, 0
    %639 = vmatprep.subr.mxu0 0.0
    %640 = vmatpush1.msra.mxu0 %v58
    %641 = vmatprep.subr.mxu0 0.0
    %642 = vmatpush1.msra.mxu0 %v59
    %643 = vmatprep.subr.mxu0 0.0
    %644 = vmatpush1.msra.mxu0 %v60
    %645 = vmatprep.subr.mxu0 0.0
    %646 = vmatpush1.msra.mxu0 %v61
    %647 = vmatprep.subr.mxu0 0.0
    %648 = vmatpush1.msra.mxu0 0.0
    %649 = vmatprep.subr.mxu0 0.0
    %650 = vmatpush1.msra.mxu0 0.0
    %651 = vmatprep.subr.mxu0 0.0
    %652 = vmatpush1.msra.mxu0 0.0
    %653 = vmatprep.subr.mxu0 0.0
    %654 = vmatpush1.msra.mxu0 0.0
    %655 = vmatprep.subr.mxu0 0.0
    %656 = vmatpush1.msra.mxu0 0.0
    %657 = vmatprep.subr.mxu0 0.0
    %658 = vmatpush1.msra.mxu0 0.0
    %659 = vmatprep.subr.mxu0 0.0
    %660 = vmatpush1.msra.mxu0 0.0
    %661 = vmatprep.subr.mxu0 0.0
    %662 = vmatpush1.msra.mxu0 0.0
    %663 = vmatprep.subr.mxu0 0.0
    %664 = vmatpush1.msra.mxu0 0.0
    %665 = vmatprep.subr.mxu0 0.0
    %666 = vmatpush1.msra.mxu0 0.0
    %667 = vmatprep.subr.mxu0 0.0
    %668 = vmatpush1.msra.mxu0 0.0
    %669 = vmatprep.subr.mxu0 0.0
    %670 = vmatpush1.msra.mxu0 0.0
    %671 = vmatprep.subr.mxu0 0.0
    %672 = vmatpush1.msra.mxu0 0.0
    %673 = vmatprep.subr.mxu0 0.0
    %674 = vmatpush1.msra.mxu0 0.0
    %675 = vmatprep.subr.mxu0 0.0
    %676 = vmatpush1.msra.mxu0 0.0
    %677 = vmatprep.subr.mxu0 0.0
    %678 = vmatpush1.msra.mxu0 0.0
    %679 = vmatprep.subr.mxu0 0.0
    %680 = vmatpush1.msra.mxu0 0.0
    %681 = vmatprep.subr.mxu0 0.0
    %682 = vmatpush1.msra.mxu0 0.0
    %683 = vmatprep.subr.mxu0 0.0
    %684 = vmatpush1.msra.mxu0 0.0
    %685 = vmatprep.subr.mxu0 0.0
    %686 = vmatpush1.msra.mxu0 0.0
    %687 = vmatprep.subr.mxu0 0.0
    %688 = vmatpush1.msra.mxu0 0.0
    %689 = vmatprep.subr.mxu0 0.0
    %690 = vmatpush1.msra.mxu0 0.0
    %691 = vmatprep.subr.mxu0 0.0
    %692 = vmatpush1.msra.mxu0 0.0
    %693 = vmatprep.subr.mxu0 0.0
    %694 = vmatpush1.msra.mxu0 0.0
    %695 = vmatprep.subr.mxu0 0.0
    %696 = vmatpush1.msra.mxu0 0.0
    %697 = vmatprep.subr.mxu0 0.0
    %698 = vmatpush1.msra.mxu0 0.0
    %699 = vmatprep.subr.mxu0 0.0
    %700 = vmatpush1.msra.mxu0 0.0
    %701 = vmatprep.subr.mxu0 0.0
    %702 = vmatpush1.msra.mxu0 0.0
    %703 = vmatprep.mubr.f32.mxu0 0.0
    %704 = vmatmul.mubr.f32.gmra.mrb[0].mxu0 %v637
    %v705 = vpop.f32.mrb[0].mxu0
    %v706 = vadd.f32 0.0, %v705
    %v707 = vpop.f32.mrb[0].mxu0
    %708 = vdwg.mxu0
    %v710 = vsel %vm93, %v633, 0
    %712 = vmatprep.subr.mxu0 0.0
    %713 = vmatpush1.msra.mxu0 %v54
    %714 = vmatprep.subr.mxu0 0.0
    %715 = vmatpush1.msra.mxu0 %v55
    %716 = vmatprep.subr.mxu0 0.0
    %717 = vmatpush1.msra.mxu0 %v56
    %718 = vmatprep.subr.mxu0 0.0
    %719 = vmatpush1.msra.mxu0 %v57
    %720 = vmatprep.subr.mxu0 0.0
    %721 = vmatpush1.msra.mxu0 0.0
    %722 = vmatprep.subr.mxu0 0.0
    %723 = vmatpush1.msra.mxu0 0.0
    %724 = vmatprep.subr.mxu0 0.0
    %725 = vmatpush1.msra.mxu0 0.0
    %726 = vmatprep.subr.mxu0 0.0
    %727 = vmatpush1.msra.mxu0 0.0
    %728 = vmatprep.subr.mxu0 0.0
    %729 = vmatpush1.msra.mxu0 0.0
    %730 = vmatprep.subr.mxu0 0.0
    %731 = vmatpush1.msra.mxu0 0.0
    %732 = vmatprep.subr.mxu0 0.0
    %733 = vmatpush1.msra.mxu0 0.0
    %734 = vmatprep.subr.mxu0 0.0
    %735 = vmatpush1.msra.mxu0 0.0
    %736 = vmatprep.subr.mxu0 0.0
    %737 = vmatpush1.msra.mxu0 0.0
    %738 = vmatprep.subr.mxu0 0.0
    %739 = vmatpush1.msra.mxu0 0.0
    %740 = vmatprep.subr.mxu0 0.0
    %741 = vmatpush1.msra.mxu0 0.0
    %742 = vmatprep.subr.mxu0 0.0
    %743 = vmatpush1.msra.mxu0 0.0
    %744 = vmatprep.subr.mxu0 0.0
    %745 = vmatpush1.msra.mxu0 0.0
    %746 = vmatprep.subr.mxu0 0.0
    %747 = vmatpush1.msra.mxu0 0.0
    %748 = vmatprep.subr.mxu0 0.0
    %749 = vmatpush1.msra.mxu0 0.0
    %750 = vmatprep.subr.mxu0 0.0
    %751 = vmatpush1.msra.mxu0 0.0
    %752 = vmatprep.subr.mxu0 0.0
    %753 = vmatpush1.msra.mxu0 0.0
    %754 = vmatprep.subr.mxu0 0.0
    %755 = vmatpush1.msra.mxu0 0.0
    %756 = vmatprep.subr.mxu0 0.0
    %757 = vmatpush1.msra.mxu0 0.0
    %758 = vmatprep.subr.mxu0 0.0
    %759 = vmatpush1.msra.mxu0 0.0
    %760 = vmatprep.subr.mxu0 0.0
    %761 = vmatpush1.msra.mxu0 0.0
    %762 = vmatprep.subr.mxu0 0.0
    %763 = vmatpush1.msra.mxu0 0.0
    %764 = vmatprep.subr.mxu0 0.0
    %765 = vmatpush1.msra.mxu0 0.0
    %766 = vmatprep.subr.mxu0 0.0
    %767 = vmatpush1.msra.mxu0 0.0
    %768 = vmatprep.subr.mxu0 0.0
    %769 = vmatpush1.msra.mxu0 0.0
    %770 = vmatprep.subr.mxu0 0.0
    %771 = vmatpush1.msra.mxu0 0.0
    %772 = vmatprep.subr.mxu0 0.0
    %773 = vmatpush1.msra.mxu0 0.0
    %774 = vmatprep.subr.mxu0 0.0
    %775 = vmatpush1.msra.mxu0 0.0
    %776 = vmatprep.mubr.f32.mxu0 0.0
    %777 = vmatmul.mubr.f32.gmra.mrb[0].mxu0 %v710
    %v778 = vpop.f32.mrb[0].mxu0
    %v779 = vadd.f32 %v706, %v778
    %v780 = vpop.f32.mrb[0].mxu0
    %781 = vdwg.mxu0
    %v782 = vadd.f32 %v779, %v244
    %s783 = scalar_lea.vmem [#allocation8], 24
    %784 = vst [vmem:[%s783] sm:$0x1f] %v782
    %s785 = scalar_lea.vmem [#allocation2], 64
    %v786 = vld [vmem:[%s785] sm:$0x1f]
    %s787 = scalar_lea.vmem [#allocation2], 72
    %v788 = vld [vmem:[%s787] sm:$0x1f]
    %v789 = vsel %vm66, %v786, 0.0
    %790 = vadd.xlane.f32.xlu0 %v789
    %v791 = vpop.xlane.xlu0 %790
    %v792 = vsel %vm66, %v788, 0.0
    %793 = vadd.xlane.f32.xlu0 %v792
    %v794 = vpop.xlane.xlu0 %793
    %v795 = vadd.f32 %v791, %v794
    %v796 = vmul.f32 %v786, %v786
    %v797 = vsel %vm66, %v796, 0.0
    %798 = vadd.xlane.f32.xlu0 %v797
    %v799 = vpop.xlane.xlu0 %798
    %v800 = vmul.f32 %v788, %v788
    %v801 = vsel %vm66, %v800, 0.0
    %802 = vadd.xlane.f32.xlu0 %v801
    %v803 = vpop.xlane.xlu0 %802
    %v804 = vadd.f32 %v799, %v803
    %v805 = vmul.f32 %v795, 0.015625
    %v806 = vmul.f32 %v804, 0.015625
    %v807 = vmul.f32 %v805, %v805
    %v808 = vsub.f32 %v806, %v807
    %v809 = vadd.f32 %v808, 1e-05
    %v810 = vrsqrt.pop %v809
    %v811 = vsub.f32 %v786, %v805
    %v812 = vmul.f32 %v811, %v810
    %v813 = vsub.f32 %v788, %v805
    %v814 = vmul.f32 %v813, %v810
    %v816 = vsel %vm93, %v814, 0
    %818 = vmatprep.subr.mxu0 0.0
    %819 = vmatpush1.msra.mxu0 %v58
    %820 = vmatprep.subr.mxu0 0.0
    %821 = vmatpush1.msra.mxu0 %v59
    %822 = vmatprep.subr.mxu0 0.0
    %823 = vmatpush1.msra.mxu0 %v60
    %824 = vmatprep.subr.mxu0 0.0
    %825 = vmatpush1.msra.mxu0 %v61
    %826 = vmatprep.subr.mxu0 0.0
    %827 = vmatpush1.msra.mxu0 0.0
    %828 = vmatprep.subr.mxu0 0.0
    %829 = vmatpush1.msra.mxu0 0.0
    %830 = vmatprep.subr.mxu0 0.0
    %831 = vmatpush1.msra.mxu0 0.0
    %832 = vmatprep.subr.mxu0 0.0
    %833 = vmatpush1.msra.mxu0 0.0
    %834 = vmatprep.subr.mxu0 0.0
    %835 = vmatpush1.msra.mxu0 0.0
    %836 = vmatprep.subr.mxu0 0.0
    %837 = vmatpush1.msra.mxu0 0.0
    %838 = vmatprep.subr.mxu0 0.0
    %839 = vmatpush1.msra.mxu0 0.0
    %840 = vmatprep.subr.mxu0 0.0
    %841 = vmatpush1.msra.mxu0 0.0
    %842 = vmatprep.subr.mxu0 0.0
    %843 = vmatpush1.msra.mxu0 0.0
    %844 = vmatprep.subr.mxu0 0.0
    %845 = vmatpush1.msra.mxu0 0.0
    %846 = vmatprep.subr.mxu0 0.0
    %847 = vmatpush1.msra.mxu0 0.0
    %848 = vmatprep.subr.mxu0 0.0
    %849 = vmatpush1.msra.mxu0 0.0
    %850 = vmatprep.subr.mxu0 0.0
    %851 = vmatpush1.msra.mxu0 0.0
    %852 = vmatprep.subr.mxu0 0.0
    %853 = vmatpush1.msra.mxu0 0.0
    %854 = vmatprep.subr.mxu0 0.0
    %855 = vmatpush1.msra.mxu0 0.0
    %856 = vmatprep.subr.mxu0 0.0
    %857 = vmatpush1.msra.mxu0 0.0
    %858 = vmatprep.subr.mxu0 0.0
    %859 = vmatpush1.msra.mxu0 0.0
    %860 = vmatprep.subr.mxu0 0.0
    %861 = vmatpush1.msra.mxu0 0.0
    %862 = vmatprep.subr.mxu0 0.0
    %863 = vmatpush1.msra.mxu0 0.0
    %864 = vmatprep.subr.mxu0 0.0
    %865 = vmatpush1.msra.mxu0 0.0
    %866 = vmatprep.subr.mxu0 0.0
    %867 = vmatpush1.msra.mxu0 0.0
    %868 = vmatprep.subr.mxu0 0.0
    %869 = vmatpush1.msra.mxu0 0.0
    %870 = vmatprep.subr.mxu0 0.0
    %871 = vmatpush1.msra.mxu0 0.0
    %872 = vmatprep.subr.mxu0 0.0
    %873 = vmatpush1.msra.mxu0 0.0
    %874 = vmatprep.subr.mxu0 0.0
    %875 = vmatpush1.msra.mxu0 0.0
    %876 = vmatprep.subr.mxu0 0.0
    %877 = vmatpush1.msra.mxu0 0.0
    %878 = vmatprep.subr.mxu0 0.0
    %879 = vmatpush1.msra.mxu0 0.0
    %880 = vmatprep.subr.mxu0 0.0
    %881 = vmatpush1.msra.mxu0 0.0
    %882 = vmatprep.mubr.f32.mxu0 0.0
    %883 = vmatmul.mubr.f32.gmra.mrb[0].mxu0 %v816
    %v884 = vpop.f32.mrb[0].mxu0
    %v885 = vadd.f32 0.0, %v884
    %v886 = vpop.f32.mrb[0].mxu0
    %887 = vdwg.mxu0
    %v889 = vsel %vm93, %v812, 0
    %891 = vmatprep.subr.mxu0 0.0
    %892 = vmatpush1.msra.mxu0 %v54
    %893 = vmatprep.subr.mxu0 0.0
    %894 = vmatpush1.msra.mxu0 %v55
    %895 = vmatprep.subr.mxu0 0.0
    %896 = vmatpush1.msra.mxu0 %v56
    %897 = vmatprep.subr.mxu0 0.0
    %898 = vmatpush1.msra.mxu0 %v57
    %899 = vmatprep.subr.mxu0 0.0
    %900 = vmatpush1.msra.mxu0 0.0
    %901 = vmatprep.subr.mxu0 0.0
    %902 = vmatpush1.msra.mxu0 0.0
    %903 = vmatprep.subr.mxu0 0.0
    %904 = vmatpush1.msra.mxu0 0.0
    %905 = vmatprep.subr.mxu0 0.0
    %906 = vmatpush1.msra.mxu0 0.0
    %907 = vmatprep.subr.mxu0 0.0
    %908 = vmatpush1.msra.mxu0 0.0
    %909 = vmatprep.subr.mxu0 0.0
    %910 = vmatpush1.msra.mxu0 0.0
    %911 = vmatprep.subr.mxu0 0.0
    %912 = vmatpush1.msra.mxu0 0.0
    %913 = vmatprep.subr.mxu0 0.0
    %914 = vmatpush1.msra.mxu0 0.0
    %915 = vmatprep.subr.mxu0 0.0
    %916 = vmatpush1.msra.mxu0 0.0
    %917 = vmatprep.subr.mxu0 0.0
    %918 = vmatpush1.msra.mxu0 0.0
    %919 = vmatprep.subr.mxu0 0.0
    %920 = vmatpush1.msra.mxu0 0.0
    %921 = vmatprep.subr.mxu0 0.0
    %922 = vmatpush1.msra.mxu0 0.0
    %923 = vmatprep.subr.mxu0 0.0
    %924 = vmatpush1.msra.mxu0 0.0
    %925 = vmatprep.subr.mxu0 0.0
    %926 = vmatpush1.msra.mxu0 0.0
    %927 = vmatprep.subr.mxu0 0.0
    %928 = vmatpush1.msra.mxu0 0.0
    %929 = vmatprep.subr.mxu0 0.0
    %930 = vmatpush1.msra.mxu0 0.0
    %931 = vmatprep.subr.mxu0 0.0
    %932 = vmatpush1.msra.mxu0 0.0
    %933 = vmatprep.subr.mxu0 0.0
    %934 = vmatpush1.msra.mxu0 0.0
    %935 = vmatprep.subr.mxu0 0.0
    %936 = vmatpush1.msra.mxu0 0.0
    %937 = vmatprep.subr.mxu0 0.0
    %938 = vmatpush1.msra.mxu0 0.0
    %939 = vmatprep.subr.mxu0 0.0
    %940 = vmatpush1.msra.mxu0 0.0
    %941 = vmatprep.subr.mxu0 0.0
    %942 = vmatpush1.msra.mxu0 0.0
    %943 = vmatprep.subr.mxu0 0.0
    %944 = vmatpush1.msra.mxu0 0.0
    %945 = vmatprep.subr.mxu0 0.0
    %946 = vmatpush1.msra.mxu0 0.0
    %947 = vmatprep.subr.mxu0 0.0
    %948 = vmatpush1.msra.mxu0 0.0
    %949 = vmatprep.subr.mxu0 0.0
    %950 = vmatpush1.msra.mxu0 0.0
    %951 = vmatprep.subr.mxu0 0.0
    %952 = vmatpush1.msra.mxu0 0.0
    %953 = vmatprep.subr.mxu0 0.0
    %954 = vmatpush1.msra.mxu0 0.0
    %955 = vmatprep.mubr.f32.mxu0 0.0
    %956 = vmatmul.mubr.f32.gmra.mrb[0].mxu0 %v889
    %v957 = vpop.f32.mrb[0].mxu0
    %v958 = vadd.f32 %v885, %v957
    %v959 = vpop.f32.mrb[0].mxu0
    %960 = vdwg.mxu0
    %v961 = vadd.f32 %v958, %v244
    %s962 = scalar_lea.vmem [#allocation8], 32
    %963 = vst [vmem:[%s962] sm:$0x1f] %v961
    %s964 = scalar_lea.vmem [#allocation2], 80
    %v965 = vld [vmem:[%s964] sm:$0x1f]
    %s966 = scalar_lea.vmem [#allocation2], 88
    %v967 = vld [vmem:[%s966] sm:$0x1f]
    %v968 = vsel %vm66, %v965, 0.0
    %969 = vadd.xlane.f32.xlu0 %v968
    %v970 = vpop.xlane.xlu0 %969
    %v971 = vsel %vm66, %v967, 0.0
    %972 = vadd.xlane.f32.xlu0 %v971
    %v973 = vpop.xlane.xlu0 %972
    %v974 = vadd.f32 %v970, %v973
    %v975 = vmul.f32 %v965, %v965
    %v976 = vsel %vm66, %v975, 0.0
    %977 = vadd.xlane.f32.xlu0 %v976
    %v978 = vpop.xlane.xlu0 %977
    %v979 = vmul.f32 %v967, %v967
    %v980 = vsel %vm66, %v979, 0.0
    %981 = vadd.xlane.f32.xlu0 %v980
    %v982 = vpop.xlane.xlu0 %981
    %v983 = vadd.f32 %v978, %v982
    %v984 = vmul.f32 %v974, 0.015625
    %v985 = vmul.f32 %v983, 0.015625
    %v986 = vmul.f32 %v984, %v984
    %v987 = vsub.f32 %v985, %v986
    %v988 = vadd.f32 %v987, 1e-05
    %v989 = vrsqrt.pop %v988
    %v990 = vsub.f32 %v965, %v984
    %v991 = vmul.f32 %v990, %v989
    %v992 = vsub.f32 %v967, %v984
    %v993 = vmul.f32 %v992, %v989
    %v995 = vsel %vm93, %v993, 0
    %997 = vmatprep.subr.mxu0 0.0
    %998 = vmatpush1.msra.mxu0 %v58
    %999 = vmatprep.subr.mxu0 0.0
    %1000 = vmatpush1.msra.mxu0 %v59
    %1001 = vmatprep.subr.mxu0 0.0
    %1002 = vmatpush1.msra.mxu0 %v60
    %1003 = vmatprep.subr.mxu0 0.0
    %1004 = vmatpush1.msra.mxu0 %v61
    %1005 = vmatprep.subr.mxu0 0.0
    %1006 = vmatpush1.msra.mxu0 0.0
    %1007 = vmatprep.subr.mxu0 0.0
    %1008 = vmatpush1.msra.mxu0 0.0
    %1009 = vmatprep.subr.mxu0 0.0
    %1010 = vmatpush1.msra.mxu0 0.0
    %1011 = vmatprep.subr.mxu0 0.0
    %1012 = vmatpush1.msra.mxu0 0.0
    %1013 = vmatprep.subr.mxu0 0.0
    %1014 = vmatpush1.msra.mxu0 0.0
    %1015 = vmatprep.subr.mxu0 0.0
    %1016 = vmatpush1.msra.mxu0 0.0
    %1017 = vmatprep.subr.mxu0 0.0
    %1018 = vmatpush1.msra.mxu0 0.0
    %1019 = vmatprep.subr.mxu0 0.0
    %1020 = vmatpush1.msra.mxu0 0.0
    %1021 = vmatprep.subr.mxu0 0.0
    %1022 = vmatpush1.msra.mxu0 0.0
    %1023 = vmatprep.subr.mxu0 0.0
    %1024 = vmatpush1.msra.mxu0 0.0
    %1025 = vmatprep.subr.mxu0 0.0
    %1026 = vmatpush1.msra.mxu0 0.0
    %1027 = vmatprep.subr.mxu0 0.0
    %1028 = vmatpush1.msra.mxu0 0.0
    %1029 = vmatprep.subr.mxu0 0.0
    %1030 = vmatpush1.msra.mxu0 0.0
    %1031 = vmatprep.subr.mxu0 0.0
    %1032 = vmatpush1.msra.mxu0 0.0
    %1033 = vmatprep.subr.mxu0 0.0
    %1034 = vmatpush1.msra.mxu0 0.0
    %1035 = vmatprep.subr.mxu0 0.0
    %1036 = vmatpush1.msra.mxu0 0.0
    %1037 = vmatprep.subr.mxu0 0.0
    %1038 = vmatpush1.msra.mxu0 0.0
    %1039 = vmatprep.subr.mxu0 0.0
    %1040 = vmatpush1.msra.mxu0 0.0
    %1041 = vmatprep.subr.mxu0 0.0
    %1042 = vmatpush1.msra.mxu0 0.0
    %1043 = vmatprep.subr.mxu0 0.0
    %1044 = vmatpush1.msra.mxu0 0.0
    %1045 = vmatprep.subr.mxu0 0.0
    %1046 = vmatpush1.msra.mxu0 0.0
    %1047 = vmatprep.subr.mxu0 0.0
    %1048 = vmatpush1.msra.mxu0 0.0
    %1049 = vmatprep.subr.mxu0 0.0
    %1050 = vmatpush1.msra.mxu0 0.0
    %1051 = vmatprep.subr.mxu0 0.0
    %1052 = vmatpush1.msra.mxu0 0.0
    %1053 = vmatprep.subr.mxu0 0.0
    %1054 = vmatpush1.msra.mxu0 0.0
    %1055 = vmatprep.subr.mxu0 0.0
    %1056 = vmatpush1.msra.mxu0 0.0
    %1057 = vmatprep.subr.mxu0 0.0
    %1058 = vmatpush1.msra.mxu0 0.0
    %1059 = vmatprep.subr.mxu0 0.0
    %1060 = vmatpush1.msra.mxu0 0.0
    %1061 = vmatprep.mubr.f32.mxu0 0.0
    %1062 = vmatmul.mubr.f32.gmra.mrb[0].mxu0 %v995
    %v1063 = vpop.f32.mrb[0].mxu0
    %v1064 = vadd.f32 0.0, %v1063
    %v1065 = vpop.f32.mrb[0].mxu0
    %1066 = vdwg.mxu0
    %v1068 = vsel %vm93, %v991, 0
    %1070 = vmatprep.subr.mxu0 0.0
    %1071 = vmatpush1.msra.mxu0 %v54
    %1072 = vmatprep.subr.mxu0 0.0
    %1073 = vmatpush1.msra.mxu0 %v55
    %1074 = vmatprep.subr.mxu0 0.0
    %1075 = vmatpush1.msra.mxu0 %v56
    %1076 = vmatprep.subr.mxu0 0.0
    %1077 = vmatpush1.msra.mxu0 %v57
    %1078 = vmatprep.subr.mxu0 0.0
    %1079 = vmatpush1.msra.mxu0 0.0
    %1080 = vmatprep.subr.mxu0 0.0
    %1081 = vmatpush1.msra.mxu0 0.0
    %1082 = vmatprep.subr.mxu0 0.0
    %1083 = vmatpush1.msra.mxu0 0.0
    %1084 = vmatprep.subr.mxu0 0.0
    %1085 = vmatpush1.msra.mxu0 0.0
    %1086 = vmatprep.subr.mxu0 0.0
    %1087 = vmatpush1.msra.mxu0 0.0
    %1088 = vmatprep.subr.mxu0 0.0
    %1089 = vmatpush1.msra.mxu0 0.0
    %1090 = vmatprep.subr.mxu0 0.0
    %1091 = vmatpush1.msra.mxu0 0.0
    %1092 = vmatprep.subr.mxu0 0.0
    %1093 = vmatpush1.msra.mxu0 0.0
    %1094 = vmatprep.subr.mxu0 0.0
    %1095 = vmatpush1.msra.mxu0 0.0
    %1096 = vmatprep.subr.mxu0 0.0
    %1097 = vmatpush1.msra.mxu0 0.0
    %1098 = vmatprep.subr.mxu0 0.0
    %1099 = vmatpush1.msra.mxu0 0.0
    %1100 = vmatprep.subr.mxu0 0.0
    %1101 = vmatpush1.msra.mxu0 0.0
    %1102 = vmatprep.subr.mxu0 0.0
    %1103 = vmatpush1.msra.mxu0 0.0
    %1104 = vmatprep.subr.mxu0 0.0
    %1105 = vmatpush1.msra.mxu0 0.0
    %1106 = vmatprep.subr.mxu0 0.0
    %1107 = vmatpush1.msra.mxu0 0.0
    %1108 = vmatprep.subr.mxu0 0.0
    %1109 = vmatpush1.msra.mxu0 0.0
    %1110 = vmatprep.subr.mxu0 0.0
    %1111 = vmatpush1.msra.mxu0 0.0
    %1112 = vmatprep.subr.mxu0 0.0
    %1113 = vmatpush1.msra.mxu0 0.0
    %1114 = vmatprep.subr.mxu0 0.0
    %1115 = vmatpush1.msra.mxu0 0.0
    %1116 = vmatprep.subr.mxu0 0.0
    %1117 = vmatpush1.msra.mxu0 0.0
    %1118 = vmatprep.subr.mxu0 0.0
    %1119 = vmatpush1.msra.mxu0 0.0
    %1120 = vmatprep.subr.mxu0 0.0
    %1121 = vmatpush1.msra.mxu0 0.0
    %1122 = vmatprep.subr.mxu0 0.0
    %1123 = vmatpush1.msra.mxu0 0.0
    %1124 = vmatprep.subr.mxu0 0.0
    %1125 = vmatpush1.msra.mxu0 0.0
    %1126 = vmatprep.subr.mxu0 0.0
    %1127 = vmatpush1.msra.mxu0 0.0
    %1128 = vmatprep.subr.mxu0 0.0
    %1129 = vmatpush1.msra.mxu0 0.0
    %1130 = vmatprep.subr.mxu0 0.0
    %1131 = vmatpush1.msra.mxu0 0.0
    %1132 = vmatprep.subr.mxu0 0.0
    %1133 = vmatpush1.msra.mxu0 0.0
    %1134 = vmatprep.mubr.f32.mxu0 0.0
    %1135 = vmatmul.mubr.f32.gmra.mrb[0].mxu0 %v1068
    %v1136 = vpop.f32.mrb[0].mxu0
    %v1137 = vadd.f32 %v1064, %v1136
    %v1138 = vpop.f32.mrb[0].mxu0
    %1139 = vdwg.mxu0
    %v1140 = vadd.f32 %v1137, %v244
    %s1141 = scalar_lea.vmem [#allocation8], 40
    %1142 = vst [vmem:[%s1141] sm:$0x1f] %v1140
    %s1143 = scalar_lea.vmem [#allocation2], 96
    %v1144 = vld [vmem:[%s1143] sm:$0x1f]
    %s1145 = scalar_lea.vmem [#allocation2], 104
    %v1146 = vld [vmem:[%s1145] sm:$0x1f]
    %v1147 = vsel %vm66, %v1144, 0.0
    %1148 = vadd.xlane.f32.xlu0 %v1147
    %v1149 = vpop.xlane.xlu0 %1148
    %v1150 = vsel %vm66, %v1146, 0.0
    %1151 = vadd.xlane.f32.xlu0 %v1150
    %v1152 = vpop.xlane.xlu0 %1151
    %v1153 = vadd.f32 %v1149, %v1152
    %v1154 = vmul.f32 %v1144, %v1144
    %v1155 = vsel %vm66, %v1154, 0.0
    %1156 = vadd.xlane.f32.xlu0 %v1155
    %v1157 = vpop.xlane.xlu0 %1156
    %v1158 = vmul.f32 %v1146, %v1146
    %v1159 = vsel %vm66, %v1158, 0.0
    %1160 = vadd.xlane.f32.xlu0 %v1159
    %v1161 = vpop.xlane.xlu0 %1160
    %v1162 = vadd.f32 %v1157, %v1161
    %v1163 = vmul.f32 %v1153, 0.015625
    %v1164 = vmul.f32 %v1162, 0.015625
    %v1165 = vmul.f32 %v1163, %v1163
    %v1166 = vsub.f32 %v1164, %v1165
    %v1167 = vadd.f32 %v1166, 1e-05
    %v1168 = vrsqrt.pop %v1167
    %v1169 = vsub.f32 %v1144, %v1163
    %v1170 = vmul.f32 %v1169, %v1168
    %v1171 = vsub.f32 %v1146, %v1163
    %v1172 = vmul.f32 %v1171, %v1168
    %v1174 = vsel %vm93, %v1172, 0
    %1176 = vmatprep.subr.mxu0 0.0
    %1177 = vmatpush1.msra.mxu0 %v58
    %1178 = vmatprep.subr.mxu0 0.0
    %1179 = vmatpush1.msra.mxu0 %v59
    %1180 = vmatprep.subr.mxu0 0.0
    %1181 = vmatpush1.msra.mxu0 %v60
    %1182 = vmatprep.subr.mxu0 0.0
    %1183 = vmatpush1.msra.mxu0 %v61
    %1184 = vmatprep.subr.mxu0 0.0
    %1185 = vmatpush1.msra.mxu0 0.0
    %1186 = vmatprep.subr.mxu0 0.0
    %1187 = vmatpush1.msra.mxu0 0.0
    %1188 = vmatprep.subr.mxu0 0.0
    %1189 = vmatpush1.msra.mxu0 0.0
    %1190 = vmatprep.subr.mxu0 0.0
    %1191 = vmatpush1.msra.mxu0 0.0
    %1192 = vmatprep.subr.mxu0 0.0
    %1193 = vmatpush1.msra.mxu0 0.0
    %1194 = vmatprep.subr.mxu0 0.0
    %1195 = vmatpush1.msra.mxu0 0.0
    %1196 = vmatprep.subr.mxu0 0.0
    %1197 = vmatpush1.msra.mxu0 0.0
    %1198 = vmatprep.subr.mxu0 0.0
    %1199 = vmatpush1.msra.mxu0 0.0
    %1200 = vmatprep.subr.mxu0 0.0
    %1201 = vmatpush1.msra.mxu0 0.0
    %1202 = vmatprep.subr.mxu0 0.0
    %1203 = vmatpush1.msra.mxu0 0.0
    %1204 = vmatprep.subr.mxu0 0.0
    %1205 = vmatpush1.msra.mxu0 0.0
    %1206 = vmatprep.subr.mxu0 0.0
    %1207 = vmatpush1.msra.mxu0 0.0
    %1208 = vmatprep.subr.mxu0 0.0
    %1209 = vmatpush1.msra.mxu0 0.0
    %1210 = vmatprep.subr.mxu0 0.0
    %1211 = vmatpush1.msra.mxu0 0.0
    %1212 = vmatprep.subr.mxu0 0.0
    %1213 = vmatpush1.msra.mxu0 0.0
    %1214 = vmatprep.subr.mxu0 0.0
    %1215 = vmatpush1.msra.mxu0 0.0
    %1216 = vmatprep.subr.mxu0 0.0
    %1217 = vmatpush1.msra.mxu0 0.0
    %1218 = vmatprep.subr.mxu0 0.0
    %1219 = vmatpush1.msra.mxu0 0.0
    %1220 = vmatprep.subr.mxu0 0.0
    %1221 = vmatpush1.msra.mxu0 0.0
    %1222 = vmatprep.subr.mxu0 0.0
    %1223 = vmatpush1.msra.mxu0 0.0
    %1224 = vmatprep.subr.mxu0 0.0
    %1225 = vmatpush1.msra.mxu0 0.0
    %1226 = vmatprep.subr.mxu0 0.0
    %1227 = vmatpush1.msra.mxu0 0.0
    %1228 = vmatprep.subr.mxu0 0.0
    %1229 = vmatpush1.msra.mxu0 0.0
    %1230 = vmatprep.subr.mxu0 0.0
    %1231 = vmatpush1.msra.mxu0 0.0
    %1232 = vmatprep.subr.mxu0 0.0
    %1233 = vmatpush1.msra.mxu0 0.0
    %1234 = vmatprep.subr.mxu0 0.0
    %1235 = vmatpush1.msra.mxu0 0.0
    %1236 = vmatprep.subr.mxu0 0.0
    %1237 = vmatpush1.msra.mxu0 0.0
    %1238 = vmatprep.subr.mxu0 0.0
    %1239 = vmatpush1.msra.mxu0 0.0
    %1240 = vmatprep.mubr.f32.mxu0 0.0
    %1241 = vmatmul.mubr.f32.gmra.mrb[0].mxu0 %v1174
    %v1242 = vpop.f32.mrb[0].mxu0
    %v1243 = vadd.f32 0.0, %v1242
    %v1244 = vpop.f32.mrb[0].mxu0
    %1245 = vdwg.mxu0
    %v1247 = vsel %vm93, %v1170, 0
    %1249 = vmatprep.subr.mxu0 0.0
    %1250 = vmatpush1.msra.mxu0 %v54
    %1251 = vmatprep.subr.mxu0 0.0
    %1252 = vmatpush1.msra.mxu0 %v55
    %1253 = vmatprep.subr.mxu0 0.0
    %1254 = vmatpush1.msra.mxu0 %v56
    %1255 = vmatprep.subr.mxu0 0.0
    %1256 = vmatpush1.msra.mxu0 %v57
    %1257 = vmatprep.subr.mxu0 0.0
    %1258 = vmatpush1.msra.mxu0 0.0
    %1259 = vmatprep.subr.mxu0 0.0
    %1260 = vmatpush1.msra.mxu0 0.0
    %1261 = vmatprep.subr.mxu0 0.0
    %1262 = vmatpush1.msra.mxu0 0.0
    %1263 = vmatprep.subr.mxu0 0.0
    %1264 = vmatpush1.msra.mxu0 0.0
    %1265 = vmatprep.subr.mxu0 0.0
    %1266 = vmatpush1.msra.mxu0 0.0
    %1267 = vmatprep.subr.mxu0 0.0
    %1268 = vmatpush1.msra.mxu0 0.0
    %1269 = vmatprep.subr.mxu0 0.0
    %1270 = vmatpush1.msra.mxu0 0.0
    %1271 = vmatprep.subr.mxu0 0.0
    %1272 = vmatpush1.msra.mxu0 0.0
    %1273 = vmatprep.subr.mxu0 0.0
    %1274 = vmatpush1.msra.mxu0 0.0
    %1275 = vmatprep.subr.mxu0 0.0
    %1276 = vmatpush1.msra.mxu0 0.0
    %1277 = vmatprep.subr.mxu0 0.0
    %1278 = vmatpush1.msra.mxu0 0.0
    %1279 = vmatprep.subr.mxu0 0.0
    %1280 = vmatpush1.msra.mxu0 0.0
    %1281 = vmatprep.subr.mxu0 0.0
    %1282 = vmatpush1.msra.mxu0 0.0
    %1283 = vmatprep.subr.mxu0 0.0
    %1284 = vmatpush1.msra.mxu0 0.0
    %1285 = vmatprep.subr.mxu0 0.0
    %1286 = vmatpush1.msra.mxu0 0.0
    %1287 = vmatprep.subr.mxu0 0.0
    %1288 = vmatpush1.msra.mxu0 0.0
    %1289 = vmatprep.subr.mxu0 0.0
    %1290 = vmatpush1.msra.mxu0 0.0
    %1291 = vmatprep.subr.mxu0 0.0
    %1292 = vmatpush1.msra.mxu0 0.0
    %1293 = vmatprep.subr.mxu0 0.0
    %1294 = vmatpush1.msra.mxu0 0.0
    %1295 = vmatprep.subr.mxu0 0.0
    %1296 = vmatpush1.msra.mxu0 0.0
    %1297 = vmatprep.subr.mxu0 0.0
    %1298 = vmatpush1.msra.mxu0 0.0
    %1299 = vmatprep.subr.mxu0 0.0
    %1300 = vmatpush1.msra.mxu0 0.0
    %1301 = vmatprep.subr.mxu0 0.0
    %1302 = vmatpush1.msra.mxu0 0.0
    %1303 = vmatprep.subr.mxu0 0.0
    %1304 = vmatpush1.msra.mxu0 0.0
    %1305 = vmatprep.subr.mxu0 0.0
    %1306 = vmatpush1.msra.mxu0 0.0
    %1307 = vmatprep.subr.mxu0 0.0
    %1308 = vmatpush1.msra.mxu0 0.0
    %1309 = vmatprep.subr.mxu0 0.0
    %1310 = vmatpush1.msra.mxu0 0.0
    %1311 = vmatprep.subr.mxu0 0.0
    %1312 = vmatpush1.msra.mxu0 0.0
    %1313 = vmatprep.mubr.f32.mxu0 0.0
    %1314 = vmatmul.mubr.f32.gmra.mrb[0].mxu0 %v1247
    %v1315 = vpop.f32.mrb[0].mxu0
    %v1316 = vadd.f32 %v1243, %v1315
    %v1317 = vpop.f32.mrb[0].mxu0
    %1318 = vdwg.mxu0
    %v1319 = vadd.f32 %v1316, %v244
    %s1320 = scalar_lea.vmem [#allocation8], 48
    %1321 = vst [vmem:[%s1320] sm:$0x1f] %v1319
    %s1322 = scalar_lea.vmem [#allocation2], 112
    %v1323 = vld [vmem:[%s1322] sm:$0x1f]
    %s1324 = scalar_lea.vmem [#allocation2], 120
    %v1325 = vld [vmem:[%s1324] sm:$0x1f]
    %v1326 = vsel %vm66, %v1323, 0.0
    %1327 = vadd.xlane.f32.xlu0 %v1326
    %v1328 = vpop.xlane.xlu0 %1327
    %v1329 = vsel %vm66, %v1325, 0.0
    %1330 = vadd.xlane.f32.xlu0 %v1329
    %v1331 = vpop.xlane.xlu0 %1330
    %v1332 = vadd.f32 %v1328, %v1331
    %v1333 = vmul.f32 %v1323, %v1323
    %v1334 = vsel %vm66, %v1333, 0.0
    %1335 = vadd.xlane.f32.xlu0 %v1334
    %v1336 = vpop.xlane.xlu0 %1335
    %v1337 = vmul.f32 %v1325, %v1325
    %v1338 = vsel %vm66, %v1337, 0.0
    %1339 = vadd.xlane.f32.xlu0 %v1338
    %v1340 = vpop.xlane.xlu0 %1339
    %v1341 = vadd.f32 %v1336, %v1340
    %v1342 = vmul.f32 %v1332, 0.015625
    %v1343 = vmul.f32 %v1341, 0.015625
    %v1344 = vmul.f32 %v1342, %v1342
    %v1345 = vsub.f32 %v1343, %v1344
    %v1346 = vadd.f32 %v1345, 1e-05
    %v1347 = vrsqrt.pop %v1346
    %v1348 = vsub.f32 %v1323, %v1342
    %v1349 = vmul.f32 %v1348, %v1347
    %v1350 = vsub.f32 %v1325, %v1342
    %v1351 = vmul.f32 %v1350, %v1347
    %v1353 = vsel %vm93, %v1351, 0
    %1355 = vmatprep.subr.mxu0 0.0
    %1356 = vmatpush1.msra.mxu0 %v58
    %1357 = vmatprep.subr.mxu0 0.0
    %1358 = vmatpush1.msra.mxu0 %v59
    %1359 = vmatprep.subr.mxu0 0.0
    %1360 = vmatpush1.msra.mxu0 %v60
    %1361 = vmatprep.subr.mxu0 0.0
    %1362 = vmatpush1.msra.mxu0 %v61
    %1363 = vmatprep.subr.mxu0 0.0
    %1364 = vmatpush1.msra.mxu0 0.0
    %1365 = vmatprep.subr.mxu0 0.0
    %1366 = vmatpush1.msra.mxu0 0.0
    %1367 = vmatprep.subr.mxu0 0.0
    %1368 = vmatpush1.msra.mxu0 0.0
    %1369 = vmatprep.subr.mxu0 0.0
    %1370 = vmatpush1.msra.mxu0 0.0
    %1371 = vmatprep.subr.mxu0 0.0
    %1372 = vmatpush1.msra.mxu0 0.0
    %1373 = vmatprep.subr.mxu0 0.0
    %1374 = vmatpush1.msra.mxu0 0.0
    %1375 = vmatprep.subr.mxu0 0.0
    %1376 = vmatpush1.msra.mxu0 0.0
    %1377 = vmatprep.subr.mxu0 0.0
    %1378 = vmatpush1.msra.mxu0 0.0
    %1379 = vmatprep.subr.mxu0 0.0
    %1380 = vmatpush1.msra.mxu0 0.0
    %1381 = vmatprep.subr.mxu0 0.0
    %1382 = vmatpush1.msra.mxu0 0.0
    %1383 = vmatprep.subr.mxu0 0.0
    %1384 = vmatpush1.msra.mxu0 0.0
    %1385 = vmatprep.subr.mxu0 0.0
    %1386 = vmatpush1.msra.mxu0 0.0
    %1387 = vmatprep.subr.mxu0 0.0
    %1388 = vmatpush1.msra.mxu0 0.0
    %1389 = vmatprep.subr.mxu0 0.0
    %1390 = vmatpush1.msra.mxu0 0.0
    %1391 = vmatprep.subr.mxu0 0.0
    %1392 = vmatpush1.msra.mxu0 0.0
    %1393 = vmatprep.subr.mxu0 0.0
    %1394 = vmatpush1.msra.mxu0 0.0
    %1395 = vmatprep.subr.mxu0 0.0
    %1396 = vmatpush1.msra.mxu0 0.0
    %1397 = vmatprep.subr.mxu0 0.0
    %1398 = vmatpush1.msra.mxu0 0.0
    %1399 = vmatprep.subr.mxu0 0.0
    %1400 = vmatpush1.msra.mxu0 0.0
    %1401 = vmatprep.subr.mxu0 0.0
    %1402 = vmatpush1.msra.mxu0 0.0
    %1403 = vmatprep.subr.mxu0 0.0
    %1404 = vmatpush1.msra.mxu0 0.0
    %1405 = vmatprep.subr.mxu0 0.0
    %1406 = vmatpush1.msra.mxu0 0.0
    %1407 = vmatprep.subr.mxu0 0.0
    %1408 = vmatpush1.msra.mxu0 0.0
    %1409 = vmatprep.subr.mxu0 0.0
    %1410 = vmatpush1.msra.mxu0 0.0
    %1411 = vmatprep.subr.mxu0 0.0
    %1412 = vmatpush1.msra.mxu0 0.0
    %1413 = vmatprep.subr.mxu0 0.0
    %1414 = vmatpush1.msra.mxu0 0.0
    %1415 = vmatprep.subr.mxu0 0.0
    %1416 = vmatpush1.msra.mxu0 0.0
    %1417 = vmatprep.subr.mxu0 0.0
    %1418 = vmatpush1.msra.mxu0 0.0
    %1419 = vmatprep.mubr.f32.mxu0 0.0
    %1420 = vmatmul.mubr.f32.gmra.mrb[0].mxu0 %v1353
    %v1421 = vpop.f32.mrb[0].mxu0
    %v1422 = vadd.f32 0.0, %v1421
    %v1423 = vpop.f32.mrb[0].mxu0
    %1424 = vdwg.mxu0
    %v1426 = vsel %vm93, %v1349, 0
    %1428 = vmatprep.subr.mxu0 0.0
    %1429 = vmatpush1.msra.mxu0 %v54
    %1430 = vmatprep.subr.mxu0 0.0
    %1431 = vmatpush1.msra.mxu0 %v55
    %1432 = vmatprep.subr.mxu0 0.0
    %1433 = vmatpush1.msra.mxu0 %v56
    %1434 = vmatprep.subr.mxu0 0.0
    %1435 = vmatpush1.msra.mxu0 %v57
    %1436 = vmatprep.subr.mxu0 0.0
    %1437 = vmatpush1.msra.mxu0 0.0
    %1438 = vmatprep.subr.mxu0 0.0
    %1439 = vmatpush1.msra.mxu0 0.0
    %1440 = vmatprep.subr.mxu0 0.0
    %1441 = vmatpush1.msra.mxu0 0.0
    %1442 = vmatprep.subr.mxu0 0.0
    %1443 = vmatpush1.msra.mxu0 0.0
    %1444 = vmatprep.subr.mxu0 0.0
    %1445 = vmatpush1.msra.mxu0 0.0
    %1446 = vmatprep.subr.mxu0 0.0
    %1447 = vmatpush1.msra.mxu0 0.0
    %1448 = vmatprep.subr.mxu0 0.0
    %1449 = vmatpush1.msra.mxu0 0.0
    %1450 = vmatprep.subr.mxu0 0.0
    %1451 = vmatpush1.msra.mxu0 0.0
    %1452 = vmatprep.subr.mxu0 0.0
    %1453 = vmatpush1.msra.mxu0 0.0
    %1454 = vmatprep.subr.mxu0 0.0
    %1455 = vmatpush1.msra.mxu0 0.0
    %1456 = vmatprep.subr.mxu0 0.0
    %1457 = vmatpush1.msra.mxu0 0.0
    %1458 = vmatprep.subr.mxu0 0.0
    %1459 = vmatpush1.msra.mxu0 0.0
    %1460 = vmatprep.subr.mxu0 0.0
    %1461 = vmatpush1.msra.mxu0 0.0
    %1462 = vmatprep.subr.mxu0 0.0
    %1463 = vmatpush1.msra.mxu0 0.0
    %1464 = vmatprep.subr.mxu0 0.0
    %1465 = vmatpush1.msra.mxu0 0.0
    %1466 = vmatprep.subr.mxu0 0.0
    %1467 = vmatpush1.msra.mxu0 0.0
    %1468 = vmatprep.subr.mxu0 0.0
    %1469 = vmatpush1.msra.mxu0 0.0
    %1470 = vmatprep.subr.mxu0 0.0
    %1471 = vmatpush1.msra.mxu0 0.0
    %1472 = vmatprep.subr.mxu0 0.0
    %1473 = vmatpush1.msra.mxu0 0.0
    %1474 = vmatprep.subr.mxu0 0.0
    %1475 = vmatpush1.msra.mxu0 0.0
    %1476 = vmatprep.subr.mxu0 0.0
    %1477 = vmatpush1.msra.mxu0 0.0
    %1478 = vmatprep.subr.mxu0 0.0
    %1479 = vmatpush1.msra.mxu0 0.0
    %1480 = vmatprep.subr.mxu0 0.0
    %1481 = vmatpush1.msra.mxu0 0.0
    %1482 = vmatprep.subr.mxu0 0.0
    %1483 = vmatpush1.msra.mxu0 0.0
    %1484 = vmatprep.subr.mxu0 0.0
    %1485 = vmatpush1.msra.mxu0 0.0
    %1486 = vmatprep.subr.mxu0 0.0
    %1487 = vmatpush1.msra.mxu0 0.0
    %1488 = vmatprep.subr.mxu0 0.0
    %1489 = vmatpush1.msra.mxu0 0.0
    %1490 = vmatprep.subr.mxu0 0.0
    %1491 = vmatpush1.msra.mxu0 0.0
    %1492 = vmatprep.mubr.f32.mxu0 0.0
    %1493 = vmatmul.mubr.f32.gmra.mrb[0].mxu0 %v1426
    %v1494 = vpop.f32.mrb[0].mxu0
    %v1495 = vadd.f32 %v1422, %v1494
    %v1496 = vpop.f32.mrb[0].mxu0
    %1497 = vdwg.mxu0
    %v1498 = vadd.f32 %v1495, %v244
    %s1499 = scalar_lea.vmem [#allocation8], 56
    %1500 = vst [vmem:[%s1499] sm:$0x1f] %v1498
    %s1501 = scalar_lea.vmem [#allocation2], 128
    %v1502 = vld [vmem:[%s1501] sm:$0x1f]
    %s1503 = scalar_lea.vmem [#allocation2], 136
    %v1504 = vld [vmem:[%s1503] sm:$0x1f]
    %v1505 = vsel %vm66, %v1502, 0.0
    %1506 = vadd.xlane.f32.xlu0 %v1505
    %v1507 = vpop.xlane.xlu0 %1506
    %v1508 = vsel %vm66, %v1504, 0.0
    %1509 = vadd.xlane.f32.xlu0 %v1508
    %v1510 = vpop.xlane.xlu0 %1509
    %v1511 = vadd.f32 %v1507, %v1510
    %v1512 = vmul.f32 %v1502, %v1502
    %v1513 = vsel %vm66, %v1512, 0.0
    %1514 = vadd.xlane.f32.xlu0 %v1513
    %v1515 = vpop.xlane.xlu0 %1514
    %v1516 = vmul.f32 %v1504, %v1504
    %v1517 = vsel %vm66, %v1516, 0.0
    %1518 = vadd.xlane.f32.xlu0 %v1517
    %v1519 = vpop.xlane.xlu0 %1518
    %v1520 = vadd.f32 %v1515, %v1519
    %v1521 = vmul.f32 %v1511, 0.015625
    %v1522 = vmul.f32 %v1520, 0.015625
    %v1523 = vmul.f32 %v1521, %v1521
    %v1524 = vsub.f32 %v1522, %v1523
    %v1525 = vadd.f32 %v1524, 1e-05
    %v1526 = vrsqrt.pop %v1525
    %v1527 = vsub.f32 %v1502, %v1521
    %v1528 = vmul.f32 %v1527, %v1526
    %v1529 = vsub.f32 %v1504, %v1521
    %v1530 = vmul.f32 %v1529, %v1526
    %v1532 = vsel %vm93, %v1530, 0
    %1534 = vmatprep.subr.mxu0 0.0
    %1535 = vmatpush1.msra.mxu0 %v58
    %1536 = vmatprep.subr.mxu0 0.0
    %1537 = vmatpush1.msra.mxu0 %v59
    %1538 = vmatprep.subr.mxu0 0.0
    %1539 = vmatpush1.msra.mxu0 %v60
    %1540 = vmatprep.subr.mxu0 0.0
    %1541 = vmatpush1.msra.mxu0 %v61
    %1542 = vmatprep.subr.mxu0 0.0
    %1543 = vmatpush1.msra.mxu0 0.0
    %1544 = vmatprep.subr.mxu0 0.0
    %1545 = vmatpush1.msra.mxu0 0.0
    %1546 = vmatprep.subr.mxu0 0.0
    %1547 = vmatpush1.msra.mxu0 0.0
    %1548 = vmatprep.subr.mxu0 0.0
    %1549 = vmatpush1.msra.mxu0 0.0
    %1550 = vmatprep.subr.mxu0 0.0
    %1551 = vmatpush1.msra.mxu0 0.0
    %1552 = vmatprep.subr.mxu0 0.0
    %1553 = vmatpush1.msra.mxu0 0.0
    %1554 = vmatprep.subr.mxu0 0.0
    %1555 = vmatpush1.msra.mxu0 0.0
    %1556 = vmatprep.subr.mxu0 0.0
    %1557 = vmatpush1.msra.mxu0 0.0
    %1558 = vmatprep.subr.mxu0 0.0
    %1559 = vmatpush1.msra.mxu0 0.0
    %1560 = vmatprep.subr.mxu0 0.0
    %1561 = vmatpush1.msra.mxu0 0.0
    %1562 = vmatprep.subr.mxu0 0.0
    %1563 = vmatpush1.msra.mxu0 0.0
    %1564 = vmatprep.subr.mxu0 0.0
    %1565 = vmatpush1.msra.mxu0 0.0
    %1566 = vmatprep.subr.mxu0 0.0
    %1567 = vmatpush1.msra.mxu0 0.0
    %1568 = vmatprep.subr.mxu0 0.0
    %1569 = vmatpush1.msra.mxu0 0.0
    %1570 = vmatprep.subr.mxu0 0.0
    %1571 = vmatpush1.msra.mxu0 0.0
    %1572 = vmatprep.subr.mxu0 0.0
    %1573 = vmatpush1.msra.mxu0 0.0
    %1574 = vmatprep.subr.mxu0 0.0
    %1575 = vmatpush1.msra.mxu0 0.0
    %1576 = vmatprep.subr.mxu0 0.0
    %1577 = vmatpush1.msra.mxu0 0.0
    %1578 = vmatprep.subr.mxu0 0.0
    %1579 = vmatpush1.msra.mxu0 0.0
    %1580 = vmatprep.subr.mxu0 0.0
    %1581 = vmatpush1.msra.mxu0 0.0
    %1582 = vmatprep.subr.mxu0 0.0
    %1583 = vmatpush1.msra.mxu0 0.0
    %1584 = vmatprep.subr.mxu0 0.0
    %1585 = vmatpush1.msra.mxu0 0.0
    %1586 = vmatprep.subr.mxu0 0.0
    %1587 = vmatpush1.msra.mxu0 0.0
    %1588 = vmatprep.subr.mxu0 0.0
    %1589 = vmatpush1.msra.mxu0 0.0
    %1590 = vmatprep.subr.mxu0 0.0
    %1591 = vmatpush1.msra.mxu0 0.0
    %1592 = vmatprep.subr.mxu0 0.0
    %1593 = vmatpush1.msra.mxu0 0.0
    %1594 = vmatprep.subr.mxu0 0.0
    %1595 = vmatpush1.msra.mxu0 0.0
    %1596 = vmatprep.subr.mxu0 0.0
    %1597 = vmatpush1.msra.mxu0 0.0
    %1598 = vmatprep.mubr.f32.mxu0 0.0
    %1599 = vmatmul.mubr.f32.gmra.mrb[0].mxu0 %v1532
    %v1600 = vpop.f32.mrb[0].mxu0
    %v1601 = vadd.f32 0.0, %v1600
    %v1602 = vpop.f32.mrb[0].mxu0
    %1603 = vdwg.mxu0
    %v1605 = vsel %vm93, %v1528, 0
    %1607 = vmatprep.subr.mxu0 0.0
    %1608 = vmatpush1.msra.mxu0 %v54
    %1609 = vmatprep.subr.mxu0 0.0
    %1610 = vmatpush1.msra.mxu0 %v55
    %1611 = vmatprep.subr.mxu0 0.0
    %1612 = vmatpush1.msra.mxu0 %v56
    %1613 = vmatprep.subr.mxu0 0.0
    %1614 = vmatpush1.msra.mxu0 %v57
    %1615 = vmatprep.subr.mxu0 0.0
    %1616 = vmatpush1.msra.mxu0 0.0
    %1617 = vmatprep.subr.mxu0 0.0
    %1618 = vmatpush1.msra.mxu0 0.0
    %1619 = vmatprep.subr.mxu0 0.0
    %1620 = vmatpush1.msra.mxu0 0.0
    %1621 = vmatprep.subr.mxu0 0.0
    %1622 = vmatpush1.msra.mxu0 0.0
    %1623 = vmatprep.subr.mxu0 0.0
    %1624 = vmatpush1.msra.mxu0 0.0
    %1625 = vmatprep.subr.mxu0 0.0
    %1626 = vmatpush1.msra.mxu0 0.0
    %1627 = vmatprep.subr.mxu0 0.0
    %1628 = vmatpush1.msra.mxu0 0.0
    %1629 = vmatprep.subr.mxu0 0.0
    %1630 = vmatpush1.msra.mxu0 0.0
    %1631 = vmatprep.subr.mxu0 0.0
    %1632 = vmatpush1.msra.mxu0 0.0
    %1633 = vmatprep.subr.mxu0 0.0
    %1634 = vmatpush1.msra.mxu0 0.0
    %1635 = vmatprep.subr.mxu0 0.0
    %1636 = vmatpush1.msra.mxu0 0.0
    %1637 = vmatprep.subr.mxu0 0.0
    %1638 = vmatpush1.msra.mxu0 0.0
    %1639 = vmatprep.subr.mxu0 0.0
    %1640 = vmatpush1.msra.mxu0 0.0
    %1641 = vmatprep.subr.mxu0 0.0
    %1642 = vmatpush1.msra.mxu0 0.0
    %1643 = vmatprep.subr.mxu0 0.0
    %1644 = vmatpush1.msra.mxu0 0.0
    %1645 = vmatprep.subr.mxu0 0.0
    %1646 = vmatpush1.msra.mxu0 0.0
    %1647 = vmatprep.subr.mxu0 0.0
    %1648 = vmatpush1.msra.mxu0 0.0
    %1649 = vmatprep.subr.mxu0 0.0
    %1650 = vmatpush1.msra.mxu0 0.0
    %1651 = vmatprep.subr.mxu0 0.0
    %1652 = vmatpush1.msra.mxu0 0.0
    %1653 = vmatprep.subr.mxu0 0.0
    %1654 = vmatpush1.msra.mxu0 0.0
    %1655 = vmatprep.subr.mxu0 0.0
    %1656 = vmatpush1.msra.mxu0 0.0
    %1657 = vmatprep.subr.mxu0 0.0
    %1658 = vmatpush1.msra.mxu0 0.0
    %1659 = vmatprep.subr.mxu0 0.0
    %1660 = vmatpush1.msra.mxu0 0.0
    %1661 = vmatprep.subr.mxu0 0.0
    %1662 = vmatpush1.msra.mxu0 0.0
    %1663 = vmatprep.subr.mxu0 0.0
    %1664 = vmatpush1.msra.mxu0 0.0
    %1665 = vmatprep.subr.mxu0 0.0
    %1666 = vmatpush1.msra.mxu0 0.0
    %1667 = vmatprep.subr.mxu0 0.0
    %1668 = vmatpush1.msra.mxu0 0.0
    %1669 = vmatprep.subr.mxu0 0.0
    %1670 = vmatpush1.msra.mxu0 0.0
    %1671 = vmatprep.mubr.f32.mxu0 0.0
    %1672 = vmatmul.mubr.f32.gmra.mrb[0].mxu0 %v1605
    %v1673 = vpop.f32.mrb[0].mxu0
    %v1674 = vadd.f32 %v1601, %v1673
    %v1675 = vpop.f32.mrb[0].mxu0
    %1676 = vdwg.mxu0
    %v1677 = vadd.f32 %v1674, %v244
    %s1678 = scalar_lea.vmem [#allocation8], 64
    %1679 = vst [vmem:[%s1678] sm:$0x1f] %v1677
    %s1680 = scalar_lea.vmem [#allocation2], 144
    %v1681 = vld [vmem:[%s1680] sm:$0x1f]
    %s1682 = scalar_lea.vmem [#allocation2], 152
    %v1683 = vld [vmem:[%s1682] sm:$0x1f]
    %v1684 = vsel %vm66, %v1681, 0.0
    %1685 = vadd.xlane.f32.xlu0 %v1684
    %v1686 = vpop.xlane.xlu0 %1685
    %v1687 = vsel %vm66, %v1683, 0.0
    %1688 = vadd.xlane.f32.xlu0 %v1687
    %v1689 = vpop.xlane.xlu0 %1688
    %v1690 = vadd.f32 %v1686, %v1689
    %v1691 = vmul.f32 %v1681, %v1681
    %v1692 = vsel %vm66, %v1691, 0.0
    %1693 = vadd.xlane.f32.xlu0 %v1692
    %v1694 = vpop.xlane.xlu0 %1693
    %v1695 = vmul.f32 %v1683, %v1683
    %v1696 = vsel %vm66, %v1695, 0.0
    %1697 = vadd.xlane.f32.xlu0 %v1696
    %v1698 = vpop.xlane.xlu0 %1697
    %v1699 = vadd.f32 %v1694, %v1698
    %v1700 = vmul.f32 %v1690, 0.015625
    %v1701 = vmul.f32 %v1699, 0.015625
    %v1702 = vmul.f32 %v1700, %v1700
    %v1703 = vsub.f32 %v1701, %v1702
    %v1704 = vadd.f32 %v1703, 1e-05
    %v1705 = vrsqrt.pop %v1704
    %v1706 = vsub.f32 %v1681, %v1700
    %v1707 = vmul.f32 %v1706, %v1705
    %v1708 = vsub.f32 %v1683, %v1700
    %v1709 = vmul.f32 %v1708, %v1705
    %v1711 = vsel %vm93, %v1709, 0
    %1713 = vmatprep.subr.mxu0 0.0
    %1714 = vmatpush1.msra.mxu0 %v58
    %1715 = vmatprep.subr.mxu0 0.0
    %1716 = vmatpush1.msra.mxu0 %v59
    %1717 = vmatprep.subr.mxu0 0.0
    %1718 = vmatpush1.msra.mxu0 %v60
    %1719 = vmatprep.subr.mxu0 0.0
    %1720 = vmatpush1.msra.mxu0 %v61
    %1721 = vmatprep.subr.mxu0 0.0
    %1722 = vmatpush1.msra.mxu0 0.0
    %1723 = vmatprep.subr.mxu0 0.0
    %1724 = vmatpush1.msra.mxu0 0.0
    %1725 = vmatprep.subr.mxu0 0.0
    %1726 = vmatpush1.msra.mxu0 0.0
    %1727 = vmatprep.subr.mxu0 0.0
    %1728 = vmatpush1.msra.mxu0 0.0
    %1729 = vmatprep.subr.mxu0 0.0
    %1730 = vmatpush1.msra.mxu0 0.0
    %1731 = vmatprep.subr.mxu0 0.0
    %1732 = vmatpush1.msra.mxu0 0.0
    %1733 = vmatprep.subr.mxu0 0.0
    %1734 = vmatpush1.msra.mxu0 0.0
    %1735 = vmatprep.subr.mxu0 0.0
    %1736 = vmatpush1.msra.mxu0 0.0
    %1737 = vmatprep.subr.mxu0 0.0
    %1738 = vmatpush1.msra.mxu0 0.0
    %1739 = vmatprep.subr.mxu0 0.0
    %1740 = vmatpush1.msra.mxu0 0.0
    %1741 = vmatprep.subr.mxu0 0.0
    %1742 = vmatpush1.msra.mxu0 0.0
    %1743 = vmatprep.subr.mxu0 0.0
    %1744 = vmatpush1.msra.mxu0 0.0
    %1745 = vmatprep.subr.mxu0 0.0
    %1746 = vmatpush1.msra.mxu0 0.0
    %1747 = vmatprep.subr.mxu0 0.0
    %1748 = vmatpush1.msra.mxu0 0.0
    %1749 = vmatprep.subr.mxu0 0.0
    %1750 = vmatpush1.msra.mxu0 0.0
    %1751 = vmatprep.subr.mxu0 0.0
    %1752 = vmatpush1.msra.mxu0 0.0
    %1753 = vmatprep.subr.mxu0 0.0
    %1754 = vmatpush1.msra.mxu0 0.0
    %1755 = vmatprep.subr.mxu0 0.0
    %1756 = vmatpush1.msra.mxu0 0.0
    %1757 = vmatprep.subr.mxu0 0.0
    %1758 = vmatpush1.msra.mxu0 0.0
    %1759 = vmatprep.subr.mxu0 0.0
    %1760 = vmatpush1.msra.mxu0 0.0
    %1761 = vmatprep.subr.mxu0 0.0
    %1762 = vmatpush1.msra.mxu0 0.0
    %1763 = vmatprep.subr.mxu0 0.0
    %1764 = vmatpush1.msra.mxu0 0.0
    %1765 = vmatprep.subr.mxu0 0.0
    %1766 = vmatpush1.msra.mxu0 0.0
    %1767 = vmatprep.subr.mxu0 0.0
    %1768 = vmatpush1.msra.mxu0 0.0
    %1769 = vmatprep.subr.mxu0 0.0
    %1770 = vmatpush1.msra.mxu0 0.0
    %1771 = vmatprep.subr.mxu0 0.0
    %1772 = vmatpush1.msra.mxu0 0.0
    %1773 = vmatprep.subr.mxu0 0.0
    %1774 = vmatpush1.msra.mxu0 0.0
    %1775 = vmatprep.subr.mxu0 0.0
    %1776 = vmatpush1.msra.mxu0 0.0
    %1777 = vmatprep.mubr.f32.mxu0 0.0
    %1778 = vmatmul.mubr.f32.gmra.mrb[0].mxu0 %v1711
    %v1779 = vpop.f32.mrb[0].mxu0
    %v1780 = vadd.f32 0.0, %v1779
    %v1781 = vpop.f32.mrb[0].mxu0
    %1782 = vdwg.mxu0
    %v1784 = vsel %vm93, %v1707, 0
    %1786 = vmatprep.subr.mxu0 0.0
    %1787 = vmatpush1.msra.mxu0 %v54
    %1788 = vmatprep.subr.mxu0 0.0
    %1789 = vmatpush1.msra.mxu0 %v55
    %1790 = vmatprep.subr.mxu0 0.0
    %1791 = vmatpush1.msra.mxu0 %v56
    %1792 = vmatprep.subr.mxu0 0.0
    %1793 = vmatpush1.msra.mxu0 %v57
    %1794 = vmatprep.subr.mxu0 0.0
    %1795 = vmatpush1.msra.mxu0 0.0
    %1796 = vmatprep.subr.mxu0 0.0
    %1797 = vmatpush1.msra.mxu0 0.0
    %1798 = vmatprep.subr.mxu0 0.0
    %1799 = vmatpush1.msra.mxu0 0.0
    %1800 = vmatprep.subr.mxu0 0.0
    %1801 = vmatpush1.msra.mxu0 0.0
    %1802 = vmatprep.subr.mxu0 0.0
    %1803 = vmatpush1.msra.mxu0 0.0
    %1804 = vmatprep.subr.mxu0 0.0
    %1805 = vmatpush1.msra.mxu0 0.0
    %1806 = vmatprep.subr.mxu0 0.0
    %1807 = vmatpush1.msra.mxu0 0.0
    %1808 = vmatprep.subr.mxu0 0.0
    %1809 = vmatpush1.msra.mxu0 0.0
    %1810 = vmatprep.subr.mxu0 0.0
    %1811 = vmatpush1.msra.mxu0 0.0
    %1812 = vmatprep.subr.mxu0 0.0
    %1813 = vmatpush1.msra.mxu0 0.0
    %1814 = vmatprep.subr.mxu0 0.0
    %1815 = vmatpush1.msra.mxu0 0.0
    %1816 = vmatprep.subr.mxu0 0.0
    %1817 = vmatpush1.msra.mxu0 0.0
    %1818 = vmatprep.subr.mxu0 0.0
    %1819 = vmatpush1.msra.mxu0 0.0
    %1820 = vmatprep.subr.mxu0 0.0
    %1821 = vmatpush1.msra.mxu0 0.0
    %1822 = vmatprep.subr.mxu0 0.0
    %1823 = vmatpush1.msra.mxu0 0.0
    %1824 = vmatprep.subr.mxu0 0.0
    %1825 = vmatpush1.msra.mxu0 0.0
    %1826 = vmatprep.subr.mxu0 0.0
    %1827 = vmatpush1.msra.mxu0 0.0
    %1828 = vmatprep.subr.mxu0 0.0
    %1829 = vmatpush1.msra.mxu0 0.0
    %1830 = vmatprep.subr.mxu0 0.0
    %1831 = vmatpush1.msra.mxu0 0.0
    %1832 = vmatprep.subr.mxu0 0.0
    %1833 = vmatpush1.msra.mxu0 0.0
    %1834 = vmatprep.subr.mxu0 0.0
    %1835 = vmatpush1.msra.mxu0 0.0
    %1836 = vmatprep.subr.mxu0 0.0
    %1837 = vmatpush1.msra.mxu0 0.0
    %1838 = vmatprep.subr.mxu0 0.0
    %1839 = vmatpush1.msra.mxu0 0.0
    %1840 = vmatprep.subr.mxu0 0.0
    %1841 = vmatpush1.msra.mxu0 0.0
    %1842 = vmatprep.subr.mxu0 0.0
    %1843 = vmatpush1.msra.mxu0 0.0
    %1844 = vmatprep.subr.mxu0 0.0
    %1845 = vmatpush1.msra.mxu0 0.0
    %1846 = vmatprep.subr.mxu0 0.0
    %1847 = vmatpush1.msra.mxu0 0.0
    %1848 = vmatprep.subr.mxu0 0.0
    %1849 = vmatpush1.msra.mxu0 0.0
    %1850 = vmatprep.mubr.f32.mxu0 0.0
    %1851 = vmatmul.mubr.f32.gmra.mrb[0].mxu0 %v1784
    %v1852 = vpop.f32.mrb[0].mxu0
    %v1853 = vadd.f32 %v1780, %v1852
    %v1854 = vpop.f32.mrb[0].mxu0
    %1855 = vdwg.mxu0
    %v1856 = vadd.f32 %v1853, %v244
    %s1857 = scalar_lea.vmem [#allocation8], 72
    %1858 = vst [vmem:[%s1857] sm:$0x1f] %v1856
    %s1859 = scalar_lea.vmem [#allocation2], 160
    %v1860 = vld [vmem:[%s1859] sm:$0x1f]
    %s1861 = scalar_lea.vmem [#allocation2], 168
    %v1862 = vld [vmem:[%s1861] sm:$0x1f]
    %v1863 = vsel %vm66, %v1860, 0.0
    %1864 = vadd.xlane.f32.xlu0 %v1863
    %v1865 = vpop.xlane.xlu0 %1864
    %v1866 = vsel %vm66, %v1862, 0.0
    %1867 = vadd.xlane.f32.xlu0 %v1866
    %v1868 = vpop.xlane.xlu0 %1867
    %v1869 = vadd.f32 %v1865, %v1868
    %v1870 = vmul.f32 %v1860, %v1860
    %v1871 = vsel %vm66, %v1870, 0.0
    %1872 = vadd.xlane.f32.xlu0 %v1871
    %v1873 = vpop.xlane.xlu0 %1872
    %v1874 = vmul.f32 %v1862, %v1862
    %v1875 = vsel %vm66, %v1874, 0.0
    %1876 = vadd.xlane.f32.xlu0 %v1875
    %v1877 = vpop.xlane.xlu0 %1876
    %v1878 = vadd.f32 %v1873, %v1877
    %v1879 = vmul.f32 %v1869, 0.015625
    %v1880 = vmul.f32 %v1878, 0.015625
    %v1881 = vmul.f32 %v1879, %v1879
    %v1882 = vsub.f32 %v1880, %v1881
    %v1883 = vadd.f32 %v1882, 1e-05
    %v1884 = vrsqrt.pop %v1883
    %v1885 = vsub.f32 %v1860, %v1879
    %v1886 = vmul.f32 %v1885, %v1884
    %v1887 = vsub.f32 %v1862, %v1879
    %v1888 = vmul.f32 %v1887, %v1884
    %v1890 = vsel %vm93, %v1888, 0
    %1892 = vmatprep.subr.mxu0 0.0
    %1893 = vmatpush1.msra.mxu0 %v58
    %1894 = vmatprep.subr.mxu0 0.0
    %1895 = vmatpush1.msra.mxu0 %v59
    %1896 = vmatprep.subr.mxu0 0.0
    %1897 = vmatpush1.msra.mxu0 %v60
    %1898 = vmatprep.subr.mxu0 0.0
    %1899 = vmatpush1.msra.mxu0 %v61
    %1900 = vmatprep.subr.mxu0 0.0
    %1901 = vmatpush1.msra.mxu0 0.0
    %1902 = vmatprep.subr.mxu0 0.0
    %1903 = vmatpush1.msra.mxu0 0.0
    %1904 = vmatprep.subr.mxu0 0.0
    %1905 = vmatpush1.msra.mxu0 0.0
    %1906 = vmatprep.subr.mxu0 0.0
    %1907 = vmatpush1.msra.mxu0 0.0
    %1908 = vmatprep.subr.mxu0 0.0
    %1909 = vmatpush1.msra.mxu0 0.0
    %1910 = vmatprep.subr.mxu0 0.0
    %1911 = vmatpush1.msra.mxu0 0.0
    %1912 = vmatprep.subr.mxu0 0.0
    %1913 = vmatpush1.msra.mxu0 0.0
    %1914 = vmatprep.subr.mxu0 0.0
    %1915 = vmatpush1.msra.mxu0 0.0
    %1916 = vmatprep.subr.mxu0 0.0
    %1917 = vmatpush1.msra.mxu0 0.0
    %1918 = vmatprep.subr.mxu0 0.0
    %1919 = vmatpush1.msra.mxu0 0.0
    %1920 = vmatprep.subr.mxu0 0.0
    %1921 = vmatpush1.msra.mxu0 0.0
    %1922 = vmatprep.subr.mxu0 0.0
    %1923 = vmatpush1.msra.mxu0 0.0
    %1924 = vmatprep.subr.mxu0 0.0
    %1925 = vmatpush1.msra.mxu0 0.0
    %1926 = vmatprep.subr.mxu0 0.0
    %1927 = vmatpush1.msra.mxu0 0.0
    %1928 = vmatprep.subr.mxu0 0.0
    %1929 = vmatpush1.msra.mxu0 0.0
    %1930 = vmatprep.subr.mxu0 0.0
    %1931 = vmatpush1.msra.mxu0 0.0
    %1932 = vmatprep.subr.mxu0 0.0
    %1933 = vmatpush1.msra.mxu0 0.0
    %1934 = vmatprep.subr.mxu0 0.0
    %1935 = vmatpush1.msra.mxu0 0.0
    %1936 = vmatprep.subr.mxu0 0.0
    %1937 = vmatpush1.msra.mxu0 0.0
    %1938 = vmatprep.subr.mxu0 0.0
    %1939 = vmatpush1.msra.mxu0 0.0
    %1940 = vmatprep.subr.mxu0 0.0
    %1941 = vmatpush1.msra.mxu0 0.0
    %1942 = vmatprep.subr.mxu0 0.0
    %1943 = vmatpush1.msra.mxu0 0.0
    %1944 = vmatprep.subr.mxu0 0.0
    %1945 = vmatpush1.msra.mxu0 0.0
    %1946 = vmatprep.subr.mxu0 0.0
    %1947 = vmatpush1.msra.mxu0 0.0
    %1948 = vmatprep.subr.mxu0 0.0
    %1949 = vmatpush1.msra.mxu0 0.0
    %1950 = vmatprep.subr.mxu0 0.0
    %1951 = vmatpush1.msra.mxu0 0.0
    %1952 = vmatprep.subr.mxu0 0.0
    %1953 = vmatpush1.msra.mxu0 0.0
    %1954 = vmatprep.subr.mxu0 0.0
    %1955 = vmatpush1.msra.mxu0 0.0
    %1956 = vmatprep.mubr.f32.mxu0 0.0
    %1957 = vmatmul.mubr.f32.gmra.mrb[0].mxu0 %v1890
    %v1958 = vpop.f32.mrb[0].mxu0
    %v1959 = vadd.f32 0.0, %v1958
    %v1960 = vpop.f32.mrb[0].mxu0
    %1961 = vdwg.mxu0
    %v1963 = vsel %vm93, %v1886, 0
    %1965 = vmatprep.subr.mxu0 0.0
    %1966 = vmatpush1.msra.mxu0 %v54
    %1967 = vmatprep.subr.mxu0 0.0
    %1968 = vmatpush1.msra.mxu0 %v55
    %1969 = vmatprep.subr.mxu0 0.0
    %1970 = vmatpush1.msra.mxu0 %v56
    %1971 = vmatprep.subr.mxu0 0.0
    %1972 = vmatpush1.msra.mxu0 %v57
    %1973 = vmatprep.subr.mxu0 0.0
    %1974 = vmatpush1.msra.mxu0 0.0
    %1975 = vmatprep.subr.mxu0 0.0
    %1976 = vmatpush1.msra.mxu0 0.0
    %1977 = vmatprep.subr.mxu0 0.0
    %1978 = vmatpush1.msra.mxu0 0.0
    %1979 = vmatprep.subr.mxu0 0.0
    %1980 = vmatpush1.msra.mxu0 0.0
    %1981 = vmatprep.subr.mxu0 0.0
    %1982 = vmatpush1.msra.mxu0 0.0
    %1983 = vmatprep.subr.mxu0 0.0
    %1984 = vmatpush1.msra.mxu0 0.0
    %1985 = vmatprep.subr.mxu0 0.0
    %1986 = vmatpush1.msra.mxu0 0.0
    %1987 = vmatprep.subr.mxu0 0.0
    %1988 = vmatpush1.msra.mxu0 0.0
    %1989 = vmatprep.subr.mxu0 0.0
    %1990 = vmatpush1.msra.mxu0 0.0
    %1991 = vmatprep.subr.mxu0 0.0
    %1992 = vmatpush1.msra.mxu0 0.0
    %1993 = vmatprep.subr.mxu0 0.0
    %1994 = vmatpush1.msra.mxu0 0.0
    %1995 = vmatprep.subr.mxu0 0.0
    %1996 = vmatpush1.msra.mxu0 0.0
    %1997 = vmatprep.subr.mxu0 0.0
    %1998 = vmatpush1.msra.mxu0 0.0
    %1999 = vmatprep.subr.mxu0 0.0
    %2000 = vmatpush1.msra.mxu0 0.0
    %2001 = vmatprep.subr.mxu0 0.0
    %2002 = vmatpush1.msra.mxu0 0.0
    %2003 = vmatprep.subr.mxu0 0.0
    %2004 = vmatpush1.msra.mxu0 0.0
    %2005 = vmatprep.subr.mxu0 0.0
    %2006 = vmatpush1.msra.mxu0 0.0
    %2007 = vmatprep.subr.mxu0 0.0
    %2008 = vmatpush1.msra.mxu0 0.0
    %2009 = vmatprep.subr.mxu0 0.0
    %2010 = vmatpush1.msra.mxu0 0.0
    %2011 = vmatprep.subr.mxu0 0.0
    %2012 = vmatpush1.msra.mxu0 0.0
    %2013 = vmatprep.subr.mxu0 0.0
    %2014 = vmatpush1.msra.mxu0 0.0
    %2015 = vmatprep.subr.mxu0 0.0
    %2016 = vmatpush1.msra.mxu0 0.0
    %2017 = vmatprep.subr.mxu0 0.0
    %2018 = vmatpush1.msra.mxu0 0.0
    %2019 = vmatprep.subr.mxu0 0.0
    %2020 = vmatpush1.msra.mxu0 0.0
    %2021 = vmatprep.subr.mxu0 0.0
    %2022 = vmatpush1.msra.mxu0 0.0
    %2023 = vmatprep.subr.mxu0 0.0
    %2024 = vmatpush1.msra.mxu0 0.0
    %2025 = vmatprep.subr.mxu0 0.0
    %2026 = vmatpush1.msra.mxu0 0.0
    %2027 = vmatprep.subr.mxu0 0.0
    %2028 = vmatpush1.msra.mxu0 0.0
    %2029 = vmatprep.mubr.f32.mxu0 0.0
    %2030 = vmatmul.mubr.f32.gmra.mrb[0].mxu0 %v1963
    %v2031 = vpop.f32.mrb[0].mxu0
    %v2032 = vadd.f32 %v1959, %v2031
    %v2033 = vpop.f32.mrb[0].mxu0
    %2034 = vdwg.mxu0
    %v2035 = vadd.f32 %v2032, %v244
    %s2036 = scalar_lea.vmem [#allocation8], 80
    %2037 = vst [vmem:[%s2036] sm:$0x1f] %v2035
    %s2038 = scalar_lea.vmem [#allocation2], 176
    %v2039 = vld [vmem:[%s2038] sm:$0x1f]
    %s2040 = scalar_lea.vmem [#allocation2], 184
    %v2041 = vld [vmem:[%s2040] sm:$0x1f]
    %v2042 = vsel %vm66, %v2039, 0.0
    %2043 = vadd.xlane.f32.xlu0 %v2042
    %v2044 = vpop.xlane.xlu0 %2043
    %v2045 = vsel %vm66, %v2041, 0.0
    %2046 = vadd.xlane.f32.xlu0 %v2045
    %v2047 = vpop.xlane.xlu0 %2046
    %v2048 = vadd.f32 %v2044, %v2047
    %v2049 = vmul.f32 %v2039, %v2039
    %v2050 = vsel %vm66, %v2049, 0.0
    %2051 = vadd.xlane.f32.xlu0 %v2050
    %v2052 = vpop.xlane.xlu0 %2051
    %v2053 = vmul.f32 %v2041, %v2041
    %v2054 = vsel %vm66, %v2053, 0.0
    %2055 = vadd.xlane.f32.xlu0 %v2054
    %v2056 = vpop.xlane.xlu0 %2055
    %v2057 = vadd.f32 %v2052, %v2056
    %v2058 = vmul.f32 %v2048, 0.015625
    %v2059 = vmul.f32 %v2057, 0.015625
    %v2060 = vmul.f32 %v2058, %v2058
    %v2061 = vsub.f32 %v2059, %v2060
    %v2062 = vadd.f32 %v2061, 1e-05
    %v2063 = vrsqrt.pop %v2062
    %v2064 = vsub.f32 %v2039, %v2058
    %v2065 = vmul.f32 %v2064, %v2063
    %v2066 = vsub.f32 %v2041, %v2058
    %v2067 = vmul.f32 %v2066, %v2063
    %v2069 = vsel %vm93, %v2067, 0
    %2071 = vmatprep.subr.mxu0 0.0
    %2072 = vmatpush1.msra.mxu0 %v58
    %2073 = vmatprep.subr.mxu0 0.0
    %2074 = vmatpush1.msra.mxu0 %v59
    %2075 = vmatprep.subr.mxu0 0.0
    %2076 = vmatpush1.msra.mxu0 %v60
    %2077 = vmatprep.subr.mxu0 0.0
    %2078 = vmatpush1.msra.mxu0 %v61
    %2079 = vmatprep.subr.mxu0 0.0
    %2080 = vmatpush1.msra.mxu0 0.0
    %2081 = vmatprep.subr.mxu0 0.0
    %2082 = vmatpush1.msra.mxu0 0.0
    %2083 = vmatprep.subr.mxu0 0.0
    %2084 = vmatpush1.msra.mxu0 0.0
    %2085 = vmatprep.subr.mxu0 0.0
    %2086 = vmatpush1.msra.mxu0 0.0
    %2087 = vmatprep.subr.mxu0 0.0
    %2088 = vmatpush1.msra.mxu0 0.0
    %2089 = vmatprep.subr.mxu0 0.0
    %2090 = vmatpush1.msra.mxu0 0.0
    %2091 = vmatprep.subr.mxu0 0.0
    %2092 = vmatpush1.msra.mxu0 0.0
    %2093 = vmatprep.subr.mxu0 0.0
    %2094 = vmatpush1.msra.mxu0 0.0
    %2095 = vmatprep.subr.mxu0 0.0
    %2096 = vmatpush1.msra.mxu0 0.0
    %2097 = vmatprep.subr.mxu0 0.0
    %2098 = vmatpush1.msra.mxu0 0.0
    %2099 = vmatprep.subr.mxu0 0.0
    %2100 = vmatpush1.msra.mxu0 0.0
    %2101 = vmatprep.subr.mxu0 0.0
    %2102 = vmatpush1.msra.mxu0 0.0
    %2103 = vmatprep.subr.mxu0 0.0
    %2104 = vmatpush1.msra.mxu0 0.0
    %2105 = vmatprep.subr.mxu0 0.0
    %2106 = vmatpush1.msra.mxu0 0.0
    %2107 = vmatprep.subr.mxu0 0.0
    %2108 = vmatpush1.msra.mxu0 0.0
    %2109 = vmatprep.subr.mxu0 0.0
    %2110 = vmatpush1.msra.mxu0 0.0
    %2111 = vmatprep.subr.mxu0 0.0
    %2112 = vmatpush1.msra.mxu0 0.0
    %2113 = vmatprep.subr.mxu0 0.0
    %2114 = vmatpush1.msra.mxu0 0.0
    %2115 = vmatprep.subr.mxu0 0.0
    %2116 = vmatpush1.msra.mxu0 0.0
    %2117 = vmatprep.subr.mxu0 0.0
    %2118 = vmatpush1.msra.mxu0 0.0
    %2119 = vmatprep.subr.mxu0 0.0
    %2120 = vmatpush1.msra.mxu0 0.0
    %2121 = vmatprep.subr.mxu0 0.0
    %2122 = vmatpush1.msra.mxu0 0.0
    %2123 = vmatprep.subr.mxu0 0.0
    %2124 = vmatpush1.msra.mxu0 0.0
    %2125 = vmatprep.subr.mxu0 0.0
    %2126 = vmatpush1.msra.mxu0 0.0
    %2127 = vmatprep.subr.mxu0 0.0
    %2128 = vmatpush1.msra.mxu0 0.0
    %2129 = vmatprep.subr.mxu0 0.0
    %2130 = vmatpush1.msra.mxu0 0.0
    %2131 = vmatprep.subr.mxu0 0.0
    %2132 = vmatpush1.msra.mxu0 0.0
    %2133 = vmatprep.subr.mxu0 0.0
    %2134 = vmatpush1.msra.mxu0 0.0
    %2135 = vmatprep.mubr.f32.mxu0 0.0
    %2136 = vmatmul.mubr.f32.gmra.mrb[0].mxu0 %v2069
    %v2137 = vpop.f32.mrb[0].mxu0
    %v2138 = vadd.f32 0.0, %v2137
    %v2139 = vpop.f32.mrb[0].mxu0
    %2140 = vdwg.mxu0
    %v2142 = vsel %vm93, %v2065, 0
    %2144 = vmatprep.subr.mxu0 0.0
    %2145 = vmatpush1.msra.mxu0 %v54
    %2146 = vmatprep.subr.mxu0 0.0
    %2147 = vmatpush1.msra.mxu0 %v55
    %2148 = vmatprep.subr.mxu0 0.0
    %2149 = vmatpush1.msra.mxu0 %v56
    %2150 = vmatprep.subr.mxu0 0.0
    %2151 = vmatpush1.msra.mxu0 %v57
    %2152 = vmatprep.subr.mxu0 0.0
    %2153 = vmatpush1.msra.mxu0 0.0
    %2154 = vmatprep.subr.mxu0 0.0
    %2155 = vmatpush1.msra.mxu0 0.0
    %2156 = vmatprep.subr.mxu0 0.0
    %2157 = vmatpush1.msra.mxu0 0.0
    %2158 = vmatprep.subr.mxu0 0.0
    %2159 = vmatpush1.msra.mxu0 0.0
    %2160 = vmatprep.subr.mxu0 0.0
    %2161 = vmatpush1.msra.mxu0 0.0
    %2162 = vmatprep.subr.mxu0 0.0
    %2163 = vmatpush1.msra.mxu0 0.0
    %2164 = vmatprep.subr.mxu0 0.0
    %2165 = vmatpush1.msra.mxu0 0.0
    %2166 = vmatprep.subr.mxu0 0.0
    %2167 = vmatpush1.msra.mxu0 0.0
    %2168 = vmatprep.subr.mxu0 0.0
    %2169 = vmatpush1.msra.mxu0 0.0
    %2170 = vmatprep.subr.mxu0 0.0
    %2171 = vmatpush1.msra.mxu0 0.0
    %2172 = vmatprep.subr.mxu0 0.0
    %2173 = vmatpush1.msra.mxu0 0.0
    %2174 = vmatprep.subr.mxu0 0.0
    %2175 = vmatpush1.msra.mxu0 0.0
    %2176 = vmatprep.subr.mxu0 0.0
    %2177 = vmatpush1.msra.mxu0 0.0
    %2178 = vmatprep.subr.mxu0 0.0
    %2179 = vmatpush1.msra.mxu0 0.0
    %2180 = vmatprep.subr.mxu0 0.0
    %2181 = vmatpush1.msra.mxu0 0.0
    %2182 = vmatprep.subr.mxu0 0.0
    %2183 = vmatpush1.msra.mxu0 0.0
    %2184 = vmatprep.subr.mxu0 0.0
    %2185 = vmatpush1.msra.mxu0 0.0
    %2186 = vmatprep.subr.mxu0 0.0
    %2187 = vmatpush1.msra.mxu0 0.0
    %2188 = vmatprep.subr.mxu0 0.0
    %2189 = vmatpush1.msra.mxu0 0.0
    %2190 = vmatprep.subr.mxu0 0.0
    %2191 = vmatpush1.msra.mxu0 0.0
    %2192 = vmatprep.subr.mxu0 0.0
    %2193 = vmatpush1.msra.mxu0 0.0
    %2194 = vmatprep.subr.mxu0 0.0
    %2195 = vmatpush1.msra.mxu0 0.0
    %2196 = vmatprep.subr.mxu0 0.0
    %2197 = vmatpush1.msra.mxu0 0.0
    %2198 = vmatprep.subr.mxu0 0.0
    %2199 = vmatpush1.msra.mxu0 0.0
    %2200 = vmatprep.subr.mxu0 0.0
    %2201 = vmatpush1.msra.mxu0 0.0
    %2202 = vmatprep.subr.mxu0 0.0
    %2203 = vmatpush1.msra.mxu0 0.0
    %2204 = vmatprep.subr.mxu0 0.0
    %2205 = vmatpush1.msra.mxu0 0.0
    %2206 = vmatprep.subr.mxu0 0.0
    %2207 = vmatpush1.msra.mxu0 0.0
    %2208 = vmatprep.mubr.f32.mxu0 0.0
    %2209 = vmatmul.mubr.f32.gmra.mrb[0].mxu0 %v2142
    %v2210 = vpop.f32.mrb[0].mxu0
    %v2211 = vadd.f32 %v2138, %v2210
    %v2212 = vpop.f32.mrb[0].mxu0
    %2213 = vdwg.mxu0
    %v2214 = vadd.f32 %v2211, %v244
    %s2215 = scalar_lea.vmem [#allocation8], 88
    %2216 = vst [vmem:[%s2215] sm:$0x1f] %v2214
    %s2217 = scalar_lea.vmem [#allocation2], 192
    %v2218 = vld [vmem:[%s2217] sm:$0x1f]
    %s2219 = scalar_lea.vmem [#allocation2], 200
    %v2220 = vld [vmem:[%s2219] sm:$0x1f]
    %v2221 = vsel %vm66, %v2218, 0.0
    %2222 = vadd.xlane.f32.xlu0 %v2221
    %v2223 = vpop.xlane.xlu0 %2222
    %v2224 = vsel %vm66, %v2220, 0.0
    %2225 = vadd.xlane.f32.xlu0 %v2224
    %v2226 = vpop.xlane.xlu0 %2225
    %v2227 = vadd.f32 %v2223, %v2226
    %v2228 = vmul.f32 %v2218, %v2218
    %v2229 = vsel %vm66, %v2228, 0.0
    %2230 = vadd.xlane.f32.xlu0 %v2229
    %v2231 = vpop.xlane.xlu0 %2230
    %v2232 = vmul.f32 %v2220, %v2220
    %v2233 = vsel %vm66, %v2232, 0.0
    %2234 = vadd.xlane.f32.xlu0 %v2233
    %v2235 = vpop.xlane.xlu0 %2234
    %v2236 = vadd.f32 %v2231, %v2235
    %v2237 = vmul.f32 %v2227, 0.015625
    %v2238 = vmul.f32 %v2236, 0.015625
    %v2239 = vmul.f32 %v2237, %v2237
    %v2240 = vsub.f32 %v2238, %v2239
    %v2241 = vadd.f32 %v2240, 1e-05
    %v2242 = vrsqrt.pop %v2241
    %v2243 = vsub.f32 %v2218, %v2237
    %v2244 = vmul.f32 %v2243, %v2242
    %v2245 = vsub.f32 %v2220, %v2237
    %v2246 = vmul.f32 %v2245, %v2242
    %v2248 = vsel %vm93, %v2246, 0
    %2250 = vmatprep.subr.mxu0 0.0
    %2251 = vmatpush1.msra.mxu0 %v58
    %2252 = vmatprep.subr.mxu0 0.0
    %2253 = vmatpush1.msra.mxu0 %v59
    %2254 = vmatprep.subr.mxu0 0.0
    %2255 = vmatpush1.msra.mxu0 %v60
    %2256 = vmatprep.subr.mxu0 0.0
    %2257 = vmatpush1.msra.mxu0 %v61
    %2258 = vmatprep.subr.mxu0 0.0
    %2259 = vmatpush1.msra.mxu0 0.0
    %2260 = vmatprep.subr.mxu0 0.0
    %2261 = vmatpush1.msra.mxu0 0.0
    %2262 = vmatprep.subr.mxu0 0.0
    %2263 = vmatpush1.msra.mxu0 0.0
    %2264 = vmatprep.subr.mxu0 0.0
    %2265 = vmatpush1.msra.mxu0 0.0
    %2266 = vmatprep.subr.mxu0 0.0
    %2267 = vmatpush1.msra.mxu0 0.0
    %2268 = vmatprep.subr.mxu0 0.0
    %2269 = vmatpush1.msra.mxu0 0.0
    %2270 = vmatprep.subr.mxu0 0.0
    %2271 = vmatpush1.msra.mxu0 0.0
    %2272 = vmatprep.subr.mxu0 0.0
    %2273 = vmatpush1.msra.mxu0 0.0
    %2274 = vmatprep.subr.mxu0 0.0
    %2275 = vmatpush1.msra.mxu0 0.0
    %2276 = vmatprep.subr.mxu0 0.0
    %2277 = vmatpush1.msra.mxu0 0.0
    %2278 = vmatprep.subr.mxu0 0.0
    %2279 = vmatpush1.msra.mxu0 0.0
    %2280 = vmatprep.subr.mxu0 0.0
    %2281 = vmatpush1.msra.mxu0 0.0
    %2282 = vmatprep.subr.mxu0 0.0
    %2283 = vmatpush1.msra.mxu0 0.0
    %2284 = vmatprep.subr.mxu0 0.0
    %2285 = vmatpush1.msra.mxu0 0.0
    %2286 = vmatprep.subr.mxu0 0.0
    %2287 = vmatpush1.msra.mxu0 0.0
    %2288 = vmatprep.subr.mxu0 0.0
    %2289 = vmatpush1.msra.mxu0 0.0
    %2290 = vmatprep.subr.mxu0 0.0
    %2291 = vmatpush1.msra.mxu0 0.0
    %2292 = vmatprep.subr.mxu0 0.0
    %2293 = vmatpush1.msra.mxu0 0.0
    %2294 = vmatprep.subr.mxu0 0.0
    %2295 = vmatpush1.msra.mxu0 0.0
    %2296 = vmatprep.subr.mxu0 0.0
    %2297 = vmatpush1.msra.mxu0 0.0
    %2298 = vmatprep.subr.mxu0 0.0
    %2299 = vmatpush1.msra.mxu0 0.0
    %2300 = vmatprep.subr.mxu0 0.0
    %2301 = vmatpush1.msra.mxu0 0.0
    %2302 = vmatprep.subr.mxu0 0.0
    %2303 = vmatpush1.msra.mxu0 0.0
    %2304 = vmatprep.subr.mxu0 0.0
    %2305 = vmatpush1.msra.mxu0 0.0
    %2306 = vmatprep.subr.mxu0 0.0
    %2307 = vmatpush1.msra.mxu0 0.0
    %2308 = vmatprep.subr.mxu0 0.0
    %2309 = vmatpush1.msra.mxu0 0.0
    %2310 = vmatprep.subr.mxu0 0.0
    %2311 = vmatpush1.msra.mxu0 0.0
    %2312 = vmatprep.subr.mxu0 0.0
    %2313 = vmatpush1.msra.mxu0 0.0
    %2314 = vmatprep.mubr.f32.mxu0 0.0
    %2315 = vmatmul.mubr.f32.gmra.mrb[0].mxu0 %v2248
    %v2316 = vpop.f32.mrb[0].mxu0
    %v2317 = vadd.f32 0.0, %v2316
    %v2318 = vpop.f32.mrb[0].mxu0
    %2319 = vdwg.mxu0
    %v2321 = vsel %vm93, %v2244, 0
    %2323 = vmatprep.subr.mxu0 0.0
    %2324 = vmatpush1.msra.mxu0 %v54
    %2325 = vmatprep.subr.mxu0 0.0
    %2326 = vmatpush1.msra.mxu0 %v55
    %2327 = vmatprep.subr.mxu0 0.0
    %2328 = vmatpush1.msra.mxu0 %v56
    %2329 = vmatprep.subr.mxu0 0.0
    %2330 = vmatpush1.msra.mxu0 %v57
    %2331 = vmatprep.subr.mxu0 0.0
    %2332 = vmatpush1.msra.mxu0 0.0
    %2333 = vmatprep.subr.mxu0 0.0
    %2334 = vmatpush1.msra.mxu0 0.0
    %2335 = vmatprep.subr.mxu0 0.0
    %2336 = vmatpush1.msra.mxu0 0.0
    %2337 = vmatprep.subr.mxu0 0.0
    %2338 = vmatpush1.msra.mxu0 0.0
    %2339 = vmatprep.subr.mxu0 0.0
    %2340 = vmatpush1.msra.mxu0 0.0
    %2341 = vmatprep.subr.mxu0 0.0
    %2342 = vmatpush1.msra.mxu0 0.0
    %2343 = vmatprep.subr.mxu0 0.0
    %2344 = vmatpush1.msra.mxu0 0.0
    %2345 = vmatprep.subr.mxu0 0.0
    %2346 = vmatpush1.msra.mxu0 0.0
    %2347 = vmatprep.subr.mxu0 0.0
    %2348 = vmatpush1.msra.mxu0 0.0
    %2349 = vmatprep.subr.mxu0 0.0
    %2350 = vmatpush1.msra.mxu0 0.0
    %2351 = vmatprep.subr.mxu0 0.0
    %2352 = vmatpush1.msra.mxu0 0.0
    %2353 = vmatprep.subr.mxu0 0.0
    %2354 = vmatpush1.msra.mxu0 0.0
    %2355 = vmatprep.subr.mxu0 0.0
    %2356 = vmatpush1.msra.mxu0 0.0
    %2357 = vmatprep.subr.mxu0 0.0
    %2358 = vmatpush1.msra.mxu0 0.0
    %2359 = vmatprep.subr.mxu0 0.0
    %2360 = vmatpush1.msra.mxu0 0.0
    %2361 = vmatprep.subr.mxu0 0.0
    %2362 = vmatpush1.msra.mxu0 0.0
    %2363 = vmatprep.subr.mxu0 0.0
    %2364 = vmatpush1.msra.mxu0 0.0
    %2365 = vmatprep.subr.mxu0 0.0
    %2366 = vmatpush1.msra.mxu0 0.0
    %2367 = vmatprep.subr.mxu0 0.0
    %2368 = vmatpush1.msra.mxu0 0.0
    %2369 = vmatprep.subr.mxu0 0.0
    %2370 = vmatpush1.msra.mxu0 0.0
    %2371 = vmatprep.subr.mxu0 0.0
    %2372 = vmatpush1.msra.mxu0 0.0
    %2373 = vmatprep.subr.mxu0 0.0
    %2374 = vmatpush1.msra.mxu0 0.0
    %2375 = vmatprep.subr.mxu0 0.0
    %2376 = vmatpush1.msra.mxu0 0.0
    %2377 = vmatprep.subr.mxu0 0.0
    %2378 = vmatpush1.msra.mxu0 0.0
    %2379 = vmatprep.subr.mxu0 0.0
    %2380 = vmatpush1.msra.mxu0 0.0
    %2381 = vmatprep.subr.mxu0 0.0
    %2382 = vmatpush1.msra.mxu0 0.0
    %2383 = vmatprep.subr.mxu0 0.0
    %2384 = vmatpush1.msra.mxu0 0.0
    %2385 = vmatprep.subr.mxu0 0.0
    %2386 = vmatpush1.msra.mxu0 0.0
    %2387 = vmatprep.mubr.f32.mxu0 0.0
    %2388 = vmatmul.mubr.f32.gmra.mrb[0].mxu0 %v2321
    %v2389 = vpop.f32.mrb[0].mxu0
    %v2390 = vadd.f32 %v2317, %v2389
    %v2391 = vpop.f32.mrb[0].mxu0
    %2392 = vdwg.mxu0
    %v2393 = vadd.f32 %v2390, %v244
    %s2394 = scalar_lea.vmem [#allocation8], 96
    %2395 = vst [vmem:[%s2394] sm:$0x1f] %v2393
    %s2396 = scalar_lea.vmem [#allocation2], 208
    %v2397 = vld [vmem:[%s2396] sm:$0x1f]
    %s2398 = scalar_lea.vmem [#allocation2], 216
    %v2399 = vld [vmem:[%s2398] sm:$0x1f]
    %v2400 = vsel %vm66, %v2397, 0.0
    %2401 = vadd.xlane.f32.xlu0 %v2400
    %v2402 = vpop.xlane.xlu0 %2401
    %v2403 = vsel %vm66, %v2399, 0.0
    %2404 = vadd.xlane.f32.xlu0 %v2403
    %v2405 = vpop.xlane.xlu0 %2404
    %v2406 = vadd.f32 %v2402, %v2405
    %v2407 = vmul.f32 %v2397, %v2397
    %v2408 = vsel %vm66, %v2407, 0.0
    %2409 = vadd.xlane.f32.xlu0 %v2408
    %v2410 = vpop.xlane.xlu0 %2409
    %v2411 = vmul.f32 %v2399, %v2399
    %v2412 = vsel %vm66, %v2411, 0.0
    %2413 = vadd.xlane.f32.xlu0 %v2412
    %v2414 = vpop.xlane.xlu0 %2413
    %v2415 = vadd.f32 %v2410, %v2414
    %v2416 = vmul.f32 %v2406, 0.015625
    %v2417 = vmul.f32 %v2415, 0.015625
    %v2418 = vmul.f32 %v2416, %v2416
    %v2419 = vsub.f32 %v2417, %v2418
    %v2420 = vadd.f32 %v2419, 1e-05
    %v2421 = vrsqrt.pop %v2420
    %v2422 = vsub.f32 %v2397, %v2416
    %v2423 = vmul.f32 %v2422, %v2421
    %v2424 = vsub.f32 %v2399, %v2416
    %v2425 = vmul.f32 %v2424, %v2421
    %v2427 = vsel %vm93, %v2425, 0
    %2429 = vmatprep.subr.mxu0 0.0
    %2430 = vmatpush1.msra.mxu0 %v58
    %2431 = vmatprep.subr.mxu0 0.0
    %2432 = vmatpush1.msra.mxu0 %v59
    %2433 = vmatprep.subr.mxu0 0.0
    %2434 = vmatpush1.msra.mxu0 %v60
    %2435 = vmatprep.subr.mxu0 0.0
    %2436 = vmatpush1.msra.mxu0 %v61
    %2437 = vmatprep.subr.mxu0 0.0
    %2438 = vmatpush1.msra.mxu0 0.0
    %2439 = vmatprep.subr.mxu0 0.0
    %2440 = vmatpush1.msra.mxu0 0.0
    %2441 = vmatprep.subr.mxu0 0.0
    %2442 = vmatpush1.msra.mxu0 0.0
    %2443 = vmatprep.subr.mxu0 0.0
    %2444 = vmatpush1.msra.mxu0 0.0
    %2445 = vmatprep.subr.mxu0 0.0
    %2446 = vmatpush1.msra.mxu0 0.0
    %2447 = vmatprep.subr.mxu0 0.0
    %2448 = vmatpush1.msra.mxu0 0.0
    %2449 = vmatprep.subr.mxu0 0.0
    %2450 = vmatpush1.msra.mxu0 0.0
    %2451 = vmatprep.subr.mxu0 0.0
    %2452 = vmatpush1.msra.mxu0 0.0
    %2453 = vmatprep.subr.mxu0 0.0
    %2454 = vmatpush1.msra.mxu0 0.0
    %2455 = vmatprep.subr.mxu0 0.0
    %2456 = vmatpush1.msra.mxu0 0.0
    %2457 = vmatprep.subr.mxu0 0.0
    %2458 = vmatpush1.msra.mxu0 0.0
    %2459 = vmatprep.subr.mxu0 0.0
    %2460 = vmatpush1.msra.mxu0 0.0
    %2461 = vmatprep.subr.mxu0 0.0
    %2462 = vmatpush1.msra.mxu0 0.0
    %2463 = vmatprep.subr.mxu0 0.0
    %2464 = vmatpush1.msra.mxu0 0.0
    %2465 = vmatprep.subr.mxu0 0.0
    %2466 = vmatpush1.msra.mxu0 0.0
    %2467 = vmatprep.subr.mxu0 0.0
    %2468 = vmatpush1.msra.mxu0 0.0
    %2469 = vmatprep.subr.mxu0 0.0
    %2470 = vmatpush1.msra.mxu0 0.0
    %2471 = vmatprep.subr.mxu0 0.0
    %2472 = vmatpush1.msra.mxu0 0.0
    %2473 = vmatprep.subr.mxu0 0.0
    %2474 = vmatpush1.msra.mxu0 0.0
    %2475 = vmatprep.subr.mxu0 0.0
    %2476 = vmatpush1.msra.mxu0 0.0
    %2477 = vmatprep.subr.mxu0 0.0
    %2478 = vmatpush1.msra.mxu0 0.0
    %2479 = vmatprep.subr.mxu0 0.0
    %2480 = vmatpush1.msra.mxu0 0.0
    %2481 = vmatprep.subr.mxu0 0.0
    %2482 = vmatpush1.msra.mxu0 0.0
    %2483 = vmatprep.subr.mxu0 0.0
    %2484 = vmatpush1.msra.mxu0 0.0
    %2485 = vmatprep.subr.mxu0 0.0
    %2486 = vmatpush1.msra.mxu0 0.0
    %2487 = vmatprep.subr.mxu0 0.0
    %2488 = vmatpush1.msra.mxu0 0.0
    %2489 = vmatprep.subr.mxu0 0.0
    %2490 = vmatpush1.msra.mxu0 0.0
    %2491 = vmatprep.subr.mxu0 0.0
    %2492 = vmatpush1.msra.mxu0 0.0
    %2493 = vmatprep.mubr.f32.mxu0 0.0
    %2494 = vmatmul.mubr.f32.gmra.mrb[0].mxu0 %v2427
    %v2495 = vpop.f32.mrb[0].mxu0
    %v2496 = vadd.f32 0.0, %v2495
    %v2497 = vpop.f32.mrb[0].mxu0
    %2498 = vdwg.mxu0
    %v2500 = vsel %vm93, %v2423, 0
    %2502 = vmatprep.subr.mxu0 0.0
    %2503 = vmatpush1.msra.mxu0 %v54
    %2504 = vmatprep.subr.mxu0 0.0
    %2505 = vmatpush1.msra.mxu0 %v55
    %2506 = vmatprep.subr.mxu0 0.0
    %2507 = vmatpush1.msra.mxu0 %v56
    %2508 = vmatprep.subr.mxu0 0.0
    %2509 = vmatpush1.msra.mxu0 %v57
    %2510 = vmatprep.subr.mxu0 0.0
    %2511 = vmatpush1.msra.mxu0 0.0
    %2512 = vmatprep.subr.mxu0 0.0
    %2513 = vmatpush1.msra.mxu0 0.0
    %2514 = vmatprep.subr.mxu0 0.0
    %2515 = vmatpush1.msra.mxu0 0.0
    %2516 = vmatprep.subr.mxu0 0.0
    %2517 = vmatpush1.msra.mxu0 0.0
    %2518 = vmatprep.subr.mxu0 0.0
    %2519 = vmatpush1.msra.mxu0 0.0
    %2520 = vmatprep.subr.mxu0 0.0
    %2521 = vmatpush1.msra.mxu0 0.0
    %2522 = vmatprep.subr.mxu0 0.0
    %2523 = vmatpush1.msra.mxu0 0.0
    %2524 = vmatprep.subr.mxu0 0.0
    %2525 = vmatpush1.msra.mxu0 0.0
    %2526 = vmatprep.subr.mxu0 0.0
    %2527 = vmatpush1.msra.mxu0 0.0
    %2528 = vmatprep.subr.mxu0 0.0
    %2529 = vmatpush1.msra.mxu0 0.0
    %2530 = vmatprep.subr.mxu0 0.0
    %2531 = vmatpush1.msra.mxu0 0.0
    %2532 = vmatprep.subr.mxu0 0.0
    %2533 = vmatpush1.msra.mxu0 0.0
    %2534 = vmatprep.subr.mxu0 0.0
    %2535 = vmatpush1.msra.mxu0 0.0
    %2536 = vmatprep.subr.mxu0 0.0
    %2537 = vmatpush1.msra.mxu0 0.0
    %2538 = vmatprep.subr.mxu0 0.0
    %2539 = vmatpush1.msra.mxu0 0.0
    %2540 = vmatprep.subr.mxu0 0.0
    %2541 = vmatpush1.msra.mxu0 0.0
    %2542 = vmatprep.subr.mxu0 0.0
    %2543 = vmatpush1.msra.mxu0 0.0
    %2544 = vmatprep.subr.mxu0 0.0
    %2545 = vmatpush1.msra.mxu0 0.0
    %2546 = vmatprep.subr.mxu0 0.0
    %2547 = vmatpush1.msra.mxu0 0.0
    %2548 = vmatprep.subr.mxu0 0.0
    %2549 = vmatpush1.msra.mxu0 0.0
    %2550 = vmatprep.subr.mxu0 0.0
    %2551 = vmatpush1.msra.mxu0 0.0
    %2552 = vmatprep.subr.mxu0 0.0
    %2553 = vmatpush1.msra.mxu0 0.0
    %2554 = vmatprep.subr.mxu0 0.0
    %2555 = vmatpush1.msra.mxu0 0.0
    %2556 = vmatprep.subr.mxu0 0.0
    %2557 = vmatpush1.msra.mxu0 0.0
    %2558 = vmatprep.subr.mxu0 0.0
    %2559 = vmatpush1.msra.mxu0 0.0
    %2560 = vmatprep.subr.mxu0 0.0
    %2561 = vmatpush1.msra.mxu0 0.0
    %2562 = vmatprep.subr.mxu0 0.0
    %2563 = vmatpush1.msra.mxu0 0.0
    %2564 = vmatprep.subr.mxu0 0.0
    %2565 = vmatpush1.msra.mxu0 0.0
    %2566 = vmatprep.mubr.f32.mxu0 0.0
    %2567 = vmatmul.mubr.f32.gmra.mrb[0].mxu0 %v2500
    %v2568 = vpop.f32.mrb[0].mxu0
    %v2569 = vadd.f32 %v2496, %v2568
    %v2570 = vpop.f32.mrb[0].mxu0
    %2571 = vdwg.mxu0
    %v2572 = vadd.f32 %v2569, %v244
    %s2573 = scalar_lea.vmem [#allocation8], 104
    %2574 = vst [vmem:[%s2573] sm:$0x1f] %v2572
    %s2575 = scalar_lea.vmem [#allocation2], 224
    %v2576 = vld [vmem:[%s2575] sm:$0x1f]
    %s2577 = scalar_lea.vmem [#allocation2], 232
    %v2578 = vld [vmem:[%s2577] sm:$0x1f]
    %v2579 = vsel %vm66, %v2576, 0.0
    %2580 = vadd.xlane.f32.xlu0 %v2579
    %v2581 = vpop.xlane.xlu0 %2580
    %v2582 = vsel %vm66, %v2578, 0.0
    %2583 = vadd.xlane.f32.xlu0 %v2582
    %v2584 = vpop.xlane.xlu0 %2583
    %v2585 = vadd.f32 %v2581, %v2584
    %v2586 = vmul.f32 %v2576, %v2576
    %v2587 = vsel %vm66, %v2586, 0.0
    %2588 = vadd.xlane.f32.xlu0 %v2587
    %v2589 = vpop.xlane.xlu0 %2588
    %v2590 = vmul.f32 %v2578, %v2578
    %v2591 = vsel %vm66, %v2590, 0.0
    %2592 = vadd.xlane.f32.xlu0 %v2591
    %v2593 = vpop.xlane.xlu0 %2592
    %v2594 = vadd.f32 %v2589, %v2593
    %v2595 = vmul.f32 %v2585, 0.015625
    %v2596 = vmul.f32 %v2594, 0.015625
    %v2597 = vmul.f32 %v2595, %v2595
    %v2598 = vsub.f32 %v2596, %v2597
    %v2599 = vadd.f32 %v2598, 1e-05
    %v2600 = vrsqrt.pop %v2599
    %v2601 = vsub.f32 %v2576, %v2595
    %v2602 = vmul.f32 %v2601, %v2600
    %v2603 = vsub.f32 %v2578, %v2595
    %v2604 = vmul.f32 %v2603, %v2600
    %v2606 = vsel %vm93, %v2604, 0
    %2608 = vmatprep.subr.mxu0 0.0
    %2609 = vmatpush1.msra.mxu0 %v58
    %2610 = vmatprep.subr.mxu0 0.0
    %2611 = vmatpush1.msra.mxu0 %v59
    %2612 = vmatprep.subr.mxu0 0.0
    %2613 = vmatpush1.msra.mxu0 %v60
    %2614 = vmatprep.subr.mxu0 0.0
    %2615 = vmatpush1.msra.mxu0 %v61
    %2616 = vmatprep.subr.mxu0 0.0
    %2617 = vmatpush1.msra.mxu0 0.0
    %2618 = vmatprep.subr.mxu0 0.0
    %2619 = vmatpush1.msra.mxu0 0.0
    %2620 = vmatprep.subr.mxu0 0.0
    %2621 = vmatpush1.msra.mxu0 0.0
    %2622 = vmatprep.subr.mxu0 0.0
    %2623 = vmatpush1.msra.mxu0 0.0
    %2624 = vmatprep.subr.mxu0 0.0
    %2625 = vmatpush1.msra.mxu0 0.0
    %2626 = vmatprep.subr.mxu0 0.0
    %2627 = vmatpush1.msra.mxu0 0.0
    %2628 = vmatprep.subr.mxu0 0.0
    %2629 = vmatpush1.msra.mxu0 0.0
    %2630 = vmatprep.subr.mxu0 0.0
    %2631 = vmatpush1.msra.mxu0 0.0
    %2632 = vmatprep.subr.mxu0 0.0
    %2633 = vmatpush1.msra.mxu0 0.0
    %2634 = vmatprep.subr.mxu0 0.0
    %2635 = vmatpush1.msra.mxu0 0.0
    %2636 = vmatprep.subr.mxu0 0.0
    %2637 = vmatpush1.msra.mxu0 0.0
    %2638 = vmatprep.subr.mxu0 0.0
    %2639 = vmatpush1.msra.mxu0 0.0
    %2640 = vmatprep.subr.mxu0 0.0
    %2641 = vmatpush1.msra.mxu0 0.0
    %2642 = vmatprep.subr.mxu0 0.0
    %2643 = vmatpush1.msra.mxu0 0.0
    %2644 = vmatprep.subr.mxu0 0.0
    %2645 = vmatpush1.msra.mxu0 0.0
    %2646 = vmatprep.subr.mxu0 0.0
    %2647 = vmatpush1.msra.mxu0 0.0
    %2648 = vmatprep.subr.mxu0 0.0
    %2649 = vmatpush1.msra.mxu0 0.0
    %2650 = vmatprep.subr.mxu0 0.0
    %2651 = vmatpush1.msra.mxu0 0.0
    %2652 = vmatprep.subr.mxu0 0.0
    %2653 = vmatpush1.msra.mxu0 0.0
    %2654 = vmatprep.subr.mxu0 0.0
    %2655 = vmatpush1.msra.mxu0 0.0
    %2656 = vmatprep.subr.mxu0 0.0
    %2657 = vmatpush1.msra.mxu0 0.0
    %2658 = vmatprep.subr.mxu0 0.0
    %2659 = vmatpush1.msra.mxu0 0.0
    %2660 = vmatprep.subr.mxu0 0.0
    %2661 = vmatpush1.msra.mxu0 0.0
    %2662 = vmatprep.subr.mxu0 0.0
    %2663 = vmatpush1.msra.mxu0 0.0
    %2664 = vmatprep.subr.mxu0 0.0
    %2665 = vmatpush1.msra.mxu0 0.0
    %2666 = vmatprep.subr.mxu0 0.0
    %2667 = vmatpush1.msra.mxu0 0.0
    %2668 = vmatprep.subr.mxu0 0.0
    %2669 = vmatpush1.msra.mxu0 0.0
    %2670 = vmatprep.subr.mxu0 0.0
    %2671 = vmatpush1.msra.mxu0 0.0
    %2672 = vmatprep.mubr.f32.mxu0 0.0
    %2673 = vmatmul.mubr.f32.gmra.mrb[0].mxu0 %v2606
    %v2674 = vpop.f32.mrb[0].mxu0
    %v2675 = vadd.f32 0.0, %v2674
    %v2676 = vpop.f32.mrb[0].mxu0
    %2677 = vdwg.mxu0
    %v2679 = vsel %vm93, %v2602, 0
    %2681 = vmatprep.subr.mxu0 0.0
    %2682 = vmatpush1.msra.mxu0 %v54
    %2683 = vmatprep.subr.mxu0 0.0
    %2684 = vmatpush1.msra.mxu0 %v55
    %2685 = vmatprep.subr.mxu0 0.0
    %2686 = vmatpush1.msra.mxu0 %v56
    %2687 = vmatprep.subr.mxu0 0.0
    %2688 = vmatpush1.msra.mxu0 %v57
    %2689 = vmatprep.subr.mxu0 0.0
    %2690 = vmatpush1.msra.mxu0 0.0
    %2691 = vmatprep.subr.mxu0 0.0
    %2692 = vmatpush1.msra.mxu0 0.0
    %2693 = vmatprep.subr.mxu0 0.0
    %2694 = vmatpush1.msra.mxu0 0.0
    %2695 = vmatprep.subr.mxu0 0.0
    %2696 = vmatpush1.msra.mxu0 0.0
    %2697 = vmatprep.subr.mxu0 0.0
    %2698 = vmatpush1.msra.mxu0 0.0
    %2699 = vmatprep.subr.mxu0 0.0
    %2700 = vmatpush1.msra.mxu0 0.0
    %2701 = vmatprep.subr.mxu0 0.0
    %2702 = vmatpush1.msra.mxu0 0.0
    %2703 = vmatprep.subr.mxu0 0.0
    %2704 = vmatpush1.msra.mxu0 0.0
    %2705 = vmatprep.subr.mxu0 0.0
    %2706 = vmatpush1.msra.mxu0 0.0
    %2707 = vmatprep.subr.mxu0 0.0
    %2708 = vmatpush1.msra.mxu0 0.0
    %2709 = vmatprep.subr.mxu0 0.0
    %2710 = vmatpush1.msra.mxu0 0.0
    %2711 = vmatprep.subr.mxu0 0.0
    %2712 = vmatpush1.msra.mxu0 0.0
    %2713 = vmatprep.subr.mxu0 0.0
    %2714 = vmatpush1.msra.mxu0 0.0
    %2715 = vmatprep.subr.mxu0 0.0
    %2716 = vmatpush1.msra.mxu0 0.0
    %2717 = vmatprep.subr.mxu0 0.0
    %2718 = vmatpush1.msra.mxu0 0.0
    %2719 = vmatprep.subr.mxu0 0.0
    %2720 = vmatpush1.msra.mxu0 0.0
    %2721 = vmatprep.subr.mxu0 0.0
    %2722 = vmatpush1.msra.mxu0 0.0
    %2723 = vmatprep.subr.mxu0 0.0
    %2724 = vmatpush1.msra.mxu0 0.0
    %2725 = vmatprep.subr.mxu0 0.0
    %2726 = vmatpush1.msra.mxu0 0.0
    %2727 = vmatprep.subr.mxu0 0.0
    %2728 = vmatpush1.msra.mxu0 0.0
    %2729 = vmatprep.subr.mxu0 0.0
    %2730 = vmatpush1.msra.mxu0 0.0
    %2731 = vmatprep.subr.mxu0 0.0
    %2732 = vmatpush1.msra.mxu0 0.0
    %2733 = vmatprep.subr.mxu0 0.0
    %2734 = vmatpush1.msra.mxu0 0.0
    %2735 = vmatprep.subr.mxu0 0.0
    %2736 = vmatpush1.msra.mxu0 0.0
    %2737 = vmatprep.subr.mxu0 0.0
    %2738 = vmatpush1.msra.mxu0 0.0
    %2739 = vmatprep.subr.mxu0 0.0
    %2740 = vmatpush1.msra.mxu0 0.0
    %2741 = vmatprep.subr.mxu0 0.0
    %2742 = vmatpush1.msra.mxu0 0.0
    %2743 = vmatprep.subr.mxu0 0.0
    %2744 = vmatpush1.msra.mxu0 0.0
    %2745 = vmatprep.mubr.f32.mxu0 0.0
    %2746 = vmatmul.mubr.f32.gmra.mrb[0].mxu0 %v2679
    %v2747 = vpop.f32.mrb[0].mxu0
    %v2748 = vadd.f32 %v2675, %v2747
    %v2749 = vpop.f32.mrb[0].mxu0
    %2750 = vdwg.mxu0
    %v2751 = vadd.f32 %v2748, %v244
    %s2752 = scalar_lea.vmem [#allocation8], 112
    %2753 = vst [vmem:[%s2752] sm:$0x1f] %v2751
    %s2754 = scalar_lea.vmem [#allocation2], 240
    %v2755 = vld [vmem:[%s2754] sm:$0x1f]
    %s2756 = scalar_lea.vmem [#allocation2], 248
    %v2757 = vld [vmem:[%s2756] sm:$0x1f]
    %v2758 = vsel %vm66, %v2755, 0.0
    %2759 = vadd.xlane.f32.xlu0 %v2758
    %v2760 = vpop.xlane.xlu0 %2759
    %v2761 = vsel %vm66, %v2757, 0.0
    %2762 = vadd.xlane.f32.xlu0 %v2761
    %v2763 = vpop.xlane.xlu0 %2762
    %v2764 = vadd.f32 %v2760, %v2763
    %v2765 = vmul.f32 %v2755, %v2755
    %v2766 = vsel %vm66, %v2765, 0.0
    %2767 = vadd.xlane.f32.xlu0 %v2766
    %v2768 = vpop.xlane.xlu0 %2767
    %v2769 = vmul.f32 %v2757, %v2757
    %v2770 = vsel %vm66, %v2769, 0.0
    %2771 = vadd.xlane.f32.xlu0 %v2770
    %v2772 = vpop.xlane.xlu0 %2771
    %v2773 = vadd.f32 %v2768, %v2772
    %v2774 = vmul.f32 %v2764, 0.015625
    %v2775 = vmul.f32 %v2773, 0.015625
    %v2776 = vmul.f32 %v2774, %v2774
    %v2777 = vsub.f32 %v2775, %v2776
    %v2778 = vadd.f32 %v2777, 1e-05
    %v2779 = vrsqrt.pop %v2778
    %v2780 = vsub.f32 %v2755, %v2774
    %v2781 = vmul.f32 %v2780, %v2779
    %v2782 = vsub.f32 %v2757, %v2774
    %v2783 = vmul.f32 %v2782, %v2779
    %v2785 = vsel %vm93, %v2783, 0
    %2787 = vmatprep.subr.mxu0 0.0
    %2788 = vmatpush1.msra.mxu0 %v58
    %2789 = vmatprep.subr.mxu0 0.0
    %2790 = vmatpush1.msra.mxu0 %v59
    %2791 = vmatprep.subr.mxu0 0.0
    %2792 = vmatpush1.msra.mxu0 %v60
    %2793 = vmatprep.subr.mxu0 0.0
    %2794 = vmatpush1.msra.mxu0 %v61
    %2795 = vmatprep.subr.mxu0 0.0
    %2796 = vmatpush1.msra.mxu0 0.0
    %2797 = vmatprep.subr.mxu0 0.0
    %2798 = vmatpush1.msra.mxu0 0.0
    %2799 = vmatprep.subr.mxu0 0.0
    %2800 = vmatpush1.msra.mxu0 0.0
    %2801 = vmatprep.subr.mxu0 0.0
    %2802 = vmatpush1.msra.mxu0 0.0
    %2803 = vmatprep.subr.mxu0 0.0
    %2804 = vmatpush1.msra.mxu0 0.0
    %2805 = vmatprep.subr.mxu0 0.0
    %2806 = vmatpush1.msra.mxu0 0.0
    %2807 = vmatprep.subr.mxu0 0.0
    %2808 = vmatpush1.msra.mxu0 0.0
    %2809 = vmatprep.subr.mxu0 0.0
    %2810 = vmatpush1.msra.mxu0 0.0
    %2811 = vmatprep.subr.mxu0 0.0
    %2812 = vmatpush1.msra.mxu0 0.0
    %2813 = vmatprep.subr.mxu0 0.0
    %2814 = vmatpush1.msra.mxu0 0.0
    %2815 = vmatprep.subr.mxu0 0.0
    %2816 = vmatpush1.msra.mxu0 0.0
    %2817 = vmatprep.subr.mxu0 0.0
    %2818 = vmatpush1.msra.mxu0 0.0
    %2819 = vmatprep.subr.mxu0 0.0
    %2820 = vmatpush1.msra.mxu0 0.0
    %2821 = vmatprep.subr.mxu0 0.0
    %2822 = vmatpush1.msra.mxu0 0.0
    %2823 = vmatprep.subr.mxu0 0.0
    %2824 = vmatpush1.msra.mxu0 0.0
    %2825 = vmatprep.subr.mxu0 0.0
    %2826 = vmatpush1.msra.mxu0 0.0
    %2827 = vmatprep.subr.mxu0 0.0
    %2828 = vmatpush1.msra.mxu0 0.0
    %2829 = vmatprep.subr.mxu0 0.0
    %2830 = vmatpush1.msra.mxu0 0.0
    %2831 = vmatprep.subr.mxu0 0.0
    %2832 = vmatpush1.msra.mxu0 0.0
    %2833 = vmatprep.subr.mxu0 0.0
    %2834 = vmatpush1.msra.mxu0 0.0
    %2835 = vmatprep.subr.mxu0 0.0
    %2836 = vmatpush1.msra.mxu0 0.0
    %2837 = vmatprep.subr.mxu0 0.0
    %2838 = vmatpush1.msra.mxu0 0.0
    %2839 = vmatprep.subr.mxu0 0.0
    %2840 = vmatpush1.msra.mxu0 0.0
    %2841 = vmatprep.subr.mxu0 0.0
    %2842 = vmatpush1.msra.mxu0 0.0
    %2843 = vmatprep.subr.mxu0 0.0
    %2844 = vmatpush1.msra.mxu0 0.0
    %2845 = vmatprep.subr.mxu0 0.0
    %2846 = vmatpush1.msra.mxu0 0.0
    %2847 = vmatprep.subr.mxu0 0.0
    %2848 = vmatpush1.msra.mxu0 0.0
    %2849 = vmatprep.subr.mxu0 0.0
    %2850 = vmatpush1.msra.mxu0 0.0
    %2851 = vmatprep.mubr.f32.mxu0 0.0
    %2852 = vmatmul.mubr.f32.gmra.mrb[0].mxu0 %v2785
    %v2853 = vpop.f32.mrb[0].mxu0
    %v2854 = vadd.f32 0.0, %v2853
    %v2855 = vpop.f32.mrb[0].mxu0
    %2856 = vdwg.mxu0
    %v2858 = vsel %vm93, %v2781, 0
    %2860 = vmatprep.subr.mxu0 0.0
    %2861 = vmatpush1.msra.mxu0 %v54
    %2862 = vmatprep.subr.mxu0 0.0
    %2863 = vmatpush1.msra.mxu0 %v55
    %2864 = vmatprep.subr.mxu0 0.0
    %2865 = vmatpush1.msra.mxu0 %v56
    %2866 = vmatprep.subr.mxu0 0.0
    %2867 = vmatpush1.msra.mxu0 %v57
    %2868 = vmatprep.subr.mxu0 0.0
    %2869 = vmatpush1.msra.mxu0 0.0
    %2870 = vmatprep.subr.mxu0 0.0
    %2871 = vmatpush1.msra.mxu0 0.0
    %2872 = vmatprep.subr.mxu0 0.0
    %2873 = vmatpush1.msra.mxu0 0.0
    %2874 = vmatprep.subr.mxu0 0.0
    %2875 = vmatpush1.msra.mxu0 0.0
    %2876 = vmatprep.subr.mxu0 0.0
    %2877 = vmatpush1.msra.mxu0 0.0
    %2878 = vmatprep.subr.mxu0 0.0
    %2879 = vmatpush1.msra.mxu0 0.0
    %2880 = vmatprep.subr.mxu0 0.0
    %2881 = vmatpush1.msra.mxu0 0.0
    %2882 = vmatprep.subr.mxu0 0.0
    %2883 = vmatpush1.msra.mxu0 0.0
    %2884 = vmatprep.subr.mxu0 0.0
    %2885 = vmatpush1.msra.mxu0 0.0
    %2886 = vmatprep.subr.mxu0 0.0
    %2887 = vmatpush1.msra.mxu0 0.0
    %2888 = vmatprep.subr.mxu0 0.0
    %2889 = vmatpush1.msra.mxu0 0.0
    %2890 = vmatprep.subr.mxu0 0.0
    %2891 = vmatpush1.msra.mxu0 0.0
    %2892 = vmatprep.subr.mxu0 0.0
    %2893 = vmatpush1.msra.mxu0 0.0
    %2894 = vmatprep.subr.mxu0 0.0
    %2895 = vmatpush1.msra.mxu0 0.0
    %2896 = vmatprep.subr.mxu0 0.0
    %2897 = vmatpush1.msra.mxu0 0.0
    %2898 = vmatprep.subr.mxu0 0.0
    %2899 = vmatpush1.msra.mxu0 0.0
    %2900 = vmatprep.subr.mxu0 0.0
    %2901 = vmatpush1.msra.mxu0 0.0
    %2902 = vmatprep.subr.mxu0 0.0
    %2903 = vmatpush1.msra.mxu0 0.0
    %2904 = vmatprep.subr.mxu0 0.0
    %2905 = vmatpush1.msra.mxu0 0.0
    %2906 = vmatprep.subr.mxu0 0.0
    %2907 = vmatpush1.msra.mxu0 0.0
    %2908 = vmatprep.subr.mxu0 0.0
    %2909 = vmatpush1.msra.mxu0 0.0
    %2910 = vmatprep.subr.mxu0 0.0
    %2911 = vmatpush1.msra.mxu0 0.0
    %2912 = vmatprep.subr.mxu0 0.0
    %2913 = vmatpush1.msra.mxu0 0.0
    %2914 = vmatprep.subr.mxu0 0.0
    %2915 = vmatpush1.msra.mxu0 0.0
    %2916 = vmatprep.subr.mxu0 0.0
    %2917 = vmatpush1.msra.mxu0 0.0
    %2918 = vmatprep.subr.mxu0 0.0
    %2919 = vmatpush1.msra.mxu0 0.0
    %2920 = vmatprep.subr.mxu0 0.0
    %2921 = vmatpush1.msra.mxu0 0.0
    %2922 = vmatprep.subr.mxu0 0.0
    %2923 = vmatpush1.msra.mxu0 0.0
    %2924 = vmatprep.mubr.f32.mxu0 0.0
    %2925 = vmatmul.mubr.f32.gmra.mrb[0].mxu0 %v2858
    %v2926 = vpop.f32.mrb[0].mxu0
    %v2927 = vadd.f32 %v2854, %v2926
    %v2928 = vpop.f32.mrb[0].mxu0
    %2929 = vdwg.mxu0
    %v2930 = vadd.f32 %v2927, %v244
    %s2931 = scalar_lea.vmem [#allocation8], 120
    %2932 = vst [vmem:[%s2931] sm:$0x1f] %v2930
    // Predicated region
    $region26: #{downsample_forward.1} parent=1 // pred_check
      _
    $region27: #{downsample_forward.1} parent=1 // pred_check_branch
      %2934 = sbr.rel (0) target = $region29
    $region28: #{downsample_forward.1} parent=1 // pred_region
      %s2936 = ssub.s32 2048, 2048
      %2937 = vsyncadd [#allocation4], %s2936
      %s2938 = sshll.u32 [#allocation8], 4
      %s2939 = int_to_ptr.vmem [resolvable:$true] %s2938
      %2944 = dma.vmem_to_hbm [thread:$0]  %s2939, 2048, %s3, [#allocation4], 128, 128, 8
    $region29: #{downsample_forward.1} parent=1 // pred_fallthru
      _
    // Predicated region
    $region30: #{downsample_forward.1} parent=1 // pred_check
      _
    $region31: #{downsample_forward.1} parent=1 // pred_check_branch
      %2946 = sbr.rel (0) target = $region33
    $region32: #{downsample_forward.1} parent=1 // pred_region
      %2947 = dma.done [#allocation4], 2048
    $region33: #{downsample_forward.1} parent=1 // pred_fallthru
      _
    %2948 = vsyncpa [#allocation3], 1
    %2949 = vsyncpa [#allocation6], 1
    %2950 = vsyncpa [#allocation4], 1

</llo_original>
